<compile_context>
chip_gen: v7x
topology: tpu7x:2x2x1
jax: 0.10.0
libtpu: 0.0.40
codegen_flags: <defaults>
</compile_context>

<pallas_src>
import jax
import jax.numpy as jnp
from jax.experimental import pallas as pl
from jax.experimental.pallas import tpu as pltpu

EPS = 1e-5
HIDDEN = 300
BN_BATCH = 128   # rows per independent BatchNorm batch (one grid step)


def _fc_block(h_bf16, w, gamma, beta, alpha):
    """Linear (bias cancelled by BN) -> BatchNorm1d (batch stats) -> PReLU.

    Single-pass statistics with the mean folded into the affine shift:
    only two full (B, F) elementwise passes (z*z and z*scale+shift) and a
    single live (B, F) f32 temporary (z)."""
    z = jnp.dot(h_bf16, w, preferred_element_type=jnp.float32)     # (B, F) f32
    inv_b = 1.0 / z.shape[0]
    mean = jnp.sum(z, axis=0, keepdims=True) * inv_b                # (1, F)
    ex2 = jnp.sum(z * z, axis=0, keepdims=True) * inv_b             # (1, F)
    var = ex2 - mean * mean                                         # biased var
    scale = gamma * jax.lax.rsqrt(var + EPS)                        # (1, F)
    shift = beta - mean * scale                                     # (1, F)
    zn = z * scale + shift                                          # (B, F)
    return jnp.where(zn > 0, zn, alpha * zn)                        # PReLU (f32)


def qvalue_kernel(alpha_ref,                    # (4,) f32 in SMEM
                  x_ref,                        # (BN_BATCH, stateDim) f32
                  w1_ref, w23_ref, w4_ref,      # bf16 weights (VMEM-resident)
                  gb123_ref, gb4_ref,           # packed BN gamma/beta, f32
                  out_ref):                     # (BN_BATCH, actionDim) f32
    h = x_ref[...].astype(jnp.bfloat16)
    h = _fc_block(h, w1_ref[...], gb123_ref[0:1, :], gb123_ref[1:2, :],
                  alpha_ref[0]).astype(jnp.bfloat16)
    h = _fc_block(h, w23_ref[0], gb123_ref[2:3, :], gb123_ref[3:4, :],
                  alpha_ref[1]).astype(jnp.bfloat16)
    h = _fc_block(h, w23_ref[1], gb123_ref[4:5, :], gb123_ref[5:6, :],
                  alpha_ref[2]).astype(jnp.bfloat16)
    h = _fc_block(h, w4_ref[...], gb4_ref[0:1, :], gb4_ref[1:2, :],
                  alpha_ref[3])
    out_ref[...] = h.astype(out_ref.dtype)


def init_params(key, state_dim, action_dim, hidden=HIDDEN):
    """PyTorch-like init (Linear: U(-1/sqrt(fan_in), +1/sqrt(fan_in)),
    BN gamma=1/beta=0, PReLU slope=0.25).  Bias kept only for the reference."""
    dims = [(state_dim, hidden), (hidden, hidden), (hidden, hidden),
            (hidden, action_dim)]
    ws, bs, gammas, betas = [], [], [], []
    for fan_in, fan_out in dims:
        key, kw, kb = jax.random.split(key, 3)
        bound = 1.0 / float(fan_in) ** 0.5
        ws.append(jax.random.uniform(kw, (fan_in, fan_out), jnp.float32,
                                     minval=-bound, maxval=bound))   # = W^T
        bs.append(jax.random.uniform(kb, (1, fan_out), jnp.float32,
                                     minval=-bound, maxval=bound))
        gammas.append(jnp.ones((1, fan_out), jnp.float32))
        betas.append(jnp.zeros((1, fan_out), jnp.float32))
    alphas = jnp.full((4,), 0.25, jnp.float32)
    return {"w": ws, "b": bs, "gamma": gammas, "beta": betas, "alpha": alphas}


def pack_params(params):
    """Pack per-layer params into a few large kernel operands (done once)."""
    w = [wi.astype(jnp.bfloat16) for wi in params["w"]]
    gb = lambda i: jnp.concatenate([params["gamma"][i], params["beta"][i]], 0)
    return {
        "w1": w[0],                                              # (S, 300) bf16
        "w23": jnp.stack([w[1], w[2]], axis=0),                  # (2, 300, 300)
        "w4": w[3],                                              # (300, A)
        "gb123": jnp.concatenate([gb(0), gb(1), gb(2)], axis=0),  # (6, 300) f32
        "gb4": gb(3),                                            # (2, A) f32
        "alpha": params["alpha"],                                # (4,) f32
    }


def qvalue_net(x, kp, *, bn_batch=BN_BATCH):
    batch, state_dim = x.shape
    action_dim = kp["w4"].shape[1]
    bn_batch = min(bn_batch, batch)
    assert batch % bn_batch == 0, "batch must be a multiple of bn_batch"
    n_blocks = batch // bn_batch

    vmem = pltpu.MemorySpace.VMEM
    const2 = lambda i: (0, 0)     # weights stay VMEM-resident across the grid
    const3 = lambda i: (0, 0, 0)

    flops = 2 * batch * (state_dim * HIDDEN + 2 * HIDDEN * HIDDEN
                         + HIDDEN * action_dim)
    bytes_accessed = int(x.size * 4 + batch * action_dim * 4
                         + sum(a.size * a.dtype.itemsize for a in kp.values()))
    cost = pl.CostEstimate(flops=flops,
                           transcendentals=n_blocks * (3 * HIDDEN + action_dim),
                           bytes_accessed=bytes_accessed)

    return pl.pallas_call(
        qvalue_kernel,
        out_shape=jax.ShapeDtypeStruct((batch, action_dim), jnp.float32),
        grid=(n_blocks,),
        in_specs=[
            pl.BlockSpec(memory_space=pltpu.MemorySpace.SMEM),          # alpha
            pl.BlockSpec((bn_batch, state_dim), lambda i: (i, 0),
                         memory_space=vmem),                            # x
            pl.BlockSpec(kp["w1"].shape, const2, memory_space=vmem),    # w1
            pl.BlockSpec(kp["w23"].shape, const3, memory_space=vmem),   # w2, w3
            pl.BlockSpec(kp["w4"].shape, const2, memory_space=vmem),    # w4
            pl.BlockSpec(kp["gb123"].shape, const2, memory_space=vmem),
            pl.BlockSpec(kp["gb4"].shape, const2, memory_space=vmem),
        ],
        out_specs=pl.BlockSpec((bn_batch, action_dim), lambda i: (i, 0),
                               memory_space=vmem),
        compiler_params=pltpu.CompilerParams(
            dimension_semantics=("parallel",),      # 2x on v7x's two TCs
            vmem_limit_bytes=8 * 1024 * 1024),
        cost_estimate=cost,
    )(kp["alpha"], x, kp["w1"], kp["w23"], kp["w4"], kp["gb123"], kp["gb4"])


def qvalue_net_ref(x, params, *, bn_batch=BN_BATCH):
    """Pure-JAX reference.  Each bn_batch-row chunk is an independent
    training-mode forward pass (its own BatchNorm batch statistics), matching
    one grid step of the kernel.  Keeps the Linear bias and the two-pass
    variance to prove the kernel's algebraic simplifications are faithful."""
    batch = x.shape[0]
    bn_batch = min(bn_batch, batch)
    outs = []
    for s in range(0, batch, bn_batch):
        h = x[s:s + bn_batch].astype(jnp.float32)
        for i in range(4):
            w = params["w"][i].astype(jnp.bfloat16)
            z = jnp.dot(h.astype(jnp.bfloat16), w,
                        preferred_element_type=jnp.float32) + params["b"][i]
            mean = jnp.mean(z, axis=0, keepdims=True)
            var = jnp.mean((z - mean) ** 2, axis=0, keepdims=True)
            zn = ((z - mean) / jnp.sqrt(var + EPS) * params["gamma"][i]
                  + params["beta"][i])
            a = params["alpha"][i]
            h = jnp.where(zn > 0, zn, a * zn)
        outs.append(h)
    return jnp.concatenate(outs, axis=0)


if __name__ == "__main__":
    key = jax.random.PRNGKey(0)
    kx, kparam = jax.random.split(key)

    state_dim, action_dim = 16, 4
    n_bn_batches = 2                       # exercises the grid (2 x 128 rows)
    batch = n_bn_batches * BN_BATCH
    x = jax.random.normal(kx, (batch, state_dim), jnp.float32)

    params = init_params(kparam, state_dim, action_dim)
    kparams = pack_params(params)

    out = jax.block_until_ready(qvalue_net(x, kparams))
    ref = qvalue_net_ref(x, params)

    assert out.shape == (batch, action_dim), out.shape
    max_err = float(jnp.max(jnp.abs(out - ref)))
    assert jnp.allclose(out, ref, atol=5e-3, rtol=5e-3), max_err
    print("KERNEL_OK")
</pallas_src>

<mosaic_0001>
module attributes {stable_mosaic.version = 11 : i64} {
  func.func @qvalue_kernel(%arg0: i32, %arg1: memref<4xf32, #tpu.memory_space<smem>>, %arg2: memref<128x16xf32, #tpu.memory_space<vmem>>, %arg3: memref<16x300xbf16, #tpu.memory_space<vmem>>, %arg4: memref<2x300x300xbf16, #tpu.memory_space<vmem>>, %arg5: memref<300x4xbf16, #tpu.memory_space<vmem>>, %arg6: memref<6x300xf32, #tpu.memory_space<vmem>>, %arg7: memref<2x4xf32, #tpu.memory_space<vmem>>, %arg8: memref<128x4xf32, #tpu.memory_space<vmem>>) attributes {dimension_semantics = [#tpu.dimension_semantics<parallel>], iteration_bounds = array<i64: 2>, scalar_prefetch = 0 : i64, scratch_operands = 0 : i64, tpu.core_type = #tpu.core_type<tc>, window_params = [{transform_indices = @transform_0, window_bounds = array<i64: 4>}, {transform_indices = @transform_1, window_bounds = array<i64: 128, 16>}, {pipeline_mode = #tpu.pipeline_mode<synchronous>, transform_indices = @transform_2, window_bounds = array<i64: 16, 300>}, {pipeline_mode = #tpu.pipeline_mode<synchronous>, transform_indices = @transform_3, window_bounds = array<i64: 2, 300, 300>}, {pipeline_mode = #tpu.pipeline_mode<synchronous>, transform_indices = @transform_4, window_bounds = array<i64: 300, 4>}, {pipeline_mode = #tpu.pipeline_mode<synchronous>, transform_indices = @transform_5, window_bounds = array<i64: 6, 300>}, {pipeline_mode = #tpu.pipeline_mode<synchronous>, transform_indices = @transform_6, window_bounds = array<i64: 2, 4>}, {transform_indices = @transform_7, window_bounds = array<i64: 128, 4>}]} {
    %c0 = arith.constant 0 : index
    %c0_0 = arith.constant 0 : index
    %0 = vector.load %arg2[%c0, %c0_0] : memref<128x16xf32, #tpu.memory_space<vmem>>, vector<128x16xf32>
    %1 = arith.truncf %0 : vector<128x16xf32> to vector<128x16xbf16>
    %c0_1 = arith.constant 0 : index
    %c0_2 = arith.constant 0 : index
    %2 = vector.load %arg3[%c0_1, %c0_2] : memref<16x300xbf16, #tpu.memory_space<vmem>>, vector<16x300xbf16>
    %c0_3 = arith.constant 0 : index
    %c0_4 = arith.constant 0 : index
    %3 = vector.load %arg6[%c0_3, %c0_4] : memref<6x300xf32, #tpu.memory_space<vmem>>, vector<1x300xf32>
    %c1 = arith.constant 1 : index
    %c0_5 = arith.constant 0 : index
    %4 = vector.load %arg6[%c1, %c0_5] : memref<6x300xf32, #tpu.memory_space<vmem>>, vector<1x300xf32>
    %c0_6 = arith.constant 0 : index
    %5 = memref.load %arg1[%c0_6] : memref<4xf32, #tpu.memory_space<smem>>
    %cst = arith.constant dense<0.000000e+00> : vector<128x300xf32>
    %6 = tpu.matmul %1, %2, %cst {dimension_numbers = #tpu.dot_dimension_numbers<[1], [0], [0], [1], [0, 0, 1, 1], [], []>} : vector<128x16xbf16>, vector<16x300xbf16>, vector<128x300xf32> -> vector<128x300xf32>
    %cst_7 = arith.constant dense<0.000000e+00> : vector<300xf32>
    %7 = vector.multi_reduction <add>, %6, %cst_7 [0] : vector<128x300xf32> to vector<300xf32>
    %8 = vector.shape_cast %7 : vector<300xf32> to vector<1x300xf32>
    %cst_8 = arith.constant 7.812500e-03 : f32
    %9 = vector.broadcast %cst_8 : f32 to vector<1x300xf32>
    %10 = arith.mulf %8, %9 : vector<1x300xf32>
    %11 = arith.mulf %6, %6 : vector<128x300xf32>
    %cst_9 = arith.constant dense<0.000000e+00> : vector<300xf32>
    %12 = vector.multi_reduction <add>, %11, %cst_9 [0] : vector<128x300xf32> to vector<300xf32>
    %13 = vector.shape_cast %12 : vector<300xf32> to vector<1x300xf32>
    %cst_10 = arith.constant 7.812500e-03 : f32
    %14 = vector.broadcast %cst_10 : f32 to vector<1x300xf32>
    %15 = arith.mulf %13, %14 : vector<1x300xf32>
    %16 = arith.mulf %10, %10 : vector<1x300xf32>
    %17 = arith.subf %15, %16 : vector<1x300xf32>
    %cst_11 = arith.constant 9.99999974E-6 : f32
    %18 = vector.broadcast %cst_11 : f32 to vector<1x300xf32>
    %19 = arith.addf %17, %18 : vector<1x300xf32>
    %20 = math.rsqrt %19 : vector<1x300xf32>
    %21 = arith.mulf %3, %20 : vector<1x300xf32>
    %22 = arith.mulf %10, %21 : vector<1x300xf32>
    %23 = arith.subf %4, %22 : vector<1x300xf32>
    %24 = vector.broadcast %21 : vector<1x300xf32> to vector<128x300xf32>
    %25 = arith.mulf %6, %24 : vector<128x300xf32>
    %26 = vector.broadcast %23 : vector<1x300xf32> to vector<128x300xf32>
    %27 = arith.addf %25, %26 : vector<128x300xf32>
    %cst_12 = arith.constant 0.000000e+00 : f32
    %28 = vector.broadcast %cst_12 : f32 to vector<128x300xf32>
    %29 = arith.cmpf ogt, %27, %28 : vector<128x300xf32>
    %30 = vector.broadcast %5 : f32 to vector<128x300xf32>
    %31 = arith.mulf %30, %27 : vector<128x300xf32>
    %32 = arith.select %29, %27, %31 : vector<128x300xi1>, vector<128x300xf32>
    %33 = arith.truncf %32 : vector<128x300xf32> to vector<128x300xbf16>
    %c0_13 = arith.constant 0 : index
    %c0_14 = arith.constant 0 : index
    %c0_15 = arith.constant 0 : index
    %34 = vector.load %arg4[%c0_13, %c0_14, %c0_15] : memref<2x300x300xbf16, #tpu.memory_space<vmem>>, vector<1x300x300xbf16>
    %35 = vector.shape_cast %34 : vector<1x300x300xbf16> to vector<300x300xbf16>
    %c2 = arith.constant 2 : index
    %c0_16 = arith.constant 0 : index
    %36 = vector.load %arg6[%c2, %c0_16] : memref<6x300xf32, #tpu.memory_space<vmem>>, vector<1x300xf32>
    %c3 = arith.constant 3 : index
    %c0_17 = arith.constant 0 : index
    %37 = vector.load %arg6[%c3, %c0_17] : memref<6x300xf32, #tpu.memory_space<vmem>>, vector<1x300xf32>
    %c1_18 = arith.constant 1 : index
    %38 = memref.load %arg1[%c1_18] : memref<4xf32, #tpu.memory_space<smem>>
    %cst_19 = arith.constant dense<0.000000e+00> : vector<128x300xf32>
    %39 = tpu.matmul %33, %35, %cst_19 {dimension_numbers = #tpu.dot_dimension_numbers<[1], [0], [0], [1], [0, 0, 1, 1], [], []>} : vector<128x300xbf16>, vector<300x300xbf16>, vector<128x300xf32> -> vector<128x300xf32>
    %cst_20 = arith.constant dense<0.000000e+00> : vector<300xf32>
    %40 = vector.multi_reduction <add>, %39, %cst_20 [0] : vector<128x300xf32> to vector<300xf32>
    %41 = vector.shape_cast %40 : vector<300xf32> to vector<1x300xf32>
    %cst_21 = arith.constant 7.812500e-03 : f32
    %42 = vector.broadcast %cst_21 : f32 to vector<1x300xf32>
    %43 = arith.mulf %41, %42 : vector<1x300xf32>
    %44 = arith.mulf %39, %39 : vector<128x300xf32>
    %cst_22 = arith.constant dense<0.000000e+00> : vector<300xf32>
    %45 = vector.multi_reduction <add>, %44, %cst_22 [0] : vector<128x300xf32> to vector<300xf32>
    %46 = vector.shape_cast %45 : vector<300xf32> to vector<1x300xf32>
    %cst_23 = arith.constant 7.812500e-03 : f32
    %47 = vector.broadcast %cst_23 : f32 to vector<1x300xf32>
    %48 = arith.mulf %46, %47 : vector<1x300xf32>
    %49 = arith.mulf %43, %43 : vector<1x300xf32>
    %50 = arith.subf %48, %49 : vector<1x300xf32>
    %cst_24 = arith.constant 9.99999974E-6 : f32
    %51 = vector.broadcast %cst_24 : f32 to vector<1x300xf32>
    %52 = arith.addf %50, %51 : vector<1x300xf32>
    %53 = math.rsqrt %52 : vector<1x300xf32>
    %54 = arith.mulf %36, %53 : vector<1x300xf32>
    %55 = arith.mulf %43, %54 : vector<1x300xf32>
    %56 = arith.subf %37, %55 : vector<1x300xf32>
    %57 = vector.broadcast %54 : vector<1x300xf32> to vector<128x300xf32>
    %58 = arith.mulf %39, %57 : vector<128x300xf32>
    %59 = vector.broadcast %56 : vector<1x300xf32> to vector<128x300xf32>
    %60 = arith.addf %58, %59 : vector<128x300xf32>
    %cst_25 = arith.constant 0.000000e+00 : f32
    %61 = vector.broadcast %cst_25 : f32 to vector<128x300xf32>
    %62 = arith.cmpf ogt, %60, %61 : vector<128x300xf32>
    %63 = vector.broadcast %38 : f32 to vector<128x300xf32>
    %64 = arith.mulf %63, %60 : vector<128x300xf32>
    %65 = arith.select %62, %60, %64 : vector<128x300xi1>, vector<128x300xf32>
    %66 = arith.truncf %65 : vector<128x300xf32> to vector<128x300xbf16>
    %c1_26 = arith.constant 1 : index
    %c0_27 = arith.constant 0 : index
    %c0_28 = arith.constant 0 : index
    %67 = vector.load %arg4[%c1_26, %c0_27, %c0_28] : memref<2x300x300xbf16, #tpu.memory_space<vmem>>, vector<1x300x300xbf16>
    %68 = vector.shape_cast %67 : vector<1x300x300xbf16> to vector<300x300xbf16>
    %c4 = arith.constant 4 : index
    %c0_29 = arith.constant 0 : index
    %69 = vector.load %arg6[%c4, %c0_29] : memref<6x300xf32, #tpu.memory_space<vmem>>, vector<1x300xf32>
    %c5 = arith.constant 5 : index
    %c0_30 = arith.constant 0 : index
    %70 = vector.load %arg6[%c5, %c0_30] : memref<6x300xf32, #tpu.memory_space<vmem>>, vector<1x300xf32>
    %c2_31 = arith.constant 2 : index
    %71 = memref.load %arg1[%c2_31] : memref<4xf32, #tpu.memory_space<smem>>
    %cst_32 = arith.constant dense<0.000000e+00> : vector<128x300xf32>
    %72 = tpu.matmul %66, %68, %cst_32 {dimension_numbers = #tpu.dot_dimension_numbers<[1], [0], [0], [1], [0, 0, 1, 1], [], []>} : vector<128x300xbf16>, vector<300x300xbf16>, vector<128x300xf32> -> vector<128x300xf32>
    %cst_33 = arith.constant dense<0.000000e+00> : vector<300xf32>
    %73 = vector.multi_reduction <add>, %72, %cst_33 [0] : vector<128x300xf32> to vector<300xf32>
    %74 = vector.shape_cast %73 : vector<300xf32> to vector<1x300xf32>
    %cst_34 = arith.constant 7.812500e-03 : f32
    %75 = vector.broadcast %cst_34 : f32 to vector<1x300xf32>
    %76 = arith.mulf %74, %75 : vector<1x300xf32>
    %77 = arith.mulf %72, %72 : vector<128x300xf32>
    %cst_35 = arith.constant dense<0.000000e+00> : vector<300xf32>
    %78 = vector.multi_reduction <add>, %77, %cst_35 [0] : vector<128x300xf32> to vector<300xf32>
    %79 = vector.shape_cast %78 : vector<300xf32> to vector<1x300xf32>
    %cst_36 = arith.constant 7.812500e-03 : f32
    %80 = vector.broadcast %cst_36 : f32 to vector<1x300xf32>
    %81 = arith.mulf %79, %80 : vector<1x300xf32>
    %82 = arith.mulf %76, %76 : vector<1x300xf32>
    %83 = arith.subf %81, %82 : vector<1x300xf32>
    %cst_37 = arith.constant 9.99999974E-6 : f32
    %84 = vector.broadcast %cst_37 : f32 to vector<1x300xf32>
    %85 = arith.addf %83, %84 : vector<1x300xf32>
    %86 = math.rsqrt %85 : vector<1x300xf32>
    %87 = arith.mulf %69, %86 : vector<1x300xf32>
    %88 = arith.mulf %76, %87 : vector<1x300xf32>
    %89 = arith.subf %70, %88 : vector<1x300xf32>
    %90 = vector.broadcast %87 : vector<1x300xf32> to vector<128x300xf32>
    %91 = arith.mulf %72, %90 : vector<128x300xf32>
    %92 = vector.broadcast %89 : vector<1x300xf32> to vector<128x300xf32>
    %93 = arith.addf %91, %92 : vector<128x300xf32>
    %cst_38 = arith.constant 0.000000e+00 : f32
    %94 = vector.broadcast %cst_38 : f32 to vector<128x300xf32>
    %95 = arith.cmpf ogt, %93, %94 : vector<128x300xf32>
    %96 = vector.broadcast %71 : f32 to vector<128x300xf32>
    %97 = arith.mulf %96, %93 : vector<128x300xf32>
    %98 = arith.select %95, %93, %97 : vector<128x300xi1>, vector<128x300xf32>
    %99 = arith.truncf %98 : vector<128x300xf32> to vector<128x300xbf16>
    %c0_39 = arith.constant 0 : index
    %c0_40 = arith.constant 0 : index
    %100 = vector.load %arg5[%c0_39, %c0_40] : memref<300x4xbf16, #tpu.memory_space<vmem>>, vector<300x4xbf16>
    %c0_41 = arith.constant 0 : index
    %c0_42 = arith.constant 0 : index
    %101 = vector.load %arg7[%c0_41, %c0_42] : memref<2x4xf32, #tpu.memory_space<vmem>>, vector<1x4xf32>
    %c1_43 = arith.constant 1 : index
    %c0_44 = arith.constant 0 : index
    %102 = vector.load %arg7[%c1_43, %c0_44] : memref<2x4xf32, #tpu.memory_space<vmem>>, vector<1x4xf32>
    %c3_45 = arith.constant 3 : index
    %103 = memref.load %arg1[%c3_45] : memref<4xf32, #tpu.memory_space<smem>>
    %cst_46 = arith.constant dense<0.000000e+00> : vector<128x4xf32>
    %104 = tpu.matmul %99, %100, %cst_46 {dimension_numbers = #tpu.dot_dimension_numbers<[1], [0], [0], [1], [0, 0, 1, 1], [], []>} : vector<128x300xbf16>, vector<300x4xbf16>, vector<128x4xf32> -> vector<128x4xf32>
    %cst_47 = arith.constant dense<0.000000e+00> : vector<4xf32>
    %105 = vector.multi_reduction <add>, %104, %cst_47 [0] : vector<128x4xf32> to vector<4xf32>
    %106 = vector.shape_cast %105 : vector<4xf32> to vector<1x4xf32>
    %cst_48 = arith.constant 7.812500e-03 : f32
    %107 = vector.broadcast %cst_48 : f32 to vector<1x4xf32>
    %108 = arith.mulf %106, %107 : vector<1x4xf32>
    %109 = arith.mulf %104, %104 : vector<128x4xf32>
    %cst_49 = arith.constant dense<0.000000e+00> : vector<4xf32>
    %110 = vector.multi_reduction <add>, %109, %cst_49 [0] : vector<128x4xf32> to vector<4xf32>
    %111 = vector.shape_cast %110 : vector<4xf32> to vector<1x4xf32>
    %cst_50 = arith.constant 7.812500e-03 : f32
    %112 = vector.broadcast %cst_50 : f32 to vector<1x4xf32>
    %113 = arith.mulf %111, %112 : vector<1x4xf32>
    %114 = arith.mulf %108, %108 : vector<1x4xf32>
    %115 = arith.subf %113, %114 : vector<1x4xf32>
    %cst_51 = arith.constant 9.99999974E-6 : f32
    %116 = vector.broadcast %cst_51 : f32 to vector<1x4xf32>
    %117 = arith.addf %115, %116 : vector<1x4xf32>
    %118 = math.rsqrt %117 : vector<1x4xf32>
    %119 = arith.mulf %101, %118 : vector<1x4xf32>
    %120 = arith.mulf %108, %119 : vector<1x4xf32>
    %121 = arith.subf %102, %120 : vector<1x4xf32>
    %122 = vector.broadcast %119 : vector<1x4xf32> to vector<128x4xf32>
    %123 = arith.mulf %104, %122 : vector<128x4xf32>
    %124 = vector.broadcast %121 : vector<1x4xf32> to vector<128x4xf32>
    %125 = arith.addf %123, %124 : vector<128x4xf32>
    %cst_52 = arith.constant 0.000000e+00 : f32
    %126 = vector.broadcast %cst_52 : f32 to vector<128x4xf32>
    %127 = arith.cmpf ogt, %125, %126 : vector<128x4xf32>
    %128 = vector.broadcast %103 : f32 to vector<128x4xf32>
    %129 = arith.mulf %128, %125 : vector<128x4xf32>
    %130 = arith.select %127, %125, %129 : vector<128x4xi1>, vector<128x4xf32>
    %c0_53 = arith.constant 0 : index
    %c0_54 = arith.constant 0 : index
    %131 = vector.load %arg8[%c0_53, %c0_54] : memref<128x4xf32, #tpu.memory_space<vmem>>, vector<128x4xf32>
    tpu.vector_store %arg8[%c0_53, %c0_54], %130 {strides = array<i32>} : memref<128x4xf32, #tpu.memory_space<vmem>>, vector<128x4xf32>,
    return
  }
  func.func @transform_0(%arg0: i32) -> i32 {
    %c0_i32 = arith.constant 0 : i32
    %c0_i32_0 = arith.constant 0 : i32
    return %c0_i32 : i32
  }
  func.func @transform_1(%arg0: i32) -> (i32, i32) {
    %c0_i32 = arith.constant 0 : i32
    %c0_i32_0 = arith.constant 0 : i32
    return %arg0, %c0_i32 : i32, i32
  }
  func.func @transform_2(%arg0: i32) -> (i32, i32) {
    %c0_i32 = arith.constant 0 : i32
    %c0_i32_0 = arith.constant 0 : i32
    %c0_i32_1 = arith.constant 0 : i32
    return %c0_i32, %c0_i32_0 : i32, i32
  }
  func.func @transform_3(%arg0: i32) -> (i32, i32, i32) {
    %c0_i32 = arith.constant 0 : i32
    %c0_i32_0 = arith.constant 0 : i32
    %c0_i32_1 = arith.constant 0 : i32
    %c0_i32_2 = arith.constant 0 : i32
    return %c0_i32, %c0_i32_0, %c0_i32_1 : i32, i32, i32
  }
  func.func @transform_4(%arg0: i32) -> (i32, i32) {
    %c0_i32 = arith.constant 0 : i32
    %c0_i32_0 = arith.constant 0 : i32
    %c0_i32_1 = arith.constant 0 : i32
    return %c0_i32, %c0_i32_0 : i32, i32
  }
  func.func @transform_5(%arg0: i32) -> (i32, i32) {
    %c0_i32 = arith.constant 0 : i32
    %c0_i32_0 = arith.constant 0 : i32
    %c0_i32_1 = arith.constant 0 : i32
    return %c0_i32, %c0_i32_0 : i32, i32
  }
  func.func @transform_6(%arg0: i32) -> (i32, i32) {
    %c0_i32 = arith.constant 0 : i32
    %c0_i32_0 = arith.constant 0 : i32
    %c0_i32_1 = arith.constant 0 : i32
    return %c0_i32, %c0_i32_0 : i32, i32
  }
  func.func @transform_7(%arg0: i32) -> (i32, i32) {
    %c0_i32 = arith.constant 0 : i32
    %c0_i32_0 = arith.constant 0 : i32
    return %arg0, %c0_i32 : i32, i32
  }
}

</mosaic_0001>

<llo_original>
// kernel: tpu_custom_call.1
$region0: #{tpu_custom_call.1}
  #allocation0 [shape = 'u32[]', space=smem, size = 0x4, offset = 0x4, fixed_abs, tag = 'smem constant byte address 0x4 - core index']
  #allocation1 [shape = 'u32[144,128]{1,0:T(1,128)}', space=vmem, size = 0x12000, scoped, tag = 'internal scratch']
  %s0 = inlined_call_operand.vmem [shape: f32[4], index: 0, kind: input, shape index: {}]
  %s1 = inlined_call_operand.vmem [shape: f32[256,16], index: 1, kind: input, shape index: {}]
  %s2 = inlined_call_operand.vmem [shape: bf16[16,300], index: 2, kind: input, shape index: {}]
  %s3 = inlined_call_operand.vmem [shape: bf16[2,300,300], index: 3, kind: input, shape index: {}]
  %s4 = inlined_call_operand.vmem [shape: bf16[300,4], index: 4, kind: input, shape index: {}]
  %s5 = inlined_call_operand.vmem [shape: f32[6,300], index: 5, kind: input, shape index: {}]
  %s6 = inlined_call_operand.vmem [shape: f32[2,4], index: 6, kind: input, shape index: {}]
  %s7 = inlined_call_operand.vmem [shape: f32[256,4], index: 7, kind: output, shape index: {}]
  %s8 = sld [smem:[#allocation0]]
  $region65: #{tpu_custom_call.1} parent=0
    _
  %s10 = ssub.s32 1, %s8
  %s11 = scalar_select 0, %s10, %s8
  $region1: #{tpu_custom_call.1} parent=0
    #allocation2 [shape = 'u8[512]{0}', space=smem, size = 0x200, scoped, tag = 'input window, operand 0, single buffered']
    #allocation3 [shape = 's32[2]{0}', space=sflag, size = 0x8, scoped, tag = 'scoped memory for tpu_custom_call.1']
    %12 = vsyncpa [#allocation3], 0
    loop: start=0, step=1, limit=4
    $region2: #{tpu_custom_call.1} parent=1 // loop_pre_header
      _
    $region3: #{tpu_custom_call.1} parent=1 // loop_header
      %s14 = sphi 0, %s18
      %p15 = scmp.ge.s32.totalorder %s14, 4
      %s22 = sphi 0, %s22
      %s24 = sphi 0, %s22
      %s25 = sphi 0, %s24
      %s39 = sphi 0, %s25
      %s45 = sphi 0, %s47
      %s48 = sphi 0, %s45
      %s49 = sphi 0, %s48
      %s65 = sphi 0, %s49
      %s69 = sphi 0, %s69
      %s71 = sphi 0, %s69
      %s72 = sphi 0, %s71
      %s86 = sphi 0, %s72
      %s90 = sphi 0, %s90
      %s92 = sphi 0, %s90
      %s93 = sphi 0, %s92
      %s107 = sphi 0, %s93
      %s111 = sphi 0, %s111
      %s113 = sphi 0, %s111
      %s114 = sphi 0, %s113
      %s128 = sphi 0, %s114
      %s132 = sphi 0, %s132
      %s134 = sphi 0, %s132
      %s135 = sphi 0, %s134
      %s149 = sphi 0, %s135
      %s153 = sphi 0, %s153
      %s155 = sphi 0, %s153
      %s156 = sphi 0, %s155
      %s170 = sphi 0, %s156
      %s176 = sphi 0, %s178
      %s179 = sphi 0, %s176
      %s180 = sphi 0, %s179
      %s196 = sphi 0, %s180
    $region4: #{tpu_custom_call.1} parent=1 // loop_header_branch
      %17 = sbr.rel (%p15) target = $region8
    $region5: #{tpu_custom_call.1} parent=1 // loop_body
      %s19 = ssub.s32 %s14, 1
      %s20 = ssub.s32 %s14, 2
      %s21 = sadd.s32 %s14, 1
      %s23 = sadd.s32 %s22, 1
      %p26 = scmp.eq.s32.totalorder %s14, 1
      %p27 = scmp.ne.s32.totalorder %s22, %s24
      %p28 = scmp.eq.s32.totalorder %s14, 0
      %p29 = por %p27, %p28
      %p30 = scmp.ne.s32.totalorder %s22, %s24
      %p31 = scmp.eq.s32.totalorder %s19, 1
      %p32 = por %p30, %p31
      %p33 = scmp.ne.s32.totalorder %s24, %s25
      %p34 = scmp.eq.s32.totalorder %s19, 0
      %p35 = por %p33, %p34
      %p36 = scmp.ne.s32.totalorder %s24, %s25
      %p37 = scmp.eq.s32.totalorder %s20, 1
      %p38 = por %p36, %p37
      %p40 = scmp.ne.s32.totalorder %s25, %s39
      %p41 = scmp.eq.s32.totalorder %s20, 0
      %p42 = por %p40, %p41
      %s43 = ssub.s32 %s14, %s21
      %p44 = scmp.eq.s32.totalorder %s43, 0
      %s46 = sadd.s32 %s45, 1
      %s47 = scalar_select %p44, %s45, %s46
      %p50 = pneg %p44
      %p51 = scmp.eq.s32.totalorder %s14, 1
      %p52 = por %p50, %p51
      %p53 = scmp.ne.s32.totalorder %s45, %s48
      %p54 = scmp.eq.s32.totalorder %s14, 0
      %p55 = por %p53, %p54
      %p56 = scmp.ne.s32.totalorder %s45, %s48
      %p57 = scmp.eq.s32.totalorder %s19, 1
      %p58 = por %p56, %p57
      %p59 = scmp.ne.s32.totalorder %s48, %s49
      %p60 = scmp.eq.s32.totalorder %s19, 0
      %p61 = por %p59, %p60
      %p62 = scmp.ne.s32.totalorder %s48, %s49
      %p63 = scmp.eq.s32.totalorder %s20, 1
      %p64 = por %p62, %p63
      %p66 = scmp.ne.s32.totalorder %s49, %s65
      %p67 = scmp.eq.s32.totalorder %s20, 0
      %p68 = por %p66, %p67
      %s70 = sadd.s32 %s69, 1
      %p73 = scmp.eq.s32.totalorder %s14, 1
      %p74 = scmp.ne.s32.totalorder %s69, %s71
      %p75 = scmp.eq.s32.totalorder %s14, 0
      %p76 = por %p74, %p75
      %p77 = scmp.ne.s32.totalorder %s69, %s71
      %p78 = scmp.eq.s32.totalorder %s19, 1
      %p79 = por %p77, %p78
      %p80 = scmp.ne.s32.totalorder %s71, %s72
      %p81 = scmp.eq.s32.totalorder %s19, 0
      %p82 = por %p80, %p81
      %p83 = scmp.ne.s32.totalorder %s71, %s72
      %p84 = scmp.eq.s32.totalorder %s20, 1
      %p85 = por %p83, %p84
      %p87 = scmp.ne.s32.totalorder %s72, %s86
      %p88 = scmp.eq.s32.totalorder %s20, 0
      %p89 = por %p87, %p88
      %s91 = sadd.s32 %s90, 1
      %p94 = scmp.eq.s32.totalorder %s14, 1
      %p95 = scmp.ne.s32.totalorder %s90, %s92
      %p96 = scmp.eq.s32.totalorder %s14, 0
      %p97 = por %p95, %p96
      %p98 = scmp.ne.s32.totalorder %s90, %s92
      %p99 = scmp.eq.s32.totalorder %s19, 1
      %p100 = por %p98, %p99
      %p101 = scmp.ne.s32.totalorder %s92, %s93
      %p102 = scmp.eq.s32.totalorder %s19, 0
      %p103 = por %p101, %p102
      %p104 = scmp.ne.s32.totalorder %s92, %s93
      %p105 = scmp.eq.s32.totalorder %s20, 1
      %p106 = por %p104, %p105
      %p108 = scmp.ne.s32.totalorder %s93, %s107
      %p109 = scmp.eq.s32.totalorder %s20, 0
      %p110 = por %p108, %p109
      %s112 = sadd.s32 %s111, 1
      %p115 = scmp.eq.s32.totalorder %s14, 1
      %p116 = scmp.ne.s32.totalorder %s111, %s113
      %p117 = scmp.eq.s32.totalorder %s14, 0
      %p118 = por %p116, %p117
      %p119 = scmp.ne.s32.totalorder %s111, %s113
      %p120 = scmp.eq.s32.totalorder %s19, 1
      %p121 = por %p119, %p120
      %p122 = scmp.ne.s32.totalorder %s113, %s114
      %p123 = scmp.eq.s32.totalorder %s19, 0
      %p124 = por %p122, %p123
      %p125 = scmp.ne.s32.totalorder %s113, %s114
      %p126 = scmp.eq.s32.totalorder %s20, 1
      %p127 = por %p125, %p126
      %p129 = scmp.ne.s32.totalorder %s114, %s128
      %p130 = scmp.eq.s32.totalorder %s20, 0
      %p131 = por %p129, %p130
      %s133 = sadd.s32 %s132, 1
      %p136 = scmp.eq.s32.totalorder %s14, 1
      %p137 = scmp.ne.s32.totalorder %s132, %s134
      %p138 = scmp.eq.s32.totalorder %s14, 0
      %p139 = por %p137, %p138
      %p140 = scmp.ne.s32.totalorder %s132, %s134
      %p141 = scmp.eq.s32.totalorder %s19, 1
      %p142 = por %p140, %p141
      %p143 = scmp.ne.s32.totalorder %s134, %s135
      %p144 = scmp.eq.s32.totalorder %s19, 0
      %p145 = por %p143, %p144
      %p146 = scmp.ne.s32.totalorder %s134, %s135
      %p147 = scmp.eq.s32.totalorder %s20, 1
      %p148 = por %p146, %p147
      %p150 = scmp.ne.s32.totalorder %s135, %s149
      %p151 = scmp.eq.s32.totalorder %s20, 0
      %p152 = por %p150, %p151
      %s154 = sadd.s32 %s153, 1
      %p157 = scmp.eq.s32.totalorder %s14, 1
      %p158 = scmp.ne.s32.totalorder %s153, %s155
      %p159 = scmp.eq.s32.totalorder %s14, 0
      %p160 = por %p158, %p159
      %p161 = scmp.ne.s32.totalorder %s153, %s155
      %p162 = scmp.eq.s32.totalorder %s19, 1
      %p163 = por %p161, %p162
      %p164 = scmp.ne.s32.totalorder %s155, %s156
      %p165 = scmp.eq.s32.totalorder %s19, 0
      %p166 = por %p164, %p165
      %p167 = scmp.ne.s32.totalorder %s155, %s156
      %p168 = scmp.eq.s32.totalorder %s20, 1
      %p169 = por %p167, %p168
      %p171 = scmp.ne.s32.totalorder %s156, %s170
      %p172 = scmp.eq.s32.totalorder %s20, 0
      %p173 = por %p171, %p172
      %s174 = ssub.s32 %s14, %s21
      %p175 = scmp.eq.s32.totalorder %s174, 0
      %s177 = sadd.s32 %s176, 1
      %s178 = scalar_select %p175, %s176, %s177
      %p181 = pneg %p175
      %p182 = scmp.eq.s32.totalorder %s14, 1
      %p183 = por %p181, %p182
      %p184 = scmp.ne.s32.totalorder %s176, %s179
      %p185 = scmp.eq.s32.totalorder %s14, 0
      %p186 = por %p184, %p185
      %p187 = scmp.ne.s32.totalorder %s176, %s179
      %p188 = scmp.eq.s32.totalorder %s19, 1
      %p189 = por %p187, %p188
      %p190 = scmp.ne.s32.totalorder %s179, %s180
      %p191 = scmp.eq.s32.totalorder %s19, 0
      %p192 = por %p190, %p191
      %p193 = scmp.ne.s32.totalorder %s179, %s180
      %p194 = scmp.eq.s32.totalorder %s20, 1
      %p195 = por %p193, %p194
      %p197 = scmp.ne.s32.totalorder %s180, %s196
      %p198 = scmp.eq.s32.totalorder %s20, 0
      %p199 = por %p197, %p198
      %p200 = scmp.le.s32.totalorder 1, %s14
      %p201 = scmp.lt.s32.totalorder %s14, 3
      %p202 = pnand %p200, %p201
      %p203 = pneg %p202
      // Predicated region
      $region9: #{tpu_custom_call.1} parent=5 // pred_check
        _
      $region10: #{tpu_custom_call.1} parent=5 // pred_check_branch
        %205 = sbr.rel (%p202) target = $region12
      $region11: #{tpu_custom_call.1} parent=5 // pred_region
        %s206 = ssub.s32 %s14, 1
        // Predicated region
        $region13: #{tpu_custom_call.1} parent=11 // pred_check
          %p207 = pneg %p35
        $region14: #{tpu_custom_call.1} parent=11 // pred_check_branch
          %209 = sbr.rel (%p207) target = $region16
        $region15: #{tpu_custom_call.1} parent=11 // pred_region
          %s211 = ssub.s32 16, 16
          %212 = vsyncadd [#allocation3], %s211
          %s214 = sshll.u32 %s0, 4
          %s215 = int_to_ptr.vmem [resolvable:$true] %s214
          %217 = dma.vmem_to_smem %s215, 16, [#allocation2], [#allocation3]
        $region16: #{tpu_custom_call.1} parent=11 // pred_fallthru
          _
        // Predicated region
        $region17: #{tpu_custom_call.1} parent=11 // pred_check
          %p218 = pneg %p82
        $region18: #{tpu_custom_call.1} parent=11 // pred_check_branch
          %220 = sbr.rel (%p218) target = $region20
        $region19: #{tpu_custom_call.1} parent=11 // pred_region
          _
        $region20: #{tpu_custom_call.1} parent=11 // pred_fallthru
          _
        // Predicated region
        $region21: #{tpu_custom_call.1} parent=11 // pred_check
          %p221 = pneg %p103
        $region22: #{tpu_custom_call.1} parent=11 // pred_check_branch
          %223 = sbr.rel (%p221) target = $region24
        $region23: #{tpu_custom_call.1} parent=11 // pred_region
          _
        $region24: #{tpu_custom_call.1} parent=11 // pred_fallthru
          _
        // Predicated region
        $region25: #{tpu_custom_call.1} parent=11 // pred_check
          %p224 = pneg %p124
        $region26: #{tpu_custom_call.1} parent=11 // pred_check_branch
          %226 = sbr.rel (%p224) target = $region28
        $region27: #{tpu_custom_call.1} parent=11 // pred_region
          _
        $region28: #{tpu_custom_call.1} parent=11 // pred_fallthru
          _
        // Predicated region
        $region29: #{tpu_custom_call.1} parent=11 // pred_check
          %p227 = pneg %p145
        $region30: #{tpu_custom_call.1} parent=11 // pred_check_branch
          %229 = sbr.rel (%p227) target = $region32
        $region31: #{tpu_custom_call.1} parent=11 // pred_region
          _
        $region32: #{tpu_custom_call.1} parent=11 // pred_fallthru
          _
        // Predicated region
        $region33: #{tpu_custom_call.1} parent=11 // pred_check
          %p230 = pneg %p166
        $region34: #{tpu_custom_call.1} parent=11 // pred_check_branch
          %232 = sbr.rel (%p230) target = $region36
        $region35: #{tpu_custom_call.1} parent=11 // pred_region
          _
        $region36: #{tpu_custom_call.1} parent=11 // pred_fallthru
          _
      $region12: #{tpu_custom_call.1} parent=5 // pred_fallthru
        _
      %p233 = scmp.lt.s32.totalorder %s14, 2
      // Predicated region
      $region37: #{tpu_custom_call.1} parent=5 // pred_check
        %p234 = pneg %p233
      $region38: #{tpu_custom_call.1} parent=5 // pred_check_branch
        %236 = sbr.rel (%p234) target = $region40
      $region39: #{tpu_custom_call.1} parent=5 // pred_region
        // Predicated region
        $region41: #{tpu_custom_call.1} parent=39 // pred_check
          %p237 = pneg %p55
        $region42: #{tpu_custom_call.1} parent=39 // pred_check_branch
          %239 = sbr.rel (%p237) target = $region44
        $region43: #{tpu_custom_call.1} parent=39 // pred_region
          %s240 = smul.u32 16, %s14
          %p241 = scmp.lt.s32.totalorder %s240, 31
          %s242 = scalar_select %p241, %s240, 31
          %s243 = smul.addr %s242, 8
          %s244 = scalar_lea.vmem %s1, %s243
          %s245 = smul.u32 16, %s14
        $region44: #{tpu_custom_call.1} parent=39 // pred_fallthru
          _
      $region40: #{tpu_custom_call.1} parent=5 // pred_fallthru
        _
      %p246 = scmp.le.s32.totalorder 1, %s14
      %p247 = scmp.lt.s32.totalorder %s14, 3
      %p248 = pnand %p246, %p247
      %p249 = pneg %p248
      // Predicated region
      $region45: #{tpu_custom_call.1} parent=5 // pred_check
        _
      $region46: #{tpu_custom_call.1} parent=5 // pred_check_branch
        %251 = sbr.rel (%p248) target = $region48
      $region47: #{tpu_custom_call.1} parent=5 // pred_region
        %s252 = ssub.s32 %s14, 1
        // Predicated region
        $region49: #{tpu_custom_call.1} parent=47 // pred_check
          %p253 = pneg %p35
        $region50: #{tpu_custom_call.1} parent=47 // pred_check_branch
          %255 = sbr.rel (%p253) target = $region52
        $region51: #{tpu_custom_call.1} parent=47 // pred_region
          %256 = dma.done [#allocation3], 16
        $region52: #{tpu_custom_call.1} parent=47 // pred_fallthru
          _
        %257 = sfence
        %p258 = pneg %p35
        %p259 = pneg %p32
        %s260 = smul.u32 16, %s19
        %p261 = scmp.lt.s32.totalorder %s260, 31
        %s262 = scalar_select %p261, %s260, 31
        %s263 = smul.addr %s262, 8
        %s264 = scalar_lea.vmem %s1, %s263
        %p265 = pneg %p61
        %p266 = pneg %p58
        %p267 = pneg %p82
        %p268 = pneg %p79
        %p269 = pneg %p103
        %p270 = pneg %p100
        %p271 = pneg %p124
        %p272 = pneg %p121
        %p273 = pneg %p145
        %p274 = pneg %p142
        %p275 = pneg %p166
        %p276 = pneg %p163
        %p277 = pneg %p192
        %p278 = pneg %p189
        %s279 = smul.u32 16, %s19
        %p280 = scmp.lt.s32.totalorder %s279, 31
        %s281 = scalar_select %p280, %s279, 31
        %s282 = smul.addr %s281, 8
        %s283 = scalar_lea.vmem %s7, %s282
        %s284 = smul.u32 16, %s19
        %p285 = scmp.lt.s32.totalorder %s284, 31
        %s286 = scalar_select %p285, %s284, 31
        %s287 = smul.addr %s286, 8
        %s288 = scalar_lea.vmem %s1, %s287
        %s289 = smul.u32 16, %s19
        %s290 = smul.u32 16, %s19
        %p291 = scmp.lt.s32.totalorder %s290, 31
        %s292 = scalar_select %p291, %s290, 31
        %s293 = smul.addr %s292, 8
        %s294 = scalar_lea.vmem %s7, %s293
        %s295 = smul.u32 16, %s19
        %v297 = vld [vmem:[%s288] sm:$0xff]
        %v298 = vld [vmem:[%s288 + $0x8] sm:$0xff]
        %v299 = vld [vmem:[%s288 + $0x10] sm:$0xff]
        %v300 = vld [vmem:[%s288 + $0x18] sm:$0xff]
        %v301 = vld [vmem:[%s288 + $0x20] sm:$0xff]
        %v302 = vld [vmem:[%s288 + $0x28] sm:$0xff]
        %v303 = vld [vmem:[%s288 + $0x30] sm:$0xff]
        %v304 = vld [vmem:[%s288 + $0x38] sm:$0xff]
        %v305 = vld [vmem:[%s288 + $0x40] sm:$0xff]
        %v306 = vld [vmem:[%s288 + $0x48] sm:$0xff]
        %v307 = vld [vmem:[%s288 + $0x50] sm:$0xff]
        %v308 = vld [vmem:[%s288 + $0x58] sm:$0xff]
        %v309 = vld [vmem:[%s288 + $0x60] sm:$0xff]
        %v310 = vld [vmem:[%s288 + $0x68] sm:$0xff]
        %v311 = vld [vmem:[%s288 + $0x70] sm:$0xff]
        %v312 = vld [vmem:[%s288 + $0x78] sm:$0xff]
        %v313 = vpack.c.bf16 %v298, %v297
        %v314 = vpack.c.bf16 %v300, %v299
        %v315 = vpack.c.bf16 %v302, %v301
        %v316 = vpack.c.bf16 %v304, %v303
        %v317 = vpack.c.bf16 %v306, %v305
        %v318 = vpack.c.bf16 %v308, %v307
        %v319 = vpack.c.bf16 %v310, %v309
        %v320 = vpack.c.bf16 %v312, %v311
        %v321 = vld [vmem:[%s2] sm:$0xff]
        %v322 = vld [vmem:[%s2 + $0x8] sm:$0xf]
        %v323 = vld [vmem:[%s2 + $0xc] sm:$0xff]
        %v324 = vld [vmem:[%s2 + $0x14] sm:$0xf]
        %v325 = vld [vmem:[%s5] ss:$8 sm:$0x7]
        %s326 = scalar_lea.vmem %s5, 1
        %v327 = vld [vmem:[%s326] ss:$8 sm:$0x7]
        %s328 = sld [smem:[#allocation2]]
        %v333 = vunpack.c.l.b16 %v321
        %v334 = vunpack.c.h.b16 %v321
        %v335 = vunpack.c.l.b16 %v322
        %v336 = vunpack.c.l.b16 %v323
        %v337 = vunpack.c.h.b16 %v323
        %v338 = vunpack.c.l.b16 %v324
        %v339 = vpack.c.b16 %v336, %v333
        %v340 = vpack.c.b16 %v337, %v334
        %v341 = vpack.c.b16 %v338, %v335
        %vm345 = vcmask 130048
        %v347 = vsel %vm345, %v313, 0
        %v350 = vsel %vm345, %v314, 0
        %v353 = vsel %vm345, %v315, 0
        %v356 = vsel %vm345, %v316, 0
        %v359 = vsel %vm345, %v317, 0
        %v362 = vsel %vm345, %v318, 0
        %v365 = vsel %vm345, %v319, 0
        %v368 = vsel %vm345, %v320, 0
        %370 = vmatprep.subr.bf16.mxu0 %v340
        %371 = vmatpush1.bf16.msra.mxu0 %v339
        %372 = vmatprep.subr.bf16.mxu0 0
        %373 = vmatpush1.bf16.msra.mxu0 0
        %374 = vmatprep.subr.bf16.mxu0 0
        %375 = vmatpush1.bf16.msra.mxu0 0
        %376 = vmatprep.subr.bf16.mxu0 0
        %377 = vmatpush1.bf16.msra.mxu0 0
        %378 = vmatprep.subr.bf16.mxu0 0
        %379 = vmatpush1.bf16.msra.mxu0 0
        %380 = vmatprep.subr.bf16.mxu0 0
        %381 = vmatpush1.bf16.msra.mxu0 0
        %382 = vmatprep.subr.bf16.mxu0 0
        %383 = vmatpush1.bf16.msra.mxu0 0
        %384 = vmatprep.subr.bf16.mxu0 0
        %385 = vmatpush1.bf16.msra.mxu0 0
        %386 = vmatprep.subr.bf16.mxu0 0
        %387 = vmatpush1.bf16.msra.mxu0 0
        %388 = vmatprep.subr.bf16.mxu0 0
        %389 = vmatpush1.bf16.msra.mxu0 0
        %390 = vmatprep.subr.bf16.mxu0 0
        %391 = vmatpush1.bf16.msra.mxu0 0
        %392 = vmatprep.subr.bf16.mxu0 0
        %393 = vmatpush1.bf16.msra.mxu0 0
        %394 = vmatprep.subr.bf16.mxu0 0
        %395 = vmatpush1.bf16.msra.mxu0 0
        %396 = vmatprep.subr.bf16.mxu0 0
        %397 = vmatpush1.bf16.msra.mxu0 0
        %398 = vmatprep.subr.bf16.mxu0 0
        %399 = vmatpush1.bf16.msra.mxu0 0
        %400 = vmatprep.subr.bf16.mxu0 0
        %401 = vmatpush1.bf16.msra.mxu0 0
        %402 = vmatprep.mubr.bf16.mxu0 0
        %403 = vmatmul.mubr.bf16.gmra.mrb[0].mxu0 %v347
        %v404 = vpop.f32.mrb[0].mxu0
        %v405 = vadd.f32 0.0, %v404
        %v406 = vpop.f32.mrb[0].mxu0
        %v407 = vadd.f32 0.0, %v406
        %v408 = vpop.f32.mrb[0].mxu0
        %v409 = vadd.f32 0.0, %v408
        %v410 = vpop.f32.mrb[0].mxu0
        %v411 = vadd.f32 0.0, %v410
        %412 = vmatprep.mubr.bf16.mxu0 0
        %413 = vmatmul.mubr.bf16.gmra.mrb[0].mxu0 %v350
        %v414 = vpop.f32.mrb[0].mxu0
        %v415 = vadd.f32 0.0, %v414
        %v416 = vpop.f32.mrb[0].mxu0
        %v417 = vadd.f32 0.0, %v416
        %v418 = vpop.f32.mrb[0].mxu0
        %v419 = vadd.f32 0.0, %v418
        %v420 = vpop.f32.mrb[0].mxu0
        %v421 = vadd.f32 0.0, %v420
        %422 = vmatprep.mubr.bf16.mxu0 0
        %423 = vmatmul.mubr.bf16.gmra.mrb[0].mxu0 %v353
        %v424 = vpop.f32.mrb[0].mxu0
        %v425 = vadd.f32 0.0, %v424
        %v426 = vpop.f32.mrb[0].mxu0
        %v427 = vadd.f32 0.0, %v426
        %v428 = vpop.f32.mrb[0].mxu0
        %v429 = vadd.f32 0.0, %v428
        %v430 = vpop.f32.mrb[0].mxu0
        %v431 = vadd.f32 0.0, %v430
        %432 = vmatprep.mubr.bf16.mxu0 0
        %433 = vmatmul.mubr.bf16.gmra.mrb[0].mxu0 %v356
        %v434 = vpop.f32.mrb[0].mxu0
        %v435 = vadd.f32 0.0, %v434
        %v436 = vpop.f32.mrb[0].mxu0
        %v437 = vadd.f32 0.0, %v436
        %v438 = vpop.f32.mrb[0].mxu0
        %v439 = vadd.f32 0.0, %v438
        %v440 = vpop.f32.mrb[0].mxu0
        %v441 = vadd.f32 0.0, %v440
        %442 = vmatprep.mubr.bf16.mxu0 0
        %443 = vmatmul.mubr.bf16.gmra.mrb[0].mxu0 %v359
        %v444 = vpop.f32.mrb[0].mxu0
        %v445 = vadd.f32 0.0, %v444
        %v446 = vpop.f32.mrb[0].mxu0
        %v447 = vadd.f32 0.0, %v446
        %v448 = vpop.f32.mrb[0].mxu0
        %v449 = vadd.f32 0.0, %v448
        %v450 = vpop.f32.mrb[0].mxu0
        %v451 = vadd.f32 0.0, %v450
        %452 = vmatprep.mubr.bf16.mxu0 0
        %453 = vmatmul.mubr.bf16.gmra.mrb[0].mxu0 %v362
        %v454 = vpop.f32.mrb[0].mxu0
        %v455 = vadd.f32 0.0, %v454
        %v456 = vpop.f32.mrb[0].mxu0
        %v457 = vadd.f32 0.0, %v456
        %v458 = vpop.f32.mrb[0].mxu0
        %v459 = vadd.f32 0.0, %v458
        %v460 = vpop.f32.mrb[0].mxu0
        %v461 = vadd.f32 0.0, %v460
        %462 = vmatprep.mubr.bf16.mxu0 0
        %463 = vmatmul.mubr.bf16.gmra.mrb[0].mxu0 %v365
        %v464 = vpop.f32.mrb[0].mxu0
        %v465 = vadd.f32 0.0, %v464
        %v466 = vpop.f32.mrb[0].mxu0
        %v467 = vadd.f32 0.0, %v466
        %v468 = vpop.f32.mrb[0].mxu0
        %v469 = vadd.f32 0.0, %v468
        %v470 = vpop.f32.mrb[0].mxu0
        %v471 = vadd.f32 0.0, %v470
        %472 = vmatprep.mubr.bf16.mxu0 0
        %473 = vmatmul.mubr.bf16.gmra.mrb[0].mxu0 %v368
        %v474 = vpop.f32.mrb[0].mxu0
        %v475 = vadd.f32 0.0, %v474
        %v476 = vpop.f32.mrb[0].mxu0
        %v477 = vadd.f32 0.0, %v476
        %v478 = vpop.f32.mrb[0].mxu0
        %v479 = vadd.f32 0.0, %v478
        %v480 = vpop.f32.mrb[0].mxu0
        %v481 = vadd.f32 0.0, %v480
        %482 = vdwg.mxu0
        %483 = vmatprep.subr.bf16.mxu0 0
        %484 = vmatpush1.bf16.msra.mxu0 %v341
        %485 = vmatprep.subr.bf16.mxu0 0
        %486 = vmatpush1.bf16.msra.mxu0 0
        %487 = vmatprep.subr.bf16.mxu0 0
        %488 = vmatpush1.bf16.msra.mxu0 0
        %489 = vmatprep.subr.bf16.mxu0 0
        %490 = vmatpush1.bf16.msra.mxu0 0
        %491 = vmatprep.subr.bf16.mxu0 0
        %492 = vmatpush1.bf16.msra.mxu0 0
        %493 = vmatprep.subr.bf16.mxu0 0
        %494 = vmatpush1.bf16.msra.mxu0 0
        %495 = vmatprep.subr.bf16.mxu0 0
        %496 = vmatpush1.bf16.msra.mxu0 0
        %497 = vmatprep.subr.bf16.mxu0 0
        %498 = vmatpush1.bf16.msra.mxu0 0
        %499 = vmatprep.subr.bf16.mxu0 0
        %500 = vmatpush1.bf16.msra.mxu0 0
        %501 = vmatprep.subr.bf16.mxu0 0
        %502 = vmatpush1.bf16.msra.mxu0 0
        %503 = vmatprep.subr.bf16.mxu0 0
        %504 = vmatpush1.bf16.msra.mxu0 0
        %505 = vmatprep.subr.bf16.mxu0 0
        %506 = vmatpush1.bf16.msra.mxu0 0
        %507 = vmatprep.subr.bf16.mxu0 0
        %508 = vmatpush1.bf16.msra.mxu0 0
        %509 = vmatprep.subr.bf16.mxu0 0
        %510 = vmatpush1.bf16.msra.mxu0 0
        %511 = vmatprep.subr.bf16.mxu0 0
        %512 = vmatpush1.bf16.msra.mxu0 0
        %513 = vmatprep.subr.bf16.mxu0 0
        %514 = vmatpush1.bf16.msra.mxu0 0
        %515 = vmatprep.mubr.bf16.mxu0 0
        %516 = vmatmul.mubr.bf16.gmra.mrb[0].mxu0 %v347
        %v517 = vpop.f32.mrb[0].mxu0
        %v518 = vadd.f32 0.0, %v517
        %v519 = vpop.f32.mrb[0].mxu0
        %v520 = vpop.f32.mrb[0].mxu0
        %v521 = vadd.f32 0.0, %v520
        %v522 = vpop.f32.mrb[0].mxu0
        %523 = vmatprep.mubr.bf16.mxu0 0
        %524 = vmatmul.mubr.bf16.gmra.mrb[0].mxu0 %v350
        %v525 = vpop.f32.mrb[0].mxu0
        %v526 = vadd.f32 0.0, %v525
        %v527 = vpop.f32.mrb[0].mxu0
        %v528 = vpop.f32.mrb[0].mxu0
        %v529 = vadd.f32 0.0, %v528
        %v530 = vpop.f32.mrb[0].mxu0
        %531 = vmatprep.mubr.bf16.mxu0 0
        %532 = vmatmul.mubr.bf16.gmra.mrb[0].mxu0 %v353
        %v533 = vpop.f32.mrb[0].mxu0
        %v534 = vadd.f32 0.0, %v533
        %v535 = vpop.f32.mrb[0].mxu0
        %v536 = vpop.f32.mrb[0].mxu0
        %v537 = vadd.f32 0.0, %v536
        %v538 = vpop.f32.mrb[0].mxu0
        %539 = vmatprep.mubr.bf16.mxu0 0
        %540 = vmatmul.mubr.bf16.gmra.mrb[0].mxu0 %v356
        %v541 = vpop.f32.mrb[0].mxu0
        %v542 = vadd.f32 0.0, %v541
        %v543 = vpop.f32.mrb[0].mxu0
        %v544 = vpop.f32.mrb[0].mxu0
        %v545 = vadd.f32 0.0, %v544
        %v546 = vpop.f32.mrb[0].mxu0
        %547 = vmatprep.mubr.bf16.mxu0 0
        %548 = vmatmul.mubr.bf16.gmra.mrb[0].mxu0 %v359
        %v549 = vpop.f32.mrb[0].mxu0
        %v550 = vadd.f32 0.0, %v549
        %v551 = vpop.f32.mrb[0].mxu0
        %v552 = vpop.f32.mrb[0].mxu0
        %v553 = vadd.f32 0.0, %v552
        %v554 = vpop.f32.mrb[0].mxu0
        %555 = vmatprep.mubr.bf16.mxu0 0
        %556 = vmatmul.mubr.bf16.gmra.mrb[0].mxu0 %v362
        %v557 = vpop.f32.mrb[0].mxu0
        %v558 = vadd.f32 0.0, %v557
        %v559 = vpop.f32.mrb[0].mxu0
        %v560 = vpop.f32.mrb[0].mxu0
        %v561 = vadd.f32 0.0, %v560
        %v562 = vpop.f32.mrb[0].mxu0
        %563 = vmatprep.mubr.bf16.mxu0 0
        %564 = vmatmul.mubr.bf16.gmra.mrb[0].mxu0 %v365
        %v565 = vpop.f32.mrb[0].mxu0
        %v566 = vadd.f32 0.0, %v565
        %v567 = vpop.f32.mrb[0].mxu0
        %v568 = vpop.f32.mrb[0].mxu0
        %v569 = vadd.f32 0.0, %v568
        %v570 = vpop.f32.mrb[0].mxu0
        %571 = vmatprep.mubr.bf16.mxu0 0
        %572 = vmatmul.mubr.bf16.gmra.mrb[0].mxu0 %v368
        %v573 = vpop.f32.mrb[0].mxu0
        %v574 = vadd.f32 0.0, %v573
        %v575 = vpop.f32.mrb[0].mxu0
        %v576 = vpop.f32.mrb[0].mxu0
        %v577 = vadd.f32 0.0, %v576
        %v578 = vpop.f32.mrb[0].mxu0
        %579 = vdwg.mxu0
        %v580 = vadd.f32 %v405, %v409
        %v581 = vadd.f32 %v580, %v415
        %v582 = vadd.f32 %v581, %v419
        %v583 = vadd.f32 %v582, %v425
        %v584 = vadd.f32 %v583, %v429
        %v585 = vadd.f32 %v584, %v435
        %v586 = vadd.f32 %v585, %v439
        %v587 = vadd.f32 %v586, %v445
        %v588 = vadd.f32 %v587, %v449
        %v589 = vadd.f32 %v588, %v455
        %v590 = vadd.f32 %v589, %v459
        %v591 = vadd.f32 %v590, %v465
        %v592 = vadd.f32 %v591, %v469
        %v593 = vadd.f32 %v592, %v475
        %v594 = vadd.f32 %v593, %v479
        %v595 = vrot.slane %v594, 4
        %v596 = vadd.f32 %v594, %v595
        %v597 = vrot.slane %v596, 2
        %v598 = vadd.f32 %v596, %v597
        %v599 = vrot.slane %v598, 1
        %v600 = vadd.f32 %v598, %v599
        %v601 = vadd.f32 %v407, %v411
        %v602 = vadd.f32 %v601, %v417
        %v603 = vadd.f32 %v602, %v421
        %v604 = vadd.f32 %v603, %v427
        %v605 = vadd.f32 %v604, %v431
        %v606 = vadd.f32 %v605, %v437
        %v607 = vadd.f32 %v606, %v441
        %v608 = vadd.f32 %v607, %v447
        %v609 = vadd.f32 %v608, %v451
        %v610 = vadd.f32 %v609, %v457
        %v611 = vadd.f32 %v610, %v461
        %v612 = vadd.f32 %v611, %v467
        %v613 = vadd.f32 %v612, %v471
        %v614 = vadd.f32 %v613, %v477
        %v615 = vadd.f32 %v614, %v481
        %v616 = vrot.slane %v615, 4
        %v617 = vadd.f32 %v615, %v616
        %v618 = vrot.slane %v617, 2
        %v619 = vadd.f32 %v617, %v618
        %v620 = vrot.slane %v619, 1
        %v621 = vadd.f32 %v619, %v620
        %vm622 = vcmask 359424
        %v623 = vsel %vm622, %v518, 0.0
        %v624 = vsel %vm622, %v521, 0.0
        %v625 = vadd.f32 %v623, %v624
        %v626 = vsel %vm622, %v526, 0.0
        %v627 = vadd.f32 %v625, %v626
        %v628 = vsel %vm622, %v529, 0.0
        %v629 = vadd.f32 %v627, %v628
        %v630 = vsel %vm622, %v534, 0.0
        %v631 = vadd.f32 %v629, %v630
        %v632 = vsel %vm622, %v537, 0.0
        %v633 = vadd.f32 %v631, %v632
        %v634 = vsel %vm622, %v542, 0.0
        %v635 = vadd.f32 %v633, %v634
        %v636 = vsel %vm622, %v545, 0.0
        %v637 = vadd.f32 %v635, %v636
        %v638 = vsel %vm622, %v550, 0.0
        %v639 = vadd.f32 %v637, %v638
        %v640 = vsel %vm622, %v553, 0.0
        %v641 = vadd.f32 %v639, %v640
        %v642 = vsel %vm622, %v558, 0.0
        %v643 = vadd.f32 %v641, %v642
        %v644 = vsel %vm622, %v561, 0.0
        %v645 = vadd.f32 %v643, %v644
        %v646 = vsel %vm622, %v566, 0.0
        %v647 = vadd.f32 %v645, %v646
        %v648 = vsel %vm622, %v569, 0.0
        %v649 = vadd.f32 %v647, %v648
        %v650 = vsel %vm622, %v574, 0.0
        %v651 = vadd.f32 %v649, %v650
        %v652 = vsel %vm622, %v577, 0.0
        %v653 = vadd.f32 %v651, %v652
        %v654 = vrot.slane %v653, 4
        %v655 = vadd.f32 %v653, %v654
        %v656 = vrot.slane %v655, 2
        %v657 = vadd.f32 %v655, %v656
        %v658 = vrot.slane %v657, 1
        %v659 = vadd.f32 %v657, %v658
        %v660 = vmul.f32 %v600, 0.0078125
        %v661 = vmul.f32 %v621, 0.0078125
        %v662 = vmul.f32 %v659, 0.0078125
        %v663 = vmul.f32 %v405, %v405
        %v664 = vmul.f32 %v407, %v407
        %v665 = vmul.f32 %v518, %v518
        %v666 = vmul.f32 %v409, %v409
        %v667 = vmul.f32 %v411, %v411
        %v668 = vmul.f32 %v521, %v521
        %v669 = vmul.f32 %v415, %v415
        %v670 = vmul.f32 %v417, %v417
        %v671 = vmul.f32 %v526, %v526
        %v672 = vmul.f32 %v419, %v419
        %v673 = vmul.f32 %v421, %v421
        %v674 = vmul.f32 %v529, %v529
        %v675 = vmul.f32 %v425, %v425
        %v676 = vmul.f32 %v427, %v427
        %v677 = vmul.f32 %v534, %v534
        %v678 = vmul.f32 %v429, %v429
        %v679 = vmul.f32 %v431, %v431
        %v680 = vmul.f32 %v537, %v537
        %v681 = vmul.f32 %v435, %v435
        %v682 = vmul.f32 %v437, %v437
        %v683 = vmul.f32 %v542, %v542
        %v684 = vmul.f32 %v439, %v439
        %v685 = vmul.f32 %v441, %v441
        %v686 = vmul.f32 %v545, %v545
        %v687 = vmul.f32 %v445, %v445
        %v688 = vmul.f32 %v447, %v447
        %v689 = vmul.f32 %v550, %v550
        %v690 = vmul.f32 %v449, %v449
        %v691 = vmul.f32 %v451, %v451
        %v692 = vmul.f32 %v553, %v553
        %v693 = vmul.f32 %v455, %v455
        %v694 = vmul.f32 %v457, %v457
        %v695 = vmul.f32 %v558, %v558
        %v696 = vmul.f32 %v459, %v459
        %v697 = vmul.f32 %v461, %v461
        %v698 = vmul.f32 %v561, %v561
        %v699 = vmul.f32 %v465, %v465
        %v700 = vmul.f32 %v467, %v467
        %v701 = vmul.f32 %v566, %v566
        %v702 = vmul.f32 %v469, %v469
        %v703 = vmul.f32 %v471, %v471
        %v704 = vmul.f32 %v569, %v569
        %v705 = vmul.f32 %v475, %v475
        %v706 = vmul.f32 %v477, %v477
        %v707 = vmul.f32 %v574, %v574
        %v708 = vmul.f32 %v479, %v479
        %v709 = vmul.f32 %v481, %v481
        %v710 = vmul.f32 %v577, %v577
        %v711 = vadd.f32 %v663, %v666
        %v712 = vadd.f32 %v711, %v669
        %v713 = vadd.f32 %v712, %v672
        %v714 = vadd.f32 %v713, %v675
        %v715 = vadd.f32 %v714, %v678
        %v716 = vadd.f32 %v715, %v681
        %v717 = vadd.f32 %v716, %v684
        %v718 = vadd.f32 %v717, %v687
        %v719 = vadd.f32 %v718, %v690
        %v720 = vadd.f32 %v719, %v693
        %v721 = vadd.f32 %v720, %v696
        %v722 = vadd.f32 %v721, %v699
        %v723 = vadd.f32 %v722, %v702
        %v724 = vadd.f32 %v723, %v705
        %v725 = vadd.f32 %v724, %v708
        %v726 = vrot.slane %v725, 4
        %v727 = vadd.f32 %v725, %v726
        %v728 = vrot.slane %v727, 2
        %v729 = vadd.f32 %v727, %v728
        %v730 = vrot.slane %v729, 1
        %v731 = vadd.f32 %v729, %v730
        %v732 = vadd.f32 %v664, %v667
        %v733 = vadd.f32 %v732, %v670
        %v734 = vadd.f32 %v733, %v673
        %v735 = vadd.f32 %v734, %v676
        %v736 = vadd.f32 %v735, %v679
        %v737 = vadd.f32 %v736, %v682
        %v738 = vadd.f32 %v737, %v685
        %v739 = vadd.f32 %v738, %v688
        %v740 = vadd.f32 %v739, %v691
        %v741 = vadd.f32 %v740, %v694
        %v742 = vadd.f32 %v741, %v697
        %v743 = vadd.f32 %v742, %v700
        %v744 = vadd.f32 %v743, %v703
        %v745 = vadd.f32 %v744, %v706
        %v746 = vadd.f32 %v745, %v709
        %v747 = vrot.slane %v746, 4
        %v748 = vadd.f32 %v746, %v747
        %v749 = vrot.slane %v748, 2
        %v750 = vadd.f32 %v748, %v749
        %v751 = vrot.slane %v750, 1
        %v752 = vadd.f32 %v750, %v751
        %v753 = vsel %vm622, %v665, 0.0
        %v754 = vsel %vm622, %v668, 0.0
        %v755 = vadd.f32 %v753, %v754
        %v756 = vsel %vm622, %v671, 0.0
        %v757 = vadd.f32 %v755, %v756
        %v758 = vsel %vm622, %v674, 0.0
        %v759 = vadd.f32 %v757, %v758
        %v760 = vsel %vm622, %v677, 0.0
        %v761 = vadd.f32 %v759, %v760
        %v762 = vsel %vm622, %v680, 0.0
        %v763 = vadd.f32 %v761, %v762
        %v764 = vsel %vm622, %v683, 0.0
        %v765 = vadd.f32 %v763, %v764
        %v766 = vsel %vm622, %v686, 0.0
        %v767 = vadd.f32 %v765, %v766
        %v768 = vsel %vm622, %v689, 0.0
        %v769 = vadd.f32 %v767, %v768
        %v770 = vsel %vm622, %v692, 0.0
        %v771 = vadd.f32 %v769, %v770
        %v772 = vsel %vm622, %v695, 0.0
        %v773 = vadd.f32 %v771, %v772
        %v774 = vsel %vm622, %v698, 0.0
        %v775 = vadd.f32 %v773, %v774
        %v776 = vsel %vm622, %v701, 0.0
        %v777 = vadd.f32 %v775, %v776
        %v778 = vsel %vm622, %v704, 0.0
        %v779 = vadd.f32 %v777, %v778
        %v780 = vsel %vm622, %v707, 0.0
        %v781 = vadd.f32 %v779, %v780
        %v782 = vsel %vm622, %v710, 0.0
        %v783 = vadd.f32 %v781, %v782
        %v784 = vrot.slane %v783, 4
        %v785 = vadd.f32 %v783, %v784
        %v786 = vrot.slane %v785, 2
        %v787 = vadd.f32 %v785, %v786
        %v788 = vrot.slane %v787, 1
        %v789 = vadd.f32 %v787, %v788
        %v790 = vmul.f32 %v731, 0.0078125
        %v791 = vmul.f32 %v752, 0.0078125
        %v792 = vmul.f32 %v789, 0.0078125
        %v793 = vmul.f32 %v660, %v660
        %v794 = vmul.f32 %v661, %v661
        %v795 = vmul.f32 %v662, %v662
        %v796 = vsub.f32 %v790, %v793
        %v797 = vsub.f32 %v791, %v794
        %v798 = vsub.f32 %v792, %v795
        %v799 = vadd.f32 %v796, 1e-05
        %v800 = vadd.f32 %v797, 1e-05
        %v801 = vadd.f32 %v798, 1e-05
        %v802 = vrsqrt.pop %v799
        %v803 = vrsqrt.pop %v800
        %v804 = vrsqrt.pop %v801
        %v808 = vcombine.low %v802, %v803
        %v810 = vunpack.c.l.s4 1966171168
        %v811 = vunpack.c.0.s8 %v810
        %v812 = vlaneseq
        %v813 = vshrl.u32 %v812, 7
        %v814 = vsub.s32 %v811, %v813
        %v815 = vrot.slane %v808, %v814
        %v817 = vunpack.c.l.s4 1966171168
        %v818 = vunpack.c.0.s8 %v817
        %v819 = vlaneseq
        %v820 = vshrl.u32 %v819, 7
        %v821 = vsub.s32 %v818, %v820
        %v822 = vrot.slane %v804, %v821
        %v823 = vcombine.low %v815, %v822
        %v825 = vunpack.c.l.s4 1966171168
        %v826 = vunpack.c.0.s8 %v825
        %v827 = vlaneseq
        %v828 = vshrl.u32 %v827, 7
        %v829 = vsub.s32 %v826, %v828
        %v830 = vrot.slane %v823, %v829
        %v832 = vmul.f32 %v325, %v830
        %v834 = vlaneseq
        %v835 = vshrl.u32 %v834, 7
        %v836 = vsub.s32 0, %v835
        %v837 = vrot.slane %v832, %v836
        %v838 = vlaneseq
        %v839 = vshrl.u32 %v838, 7
        %v840 = vsub.s32 1, %v839
        %v841 = vrot.slane %v832, %v840
        %v842 = vlaneseq
        %v843 = vshrl.u32 %v842, 7
        %v844 = vsub.s32 2, %v843
        %v845 = vrot.slane %v832, %v844
        %v849 = vmul.f32 %v660, %v837
        %v850 = vmul.f32 %v661, %v841
        %v851 = vmul.f32 %v662, %v845
        %v855 = vcombine.low %v849, %v850
        %v857 = vunpack.c.l.s4 1966171168
        %v858 = vunpack.c.0.s8 %v857
        %v859 = vlaneseq
        %v860 = vshrl.u32 %v859, 7
        %v861 = vsub.s32 %v858, %v860
        %v862 = vrot.slane %v855, %v861
        %v864 = vunpack.c.l.s4 1966171168
        %v865 = vunpack.c.0.s8 %v864
        %v866 = vlaneseq
        %v867 = vshrl.u32 %v866, 7
        %v868 = vsub.s32 %v865, %v867
        %v869 = vrot.slane %v851, %v868
        %v870 = vcombine.low %v862, %v869
        %v872 = vunpack.c.l.s4 1966171168
        %v873 = vunpack.c.0.s8 %v872
        %v874 = vlaneseq
        %v875 = vshrl.u32 %v874, 7
        %v876 = vsub.s32 %v873, %v875
        %v877 = vrot.slane %v870, %v876
        %v879 = vsub.f32 %v327, %v877
        %v880 = vmul.f32 %v405, %v837
        %v881 = vmul.f32 %v407, %v841
        %v882 = vmul.f32 %v518, %v845
        %v883 = vmul.f32 %v409, %v837
        %v884 = vmul.f32 %v411, %v841
        %v885 = vmul.f32 %v521, %v845
        %v886 = vmul.f32 %v415, %v837
        %v887 = vmul.f32 %v417, %v841
        %v888 = vmul.f32 %v526, %v845
        %v889 = vmul.f32 %v419, %v837
        %v890 = vmul.f32 %v421, %v841
        %v891 = vmul.f32 %v529, %v845
        %v892 = vmul.f32 %v425, %v837
        %v893 = vmul.f32 %v427, %v841
        %v894 = vmul.f32 %v534, %v845
        %v895 = vmul.f32 %v429, %v837
        %v896 = vmul.f32 %v431, %v841
        %v897 = vmul.f32 %v537, %v845
        %v898 = vmul.f32 %v435, %v837
        %v899 = vmul.f32 %v437, %v841
        %v900 = vmul.f32 %v542, %v845
        %v901 = vmul.f32 %v439, %v837
        %v902 = vmul.f32 %v441, %v841
        %v903 = vmul.f32 %v545, %v845
        %v904 = vmul.f32 %v445, %v837
        %v905 = vmul.f32 %v447, %v841
        %v906 = vmul.f32 %v550, %v845
        %v907 = vmul.f32 %v449, %v837
        %v908 = vmul.f32 %v451, %v841
        %v909 = vmul.f32 %v553, %v845
        %v910 = vmul.f32 %v455, %v837
        %v911 = vmul.f32 %v457, %v841
        %v912 = vmul.f32 %v558, %v845
        %v913 = vmul.f32 %v459, %v837
        %v914 = vmul.f32 %v461, %v841
        %v915 = vmul.f32 %v561, %v845
        %v916 = vmul.f32 %v465, %v837
        %v917 = vmul.f32 %v467, %v841
        %v918 = vmul.f32 %v566, %v845
        %v919 = vmul.f32 %v469, %v837
        %v920 = vmul.f32 %v471, %v841
        %v921 = vmul.f32 %v569, %v845
        %v922 = vmul.f32 %v475, %v837
        %v923 = vmul.f32 %v477, %v841
        %v924 = vmul.f32 %v574, %v845
        %v925 = vmul.f32 %v479, %v837
        %v926 = vmul.f32 %v481, %v841
        %v927 = vmul.f32 %v577, %v845
        %v929 = vlaneseq
        %v930 = vshrl.u32 %v929, 7
        %v931 = vsub.s32 0, %v930
        %v932 = vrot.slane %v879, %v931
        %v933 = vlaneseq
        %v934 = vshrl.u32 %v933, 7
        %v935 = vsub.s32 1, %v934
        %v936 = vrot.slane %v879, %v935
        %v937 = vlaneseq
        %v938 = vshrl.u32 %v937, 7
        %v939 = vsub.s32 2, %v938
        %v940 = vrot.slane %v879, %v939
        %v944 = vadd.f32 %v880, %v932
        %v945 = vadd.f32 %v881, %v936
        %v946 = vadd.f32 %v882, %v940
        %v947 = vadd.f32 %v883, %v932
        %v948 = vadd.f32 %v884, %v936
        %v949 = vadd.f32 %v885, %v940
        %v950 = vadd.f32 %v886, %v932
        %v951 = vadd.f32 %v887, %v936
        %v952 = vadd.f32 %v888, %v940
        %v953 = vadd.f32 %v889, %v932
        %v954 = vadd.f32 %v890, %v936
        %v955 = vadd.f32 %v891, %v940
        %v956 = vadd.f32 %v892, %v932
        %v957 = vadd.f32 %v893, %v936
        %v958 = vadd.f32 %v894, %v940
        %v959 = vadd.f32 %v895, %v932
        %v960 = vadd.f32 %v896, %v936
        %v961 = vadd.f32 %v897, %v940
        %v962 = vadd.f32 %v898, %v932
        %v963 = vadd.f32 %v899, %v936
        %v964 = vadd.f32 %v900, %v940
        %v965 = vadd.f32 %v901, %v932
        %v966 = vadd.f32 %v902, %v936
        %v967 = vadd.f32 %v903, %v940
        %v968 = vadd.f32 %v904, %v932
        %v969 = vadd.f32 %v905, %v936
        %v970 = vadd.f32 %v906, %v940
        %v971 = vadd.f32 %v907, %v932
        %v972 = vadd.f32 %v908, %v936
        %v973 = vadd.f32 %v909, %v940
        %v974 = vadd.f32 %v910, %v932
        %v975 = vadd.f32 %v911, %v936
        %v976 = vadd.f32 %v912, %v940
        %v977 = vadd.f32 %v913, %v932
        %v978 = vadd.f32 %v914, %v936
        %v979 = vadd.f32 %v915, %v940
        %v980 = vadd.f32 %v916, %v932
        %v981 = vadd.f32 %v917, %v936
        %v982 = vadd.f32 %v918, %v940
        %v983 = vadd.f32 %v919, %v932
        %v984 = vadd.f32 %v920, %v936
        %v985 = vadd.f32 %v921, %v940
        %v986 = vadd.f32 %v922, %v932
        %v987 = vadd.f32 %v923, %v936
        %v988 = vadd.f32 %v924, %v940
        %v989 = vadd.f32 %v925, %v932
        %v990 = vadd.f32 %v926, %v936
        %v991 = vadd.f32 %v927, %v940
        %vm992 = vcmp.gt.f32.partialorder %v944, 0.0
        %vm993 = vcmp.gt.f32.partialorder %v945, 0.0
        %vm994 = vcmp.gt.f32.partialorder %v946, 0.0
        %vm995 = vcmp.gt.f32.partialorder %v947, 0.0
        %vm996 = vcmp.gt.f32.partialorder %v948, 0.0
        %vm997 = vcmp.gt.f32.partialorder %v949, 0.0
        %vm998 = vcmp.gt.f32.partialorder %v950, 0.0
        %vm999 = vcmp.gt.f32.partialorder %v951, 0.0
        %vm1000 = vcmp.gt.f32.partialorder %v952, 0.0
        %vm1001 = vcmp.gt.f32.partialorder %v953, 0.0
        %vm1002 = vcmp.gt.f32.partialorder %v954, 0.0
        %vm1003 = vcmp.gt.f32.partialorder %v955, 0.0
        %vm1004 = vcmp.gt.f32.partialorder %v956, 0.0
        %vm1005 = vcmp.gt.f32.partialorder %v957, 0.0
        %vm1006 = vcmp.gt.f32.partialorder %v958, 0.0
        %vm1007 = vcmp.gt.f32.partialorder %v959, 0.0
        %vm1008 = vcmp.gt.f32.partialorder %v960, 0.0
        %vm1009 = vcmp.gt.f32.partialorder %v961, 0.0
        %vm1010 = vcmp.gt.f32.partialorder %v962, 0.0
        %vm1011 = vcmp.gt.f32.partialorder %v963, 0.0
        %vm1012 = vcmp.gt.f32.partialorder %v964, 0.0
        %vm1013 = vcmp.gt.f32.partialorder %v965, 0.0
        %vm1014 = vcmp.gt.f32.partialorder %v966, 0.0
        %vm1015 = vcmp.gt.f32.partialorder %v967, 0.0
        %vm1016 = vcmp.gt.f32.partialorder %v968, 0.0
        %vm1017 = vcmp.gt.f32.partialorder %v969, 0.0
        %vm1018 = vcmp.gt.f32.partialorder %v970, 0.0
        %vm1019 = vcmp.gt.f32.partialorder %v971, 0.0
        %vm1020 = vcmp.gt.f32.partialorder %v972, 0.0
        %vm1021 = vcmp.gt.f32.partialorder %v973, 0.0
        %vm1022 = vcmp.gt.f32.partialorder %v974, 0.0
        %vm1023 = vcmp.gt.f32.partialorder %v975, 0.0
        %vm1024 = vcmp.gt.f32.partialorder %v976, 0.0
        %vm1025 = vcmp.gt.f32.partialorder %v977, 0.0
        %vm1026 = vcmp.gt.f32.partialorder %v978, 0.0
        %vm1027 = vcmp.gt.f32.partialorder %v979, 0.0
        %vm1028 = vcmp.gt.f32.partialorder %v980, 0.0
        %vm1029 = vcmp.gt.f32.partialorder %v981, 0.0
        %vm1030 = vcmp.gt.f32.partialorder %v982, 0.0
        %vm1031 = vcmp.gt.f32.partialorder %v983, 0.0
        %vm1032 = vcmp.gt.f32.partialorder %v984, 0.0
        %vm1033 = vcmp.gt.f32.partialorder %v985, 0.0
        %vm1034 = vcmp.gt.f32.partialorder %v986, 0.0
        %vm1035 = vcmp.gt.f32.partialorder %v987, 0.0
        %vm1036 = vcmp.gt.f32.partialorder %v988, 0.0
        %vm1037 = vcmp.gt.f32.partialorder %v989, 0.0
        %vm1038 = vcmp.gt.f32.partialorder %v990, 0.0
        %vm1039 = vcmp.gt.f32.partialorder %v991, 0.0
        %v1040 = vstv %s328
        %v1041 = vmul.f32 %v1040, %v944
        %v1042 = vmul.f32 %v1040, %v945
        %v1043 = vmul.f32 %v1040, %v946
        %v1044 = vmul.f32 %v1040, %v947
        %v1045 = vmul.f32 %v1040, %v948
        %v1046 = vmul.f32 %v1040, %v949
        %v1047 = vmul.f32 %v1040, %v950
        %v1048 = vmul.f32 %v1040, %v951
        %v1049 = vmul.f32 %v1040, %v952
        %v1050 = vmul.f32 %v1040, %v953
        %v1051 = vmul.f32 %v1040, %v954
        %v1052 = vmul.f32 %v1040, %v955
        %v1053 = vmul.f32 %v1040, %v956
        %v1054 = vmul.f32 %v1040, %v957
        %v1055 = vmul.f32 %v1040, %v958
        %v1056 = vmul.f32 %v1040, %v959
        %v1057 = vmul.f32 %v1040, %v960
        %v1058 = vmul.f32 %v1040, %v961
        %v1059 = vmul.f32 %v1040, %v962
        %v1060 = vmul.f32 %v1040, %v963
        %v1061 = vmul.f32 %v1040, %v964
        %v1062 = vmul.f32 %v1040, %v965
        %v1063 = vmul.f32 %v1040, %v966
        %v1064 = vmul.f32 %v1040, %v967
        %v1065 = vmul.f32 %v1040, %v968
        %v1066 = vmul.f32 %v1040, %v969
        %v1067 = vmul.f32 %v1040, %v970
        %v1068 = vmul.f32 %v1040, %v971
        %v1069 = vmul.f32 %v1040, %v972
        %v1070 = vmul.f32 %v1040, %v973
        %v1071 = vmul.f32 %v1040, %v974
        %v1072 = vmul.f32 %v1040, %v975
        %v1073 = vmul.f32 %v1040, %v976
        %v1074 = vmul.f32 %v1040, %v977
        %v1075 = vmul.f32 %v1040, %v978
        %v1076 = vmul.f32 %v1040, %v979
        %v1077 = vmul.f32 %v1040, %v980
        %v1078 = vmul.f32 %v1040, %v981
        %v1079 = vmul.f32 %v1040, %v982
        %v1080 = vmul.f32 %v1040, %v983
        %v1081 = vmul.f32 %v1040, %v984
        %v1082 = vmul.f32 %v1040, %v985
        %v1083 = vmul.f32 %v1040, %v986
        %v1084 = vmul.f32 %v1040, %v987
        %v1085 = vmul.f32 %v1040, %v988
        %v1086 = vmul.f32 %v1040, %v989
        %v1087 = vmul.f32 %v1040, %v990
        %v1088 = vmul.f32 %v1040, %v991
        %v1089 = vsel %vm992, %v944, %v1041
        %v1090 = vsel %vm993, %v945, %v1042
        %v1091 = vsel %vm994, %v946, %v1043
        %v1092 = vsel %vm995, %v947, %v1044
        %v1093 = vsel %vm996, %v948, %v1045
        %v1094 = vsel %vm997, %v949, %v1046
        %v1095 = vsel %vm998, %v950, %v1047
        %v1096 = vsel %vm999, %v951, %v1048
        %v1097 = vsel %vm1000, %v952, %v1049
        %v1098 = vsel %vm1001, %v953, %v1050
        %v1099 = vsel %vm1002, %v954, %v1051
        %v1100 = vsel %vm1003, %v955, %v1052
        %v1101 = vsel %vm1004, %v956, %v1053
        %v1102 = vsel %vm1005, %v957, %v1054
        %v1103 = vsel %vm1006, %v958, %v1055
        %v1104 = vsel %vm1007, %v959, %v1056
        %v1105 = vsel %vm1008, %v960, %v1057
        %v1106 = vsel %vm1009, %v961, %v1058
        %v1107 = vsel %vm1010, %v962, %v1059
        %v1108 = vsel %vm1011, %v963, %v1060
        %v1109 = vsel %vm1012, %v964, %v1061
        %v1110 = vsel %vm1013, %v965, %v1062
        %v1111 = vsel %vm1014, %v966, %v1063
        %v1112 = vsel %vm1015, %v967, %v1064
        %v1113 = vsel %vm1016, %v968, %v1065
        %v1114 = vsel %vm1017, %v969, %v1066
        %v1115 = vsel %vm1018, %v970, %v1067
        %v1116 = vsel %vm1019, %v971, %v1068
        %v1117 = vsel %vm1020, %v972, %v1069
        %v1118 = vsel %vm1021, %v973, %v1070
        %v1119 = vsel %vm1022, %v974, %v1071
        %v1120 = vsel %vm1023, %v975, %v1072
        %v1121 = vsel %vm1024, %v976, %v1073
        %v1122 = vsel %vm1025, %v977, %v1074
        %v1123 = vsel %vm1026, %v978, %v1075
        %v1124 = vsel %vm1027, %v979, %v1076
        %v1125 = vsel %vm1028, %v980, %v1077
        %v1126 = vsel %vm1029, %v981, %v1078
        %v1127 = vsel %vm1030, %v982, %v1079
        %v1128 = vsel %vm1031, %v983, %v1080
        %v1129 = vsel %vm1032, %v984, %v1081
        %v1130 = vsel %vm1033, %v985, %v1082
        %v1131 = vsel %vm1034, %v986, %v1083
        %v1132 = vsel %vm1035, %v987, %v1084
        %v1133 = vsel %vm1036, %v988, %v1085
        %v1134 = vsel %vm1037, %v989, %v1086
        %v1135 = vsel %vm1038, %v990, %v1087
        %v1136 = vsel %vm1039, %v991, %v1088
        %v1137 = vpack.c.bf16 %v1092, %v1089
        %v1138 = vpack.c.bf16 %v1093, %v1090
        %v1139 = vpack.c.bf16 %v1094, %v1091
        %v1140 = vpack.c.bf16 %v1098, %v1095
        %v1141 = vpack.c.bf16 %v1099, %v1096
        %v1142 = vpack.c.bf16 %v1100, %v1097
        %v1143 = vpack.c.bf16 %v1104, %v1101
        %v1144 = vpack.c.bf16 %v1105, %v1102
        %v1145 = vpack.c.bf16 %v1106, %v1103
        %v1146 = vpack.c.bf16 %v1110, %v1107
        %v1147 = vpack.c.bf16 %v1111, %v1108
        %v1148 = vpack.c.bf16 %v1112, %v1109
        %v1149 = vpack.c.bf16 %v1116, %v1113
        %v1150 = vpack.c.bf16 %v1117, %v1114
        %v1151 = vpack.c.bf16 %v1118, %v1115
        %v1152 = vpack.c.bf16 %v1122, %v1119
        %v1153 = vpack.c.bf16 %v1123, %v1120
        %v1154 = vpack.c.bf16 %v1124, %v1121
        %v1155 = vpack.c.bf16 %v1128, %v1125
        %v1156 = vpack.c.bf16 %v1129, %v1126
        %v1157 = vpack.c.bf16 %v1130, %v1127
        %v1158 = vpack.c.bf16 %v1134, %v1131
        %v1159 = vpack.c.bf16 %v1135, %v1132
        %v1160 = vpack.c.bf16 %v1136, %v1133
        %v1161 = vld [vmem:[%s3] sm:$0xff]
        %v1162 = vld [vmem:[%s3 + $0x8] sm:$0xf]
        %v1163 = vld [vmem:[%s3 + $0xc] sm:$0xff]
        %v1164 = vld [vmem:[%s3 + $0x14] sm:$0xf]
        %v1165 = vld [vmem:[%s3 + $0x18] sm:$0xff]
        %v1166 = vld [vmem:[%s3 + $0x20] sm:$0xf]
        %v1167 = vld [vmem:[%s3 + $0x24] sm:$0xff]
        %v1168 = vld [vmem:[%s3 + $0x2c] sm:$0xf]
        %v1169 = vld [vmem:[%s3 + $0x30] sm:$0xff]
        %v1170 = vld [vmem:[%s3 + $0x38] sm:$0xf]
        %v1171 = vld [vmem:[%s3 + $0x3c] sm:$0xff]
        %v1172 = vld [vmem:[%s3 + $0x44] sm:$0xf]
        %v1173 = vld [vmem:[%s3 + $0x48] sm:$0xff]
        %v1174 = vld [vmem:[%s3 + $0x50] sm:$0xf]
        %v1175 = vld [vmem:[%s3 + $0x54] sm:$0xff]
        %v1176 = vld [vmem:[%s3 + $0x5c] sm:$0xf]
        %v1177 = vld [vmem:[%s3 + $0x60] sm:$0xff]
        %v1178 = vld [vmem:[%s3 + $0x68] sm:$0xf]
        %v1179 = vld [vmem:[%s3 + $0x6c] sm:$0xff]
        %v1180 = vld [vmem:[%s3 + $0x74] sm:$0xf]
        %v1181 = vld [vmem:[%s3 + $0x78] sm:$0xff]
        %v1182 = vld [vmem:[%s3 + $0x80] sm:$0xf]
        %v1183 = vld [vmem:[%s3 + $0x84] sm:$0xff]
        %v1184 = vld [vmem:[%s3 + $0x8c] sm:$0xf]
        %v1185 = vld [vmem:[%s3 + $0x90] sm:$0xff]
        %v1186 = vld [vmem:[%s3 + $0x98] sm:$0xf]
        %v1187 = vld [vmem:[%s3 + $0x9c] sm:$0xff]
        %v1188 = vld [vmem:[%s3 + $0xa4] sm:$0xf]
        %v1189 = vld [vmem:[%s3 + $0xa8] sm:$0xff]
        %v1190 = vld [vmem:[%s3 + $0xb0] sm:$0xf]
        %v1191 = vld [vmem:[%s3 + $0xb4] sm:$0xff]
        %v1192 = vld [vmem:[%s3 + $0xbc] sm:$0xf]
        %v1193 = vld [vmem:[%s3 + $0xc0] sm:$0xff]
        %v1194 = vld [vmem:[%s3 + $0xc8] sm:$0xf]
        %v1195 = vld [vmem:[%s3 + $0xcc] sm:$0xff]
        %v1196 = vld [vmem:[%s3 + $0xd4] sm:$0xf]
        %v1197 = vld [vmem:[%s3 + $0xd8] sm:$0xff]
        %v1198 = vld [vmem:[%s3 + $0xe0] sm:$0xf]
        %v1199 = vld [vmem:[%s3 + $0xe4] sm:$0xff]
        %v1200 = vld [vmem:[%s3 + $0xec] sm:$0xf]
        %v1201 = vld [vmem:[%s3 + $0xf0] sm:$0xff]
        %v1202 = vld [vmem:[%s3 + $0xf8] sm:$0xf]
        %v1203 = vld [vmem:[%s3 + $0xfc] sm:$0xff]
        %v1204 = vld [vmem:[%s3 + $0x104] sm:$0xf]
        %v1205 = vld [vmem:[%s3 + $0x108] sm:$0xff]
        %v1206 = vld [vmem:[%s3 + $0x110] sm:$0xf]
        %v1207 = vld [vmem:[%s3 + $0x114] sm:$0xff]
        %v1208 = vld [vmem:[%s3 + $0x11c] sm:$0xf]
        %v1209 = vld [vmem:[%s3 + $0x120] sm:$0xff]
        %v1210 = vld [vmem:[%s3 + $0x128] sm:$0xf]
        %v1211 = vld [vmem:[%s3 + $0x12c] sm:$0xff]
        %v1212 = vld [vmem:[%s3 + $0x134] sm:$0xf]
        %v1213 = vld [vmem:[%s3 + $0x138] sm:$0xff]
        %v1214 = vld [vmem:[%s3 + $0x140] sm:$0xf]
        %v1215 = vld [vmem:[%s3 + $0x144] sm:$0xff]
        %v1216 = vld [vmem:[%s3 + $0x14c] sm:$0xf]
        %v1217 = vld [vmem:[%s3 + $0x150] sm:$0xff]
        %v1218 = vld [vmem:[%s3 + $0x158] sm:$0xf]
        %v1219 = vld [vmem:[%s3 + $0x15c] sm:$0xff]
        %v1220 = vld [vmem:[%s3 + $0x164] sm:$0xf]
        %v1221 = vld [vmem:[%s3 + $0x168] sm:$0xff]
        %v1222 = vld [vmem:[%s3 + $0x170] sm:$0xf]
        %v1223 = vld [vmem:[%s3 + $0x174] sm:$0xff]
        %v1224 = vld [vmem:[%s3 + $0x17c] sm:$0xf]
        %v1225 = vld [vmem:[%s3 + $0x180] sm:$0xff]
        %v1226 = vld [vmem:[%s3 + $0x188] sm:$0xf]
        %v1227 = vld [vmem:[%s3 + $0x18c] sm:$0xff]
        %v1228 = vld [vmem:[%s3 + $0x194] sm:$0xf]
        %v1229 = vld [vmem:[%s3 + $0x198] sm:$0xff]
        %v1230 = vld [vmem:[%s3 + $0x1a0] sm:$0xf]
        %v1231 = vld [vmem:[%s3 + $0x1a4] sm:$0xff]
        %v1232 = vld [vmem:[%s3 + $0x1ac] sm:$0xf]
        %v1233 = vld [vmem:[%s3 + $0x1b0] sm:$0xff]
        %v1234 = vld [vmem:[%s3 + $0x1b8] sm:$0xf]
        %v1235 = vld [vmem:[%s3 + $0x1bc] sm:$0x33]
        %v1236 = vld [vmem:[%s3 + $0x1c4] sm:$0x3]
        %s1237 = scalar_lea.vmem %s5, 2
        %v1238 = vld [vmem:[%s1237] ss:$8 sm:$0x7]
        %s1239 = scalar_lea.vmem %s5, 3
        %v1240 = vld [vmem:[%s1239] ss:$8 sm:$0x7]
        %s1241 = sld [smem:[#allocation2 + $0x1]]
        %v1318 = vunpack.c.l.b16 %v1161
        %v1319 = vunpack.c.h.b16 %v1161
        %v1320 = vunpack.c.l.b16 %v1162
        %v1321 = vunpack.c.l.b16 %v1163
        %v1322 = vunpack.c.h.b16 %v1163
        %v1323 = vunpack.c.l.b16 %v1164
        %v1324 = vunpack.c.l.b16 %v1165
        %v1325 = vunpack.c.h.b16 %v1165
        %v1326 = vunpack.c.l.b16 %v1166
        %v1327 = vunpack.c.l.b16 %v1167
        %v1328 = vunpack.c.h.b16 %v1167
        %v1329 = vunpack.c.l.b16 %v1168
        %v1330 = vunpack.c.l.b16 %v1169
        %v1331 = vunpack.c.h.b16 %v1169
        %v1332 = vunpack.c.l.b16 %v1170
        %v1333 = vunpack.c.l.b16 %v1171
        %v1334 = vunpack.c.h.b16 %v1171
        %v1335 = vunpack.c.l.b16 %v1172
        %v1336 = vunpack.c.l.b16 %v1173
        %v1337 = vunpack.c.h.b16 %v1173
        %v1338 = vunpack.c.l.b16 %v1174
        %v1339 = vunpack.c.l.b16 %v1175
        %v1340 = vunpack.c.h.b16 %v1175
        %v1341 = vunpack.c.l.b16 %v1176
        %v1342 = vunpack.c.l.b16 %v1177
        %v1343 = vunpack.c.h.b16 %v1177
        %v1344 = vunpack.c.l.b16 %v1178
        %v1345 = vunpack.c.l.b16 %v1179
        %v1346 = vunpack.c.h.b16 %v1179
        %v1347 = vunpack.c.l.b16 %v1180
        %v1348 = vunpack.c.l.b16 %v1181
        %v1349 = vunpack.c.h.b16 %v1181
        %v1350 = vunpack.c.l.b16 %v1182
        %v1351 = vunpack.c.l.b16 %v1183
        %v1352 = vunpack.c.h.b16 %v1183
        %v1353 = vunpack.c.l.b16 %v1184
        %v1354 = vunpack.c.l.b16 %v1185
        %v1355 = vunpack.c.h.b16 %v1185
        %v1356 = vunpack.c.l.b16 %v1186
        %v1357 = vunpack.c.l.b16 %v1187
        %v1358 = vunpack.c.h.b16 %v1187
        %v1359 = vunpack.c.l.b16 %v1188
        %v1360 = vunpack.c.l.b16 %v1189
        %v1361 = vunpack.c.h.b16 %v1189
        %v1362 = vunpack.c.l.b16 %v1190
        %v1363 = vunpack.c.l.b16 %v1191
        %v1364 = vunpack.c.h.b16 %v1191
        %v1365 = vunpack.c.l.b16 %v1192
        %v1366 = vunpack.c.l.b16 %v1193
        %v1367 = vunpack.c.h.b16 %v1193
        %v1368 = vunpack.c.l.b16 %v1194
        %v1369 = vunpack.c.l.b16 %v1195
        %v1370 = vunpack.c.h.b16 %v1195
        %v1371 = vunpack.c.l.b16 %v1196
        %v1372 = vunpack.c.l.b16 %v1197
        %v1373 = vunpack.c.h.b16 %v1197
        %v1374 = vunpack.c.l.b16 %v1198
        %v1375 = vunpack.c.l.b16 %v1199
        %v1376 = vunpack.c.h.b16 %v1199
        %v1377 = vunpack.c.l.b16 %v1200
        %v1378 = vunpack.c.l.b16 %v1201
        %v1379 = vunpack.c.h.b16 %v1201
        %v1380 = vunpack.c.l.b16 %v1202
        %v1381 = vunpack.c.l.b16 %v1203
        %v1382 = vunpack.c.h.b16 %v1203
        %v1383 = vunpack.c.l.b16 %v1204
        %v1384 = vunpack.c.l.b16 %v1205
        %v1385 = vunpack.c.h.b16 %v1205
        %v1386 = vunpack.c.l.b16 %v1206
        %v1387 = vunpack.c.l.b16 %v1207
        %v1388 = vunpack.c.h.b16 %v1207
        %v1389 = vunpack.c.l.b16 %v1208
        %v1390 = vunpack.c.l.b16 %v1209
        %v1391 = vunpack.c.h.b16 %v1209
        %v1392 = vunpack.c.l.b16 %v1210
        %v1393 = vunpack.c.l.b16 %v1211
        %v1394 = vunpack.c.h.b16 %v1211
        %v1395 = vunpack.c.l.b16 %v1212
        %v1396 = vunpack.c.l.b16 %v1213
        %v1397 = vunpack.c.h.b16 %v1213
        %v1398 = vunpack.c.l.b16 %v1214
        %v1399 = vunpack.c.l.b16 %v1215
        %v1400 = vunpack.c.h.b16 %v1215
        %v1401 = vunpack.c.l.b16 %v1216
        %v1402 = vunpack.c.l.b16 %v1217
        %v1403 = vunpack.c.h.b16 %v1217
        %v1404 = vunpack.c.l.b16 %v1218
        %v1405 = vunpack.c.l.b16 %v1219
        %v1406 = vunpack.c.h.b16 %v1219
        %v1407 = vunpack.c.l.b16 %v1220
        %v1408 = vunpack.c.l.b16 %v1221
        %v1409 = vunpack.c.h.b16 %v1221
        %v1410 = vunpack.c.l.b16 %v1222
        %v1411 = vunpack.c.l.b16 %v1223
        %v1412 = vunpack.c.h.b16 %v1223
        %v1413 = vunpack.c.l.b16 %v1224
        %v1414 = vunpack.c.l.b16 %v1225
        %v1415 = vunpack.c.h.b16 %v1225
        %v1416 = vunpack.c.l.b16 %v1226
        %v1417 = vunpack.c.l.b16 %v1227
        %v1418 = vunpack.c.h.b16 %v1227
        %v1419 = vunpack.c.l.b16 %v1228
        %v1420 = vunpack.c.l.b16 %v1229
        %v1421 = vunpack.c.h.b16 %v1229
        %v1422 = vunpack.c.l.b16 %v1230
        %v1423 = vunpack.c.l.b16 %v1231
        %v1424 = vunpack.c.h.b16 %v1231
        %v1425 = vunpack.c.l.b16 %v1232
        %v1426 = vunpack.c.l.b16 %v1233
        %v1427 = vunpack.c.h.b16 %v1233
        %v1428 = vunpack.c.l.b16 %v1234
        %v1429 = vunpack.c.l.b16 %v1235
        %v1430 = vunpack.c.h.b16 %v1235
        %v1431 = vunpack.c.l.b16 %v1236
        %v1432 = vpack.c.b16 %v1321, %v1318
        %v1433 = vpack.c.b16 %v1322, %v1319
        %v1434 = vpack.c.b16 %v1323, %v1320
        %v1435 = vpack.c.b16 %v1327, %v1324
        %v1436 = vpack.c.b16 %v1328, %v1325
        %v1437 = vpack.c.b16 %v1329, %v1326
        %v1438 = vpack.c.b16 %v1333, %v1330
        %v1439 = vpack.c.b16 %v1334, %v1331
        %v1440 = vpack.c.b16 %v1335, %v1332
        %v1441 = vpack.c.b16 %v1339, %v1336
        %v1442 = vpack.c.b16 %v1340, %v1337
        %v1443 = vpack.c.b16 %v1341, %v1338
        %v1444 = vpack.c.b16 %v1345, %v1342
        %v1445 = vpack.c.b16 %v1346, %v1343
        %v1446 = vpack.c.b16 %v1347, %v1344
        %v1447 = vpack.c.b16 %v1351, %v1348
        %v1448 = vpack.c.b16 %v1352, %v1349
        %v1449 = vpack.c.b16 %v1353, %v1350
        %v1450 = vpack.c.b16 %v1357, %v1354
        %v1451 = vpack.c.b16 %v1358, %v1355
        %v1452 = vpack.c.b16 %v1359, %v1356
        %v1453 = vpack.c.b16 %v1363, %v1360
        %v1454 = vpack.c.b16 %v1364, %v1361
        %v1455 = vpack.c.b16 %v1365, %v1362
        %v1456 = vpack.c.b16 %v1369, %v1366
        %v1457 = vpack.c.b16 %v1370, %v1367
        %v1458 = vpack.c.b16 %v1371, %v1368
        %v1459 = vpack.c.b16 %v1375, %v1372
        %v1460 = vpack.c.b16 %v1376, %v1373
        %v1461 = vpack.c.b16 %v1377, %v1374
        %v1462 = vpack.c.b16 %v1381, %v1378
        %v1463 = vpack.c.b16 %v1382, %v1379
        %v1464 = vpack.c.b16 %v1383, %v1380
        %v1465 = vpack.c.b16 %v1387, %v1384
        %v1466 = vpack.c.b16 %v1388, %v1385
        %v1467 = vpack.c.b16 %v1389, %v1386
        %v1468 = vpack.c.b16 %v1393, %v1390
        %v1469 = vpack.c.b16 %v1394, %v1391
        %v1470 = vpack.c.b16 %v1395, %v1392
        %v1471 = vpack.c.b16 %v1399, %v1396
        %v1472 = vpack.c.b16 %v1400, %v1397
        %v1473 = vpack.c.b16 %v1401, %v1398
        %v1474 = vpack.c.b16 %v1405, %v1402
        %v1475 = vpack.c.b16 %v1406, %v1403
        %v1476 = vpack.c.b16 %v1407, %v1404
        %v1477 = vpack.c.b16 %v1411, %v1408
        %v1478 = vpack.c.b16 %v1412, %v1409
        %v1479 = vpack.c.b16 %v1413, %v1410
        %v1480 = vpack.c.b16 %v1417, %v1414
        %v1481 = vpack.c.b16 %v1418, %v1415
        %v1482 = vpack.c.b16 %v1419, %v1416
        %v1483 = vpack.c.b16 %v1423, %v1420
        %v1484 = vpack.c.b16 %v1424, %v1421
        %v1485 = vpack.c.b16 %v1425, %v1422
        %v1486 = vpack.c.b16 %v1429, %v1426
        %v1487 = vpack.c.b16 %v1430, %v1427
        %v1488 = vpack.c.b16 %v1431, %v1428
        %v1544 = vsel %vm622, %v1139, 0
        %v1547 = vsel %vm622, %v1142, 0
        %v1550 = vsel %vm622, %v1145, 0
        %v1553 = vsel %vm622, %v1148, 0
        %v1556 = vsel %vm622, %v1151, 0
        %v1559 = vsel %vm622, %v1154, 0
        %v1562 = vsel %vm622, %v1157, 0
        %v1565 = vsel %vm622, %v1160, 0
        %vm1567 = vcmask 1045504
        %v1569 = vsel %vm1567, %v1486, 0
        %v1572 = vsel %vm1567, %v1487, 0
        %v1575 = vsel %vm1567, %v1488, 0
        %1577 = vmatprep.subr.bf16.mxu0 %v1433
        %1578 = vmatpush1.bf16.msra.mxu0 %v1432
        %1579 = vmatprep.subr.bf16.mxu0 %v1436
        %1580 = vmatpush1.bf16.msra.mxu0 %v1435
        %1581 = vmatprep.subr.bf16.mxu0 %v1439
        %1582 = vmatpush1.bf16.msra.mxu0 %v1438
        %1583 = vmatprep.subr.bf16.mxu0 %v1442
        %1584 = vmatpush1.bf16.msra.mxu0 %v1441
        %1585 = vmatprep.subr.bf16.mxu0 %v1445
        %1586 = vmatpush1.bf16.msra.mxu0 %v1444
        %1587 = vmatprep.subr.bf16.mxu0 %v1448
        %1588 = vmatpush1.bf16.msra.mxu0 %v1447
        %1589 = vmatprep.subr.bf16.mxu0 %v1451
        %1590 = vmatpush1.bf16.msra.mxu0 %v1450
        %1591 = vmatprep.subr.bf16.mxu0 %v1454
        %1592 = vmatpush1.bf16.msra.mxu0 %v1453
        %1593 = vmatprep.subr.bf16.mxu0 %v1457
        %1594 = vmatpush1.bf16.msra.mxu0 %v1456
        %1595 = vmatprep.subr.bf16.mxu0 %v1460
        %1596 = vmatpush1.bf16.msra.mxu0 %v1459
        %1597 = vmatprep.subr.bf16.mxu0 %v1463
        %1598 = vmatpush1.bf16.msra.mxu0 %v1462
        %1599 = vmatprep.subr.bf16.mxu0 %v1466
        %1600 = vmatpush1.bf16.msra.mxu0 %v1465
        %1601 = vmatprep.subr.bf16.mxu0 %v1469
        %1602 = vmatpush1.bf16.msra.mxu0 %v1468
        %1603 = vmatprep.subr.bf16.mxu0 %v1472
        %1604 = vmatpush1.bf16.msra.mxu0 %v1471
        %1605 = vmatprep.subr.bf16.mxu0 %v1475
        %1606 = vmatpush1.bf16.msra.mxu0 %v1474
        %1607 = vmatprep.subr.bf16.mxu0 %v1478
        %1608 = vmatpush1.bf16.msra.mxu0 %v1477
        %1609 = vmatprep.mubr.bf16.mxu0 %v1138
        %1610 = vmatmul.mubr.bf16.gmra.mrb[0].mxu0 %v1137
        %v1611 = vpop.f32.mrb[0].mxu0
        %v1612 = vadd.f32 0.0, %v1611
        %v1613 = vpop.f32.mrb[0].mxu0
        %v1614 = vadd.f32 0.0, %v1613
        %v1615 = vpop.f32.mrb[0].mxu0
        %v1616 = vadd.f32 0.0, %v1615
        %v1617 = vpop.f32.mrb[0].mxu0
        %v1618 = vadd.f32 0.0, %v1617
        %1619 = vmatprep.mubr.bf16.mxu0 %v1141
        %1620 = vmatmul.mubr.bf16.gmra.mrb[0].mxu0 %v1140
        %v1621 = vpop.f32.mrb[0].mxu0
        %v1622 = vadd.f32 0.0, %v1621
        %v1623 = vpop.f32.mrb[0].mxu0
        %v1624 = vadd.f32 0.0, %v1623
        %v1625 = vpop.f32.mrb[0].mxu0
        %v1626 = vadd.f32 0.0, %v1625
        %v1627 = vpop.f32.mrb[0].mxu0
        %v1628 = vadd.f32 0.0, %v1627
        %1629 = vmatprep.mubr.bf16.mxu0 %v1144
        %1630 = vmatmul.mubr.bf16.gmra.mrb[0].mxu0 %v1143
        %v1631 = vpop.f32.mrb[0].mxu0
        %v1632 = vadd.f32 0.0, %v1631
        %v1633 = vpop.f32.mrb[0].mxu0
        %v1634 = vadd.f32 0.0, %v1633
        %v1635 = vpop.f32.mrb[0].mxu0
        %v1636 = vadd.f32 0.0, %v1635
        %v1637 = vpop.f32.mrb[0].mxu0
        %v1638 = vadd.f32 0.0, %v1637
        %1639 = vmatprep.mubr.bf16.mxu0 %v1147
        %1640 = vmatmul.mubr.bf16.gmra.mrb[0].mxu0 %v1146
        %v1641 = vpop.f32.mrb[0].mxu0
        %v1642 = vadd.f32 0.0, %v1641
        %v1643 = vpop.f32.mrb[0].mxu0
        %v1644 = vadd.f32 0.0, %v1643
        %v1645 = vpop.f32.mrb[0].mxu0
        %v1646 = vadd.f32 0.0, %v1645
        %v1647 = vpop.f32.mrb[0].mxu0
        %v1648 = vadd.f32 0.0, %v1647
        %1649 = vmatprep.mubr.bf16.mxu0 %v1150
        %1650 = vmatmul.mubr.bf16.gmra.mrb[0].mxu0 %v1149
        %v1651 = vpop.f32.mrb[0].mxu0
        %v1652 = vadd.f32 0.0, %v1651
        %v1653 = vpop.f32.mrb[0].mxu0
        %v1654 = vadd.f32 0.0, %v1653
        %v1655 = vpop.f32.mrb[0].mxu0
        %v1656 = vadd.f32 0.0, %v1655
        %v1657 = vpop.f32.mrb[0].mxu0
        %v1658 = vadd.f32 0.0, %v1657
        %1659 = vmatprep.mubr.bf16.mxu0 %v1153
        %1660 = vmatmul.mubr.bf16.gmra.mrb[0].mxu0 %v1152
        %v1661 = vpop.f32.mrb[0].mxu0
        %v1662 = vadd.f32 0.0, %v1661
        %v1663 = vpop.f32.mrb[0].mxu0
        %v1664 = vadd.f32 0.0, %v1663
        %v1665 = vpop.f32.mrb[0].mxu0
        %v1666 = vadd.f32 0.0, %v1665
        %v1667 = vpop.f32.mrb[0].mxu0
        %v1668 = vadd.f32 0.0, %v1667
        %1669 = vmatprep.mubr.bf16.mxu0 %v1156
        %1670 = vmatmul.mubr.bf16.gmra.mrb[0].mxu0 %v1155
        %v1671 = vpop.f32.mrb[0].mxu0
        %v1672 = vadd.f32 0.0, %v1671
        %v1673 = vpop.f32.mrb[0].mxu0
        %v1674 = vadd.f32 0.0, %v1673
        %v1675 = vpop.f32.mrb[0].mxu0
        %v1676 = vadd.f32 0.0, %v1675
        %v1677 = vpop.f32.mrb[0].mxu0
        %v1678 = vadd.f32 0.0, %v1677
        %1679 = vmatprep.mubr.bf16.mxu0 %v1159
        %1680 = vmatmul.mubr.bf16.gmra.mrb[0].mxu0 %v1158
        %v1681 = vpop.f32.mrb[0].mxu0
        %v1682 = vadd.f32 0.0, %v1681
        %v1683 = vpop.f32.mrb[0].mxu0
        %v1684 = vadd.f32 0.0, %v1683
        %v1685 = vpop.f32.mrb[0].mxu0
        %v1686 = vadd.f32 0.0, %v1685
        %v1687 = vpop.f32.mrb[0].mxu0
        %v1688 = vadd.f32 0.0, %v1687
        %1689 = vdwg.mxu0
        %1690 = vmatprep.subr.bf16.mxu0 %v1481
        %1691 = vmatpush1.bf16.msra.mxu0 %v1480
        %1692 = vmatprep.subr.bf16.mxu0 %v1484
        %1693 = vmatpush1.bf16.msra.mxu0 %v1483
        %1694 = vmatprep.subr.bf16.mxu0 %v1572
        %1695 = vmatpush1.bf16.msra.mxu0 %v1569
        %1696 = vmatprep.subr.bf16.mxu0 0
        %1697 = vmatpush1.bf16.msra.mxu0 0
        %1698 = vmatprep.subr.bf16.mxu0 0
        %1699 = vmatpush1.bf16.msra.mxu0 0
        %1700 = vmatprep.subr.bf16.mxu0 0
        %1701 = vmatpush1.bf16.msra.mxu0 0
        %1702 = vmatprep.subr.bf16.mxu0 0
        %1703 = vmatpush1.bf16.msra.mxu0 0
        %1704 = vmatprep.subr.bf16.mxu0 0
        %1705 = vmatpush1.bf16.msra.mxu0 0
        %1706 = vmatprep.subr.bf16.mxu0 0
        %1707 = vmatpush1.bf16.msra.mxu0 0
        %1708 = vmatprep.subr.bf16.mxu0 0
        %1709 = vmatpush1.bf16.msra.mxu0 0
        %1710 = vmatprep.subr.bf16.mxu0 0
        %1711 = vmatpush1.bf16.msra.mxu0 0
        %1712 = vmatprep.subr.bf16.mxu0 0
        %1713 = vmatpush1.bf16.msra.mxu0 0
        %1714 = vmatprep.subr.bf16.mxu0 0
        %1715 = vmatpush1.bf16.msra.mxu0 0
        %1716 = vmatprep.subr.bf16.mxu0 0
        %1717 = vmatpush1.bf16.msra.mxu0 0
        %1718 = vmatprep.subr.bf16.mxu0 0
        %1719 = vmatpush1.bf16.msra.mxu0 0
        %1720 = vmatprep.subr.bf16.mxu0 0
        %1721 = vmatpush1.bf16.msra.mxu0 0
        %1722 = vmatprep.mubr.bf16.mxu0 0
        %1723 = vmatmul.mubr.bf16.gmra.mrb[0].mxu0 %v1544
        %v1724 = vpop.f32.mrb[0].mxu0
        %v1725 = vadd.f32 %v1612, %v1724
        %v1726 = vpop.f32.mrb[0].mxu0
        %v1727 = vadd.f32 %v1614, %v1726
        %v1728 = vpop.f32.mrb[0].mxu0
        %v1729 = vadd.f32 %v1616, %v1728
        %v1730 = vpop.f32.mrb[0].mxu0
        %v1731 = vadd.f32 %v1618, %v1730
        %1732 = vmatprep.mubr.bf16.mxu0 0
        %1733 = vmatmul.mubr.bf16.gmra.mrb[0].mxu0 %v1547
        %v1734 = vpop.f32.mrb[0].mxu0
        %v1735 = vadd.f32 %v1622, %v1734
        %v1736 = vpop.f32.mrb[0].mxu0
        %v1737 = vadd.f32 %v1624, %v1736
        %v1738 = vpop.f32.mrb[0].mxu0
        %v1739 = vadd.f32 %v1626, %v1738
        %v1740 = vpop.f32.mrb[0].mxu0
        %v1741 = vadd.f32 %v1628, %v1740
        %1742 = vmatprep.mubr.bf16.mxu0 0
        %1743 = vmatmul.mubr.bf16.gmra.mrb[0].mxu0 %v1550
        %v1744 = vpop.f32.mrb[0].mxu0
        %v1745 = vadd.f32 %v1632, %v1744
        %v1746 = vpop.f32.mrb[0].mxu0
        %v1747 = vadd.f32 %v1634, %v1746
        %v1748 = vpop.f32.mrb[0].mxu0
        %v1749 = vadd.f32 %v1636, %v1748
        %v1750 = vpop.f32.mrb[0].mxu0
        %v1751 = vadd.f32 %v1638, %v1750
        %1752 = vmatprep.mubr.bf16.mxu0 0
        %1753 = vmatmul.mubr.bf16.gmra.mrb[0].mxu0 %v1553
        %v1754 = vpop.f32.mrb[0].mxu0
        %v1755 = vadd.f32 %v1642, %v1754
        %v1756 = vpop.f32.mrb[0].mxu0
        %v1757 = vadd.f32 %v1644, %v1756
        %v1758 = vpop.f32.mrb[0].mxu0
        %v1759 = vadd.f32 %v1646, %v1758
        %v1760 = vpop.f32.mrb[0].mxu0
        %v1761 = vadd.f32 %v1648, %v1760
        %1762 = vmatprep.mubr.bf16.mxu0 0
        %1763 = vmatmul.mubr.bf16.gmra.mrb[0].mxu0 %v1556
        %v1764 = vpop.f32.mrb[0].mxu0
        %v1765 = vadd.f32 %v1652, %v1764
        %v1766 = vpop.f32.mrb[0].mxu0
        %v1767 = vadd.f32 %v1654, %v1766
        %v1768 = vpop.f32.mrb[0].mxu0
        %v1769 = vadd.f32 %v1656, %v1768
        %v1770 = vpop.f32.mrb[0].mxu0
        %v1771 = vadd.f32 %v1658, %v1770
        %1772 = vmatprep.mubr.bf16.mxu0 0
        %1773 = vmatmul.mubr.bf16.gmra.mrb[0].mxu0 %v1559
        %v1774 = vpop.f32.mrb[0].mxu0
        %v1775 = vadd.f32 %v1662, %v1774
        %v1776 = vpop.f32.mrb[0].mxu0
        %v1777 = vadd.f32 %v1664, %v1776
        %v1778 = vpop.f32.mrb[0].mxu0
        %v1779 = vadd.f32 %v1666, %v1778
        %v1780 = vpop.f32.mrb[0].mxu0
        %v1781 = vadd.f32 %v1668, %v1780
        %1782 = vmatprep.mubr.bf16.mxu0 0
        %1783 = vmatmul.mubr.bf16.gmra.mrb[0].mxu0 %v1562
        %v1784 = vpop.f32.mrb[0].mxu0
        %v1785 = vadd.f32 %v1672, %v1784
        %v1786 = vpop.f32.mrb[0].mxu0
        %v1787 = vadd.f32 %v1674, %v1786
        %v1788 = vpop.f32.mrb[0].mxu0
        %v1789 = vadd.f32 %v1676, %v1788
        %v1790 = vpop.f32.mrb[0].mxu0
        %v1791 = vadd.f32 %v1678, %v1790
        %1792 = vmatprep.mubr.bf16.mxu0 0
        %1793 = vmatmul.mubr.bf16.gmra.mrb[0].mxu0 %v1565
        %v1794 = vpop.f32.mrb[0].mxu0
        %v1795 = vadd.f32 %v1682, %v1794
        %v1796 = vpop.f32.mrb[0].mxu0
        %v1797 = vadd.f32 %v1684, %v1796
        %v1798 = vpop.f32.mrb[0].mxu0
        %v1799 = vadd.f32 %v1686, %v1798
        %v1800 = vpop.f32.mrb[0].mxu0
        %v1801 = vadd.f32 %v1688, %v1800
        %1802 = vdwg.mxu0
        %1803 = vmatprep.subr.bf16.mxu0 0
        %1804 = vmatpush1.bf16.msra.mxu0 %v1434
        %1805 = vmatprep.subr.bf16.mxu0 0
        %1806 = vmatpush1.bf16.msra.mxu0 %v1437
        %1807 = vmatprep.subr.bf16.mxu0 0
        %1808 = vmatpush1.bf16.msra.mxu0 %v1440
        %1809 = vmatprep.subr.bf16.mxu0 0
        %1810 = vmatpush1.bf16.msra.mxu0 %v1443
        %1811 = vmatprep.subr.bf16.mxu0 0
        %1812 = vmatpush1.bf16.msra.mxu0 %v1446
        %1813 = vmatprep.subr.bf16.mxu0 0
        %1814 = vmatpush1.bf16.msra.mxu0 %v1449
        %1815 = vmatprep.subr.bf16.mxu0 0
        %1816 = vmatpush1.bf16.msra.mxu0 %v1452
        %1817 = vmatprep.subr.bf16.mxu0 0
        %1818 = vmatpush1.bf16.msra.mxu0 %v1455
        %1819 = vmatprep.subr.bf16.mxu0 0
        %1820 = vmatpush1.bf16.msra.mxu0 %v1458
        %1821 = vmatprep.subr.bf16.mxu0 0
        %1822 = vmatpush1.bf16.msra.mxu0 %v1461
        %1823 = vmatprep.subr.bf16.mxu0 0
        %1824 = vmatpush1.bf16.msra.mxu0 %v1464
        %1825 = vmatprep.subr.bf16.mxu0 0
        %1826 = vmatpush1.bf16.msra.mxu0 %v1467
        %1827 = vmatprep.subr.bf16.mxu0 0
        %1828 = vmatpush1.bf16.msra.mxu0 %v1470
        %1829 = vmatprep.subr.bf16.mxu0 0
        %1830 = vmatpush1.bf16.msra.mxu0 %v1473
        %1831 = vmatprep.subr.bf16.mxu0 0
        %1832 = vmatpush1.bf16.msra.mxu0 %v1476
        %1833 = vmatprep.subr.bf16.mxu0 0
        %1834 = vmatpush1.bf16.msra.mxu0 %v1479
        %1835 = vmatprep.mubr.bf16.mxu0 %v1138
        %1836 = vmatmul.mubr.bf16.gmra.mrb[0].mxu0 %v1137
        %v1837 = vpop.f32.mrb[0].mxu0
        %v1838 = vadd.f32 0.0, %v1837
        %v1839 = vpop.f32.mrb[0].mxu0
        %v1840 = vpop.f32.mrb[0].mxu0
        %v1841 = vadd.f32 0.0, %v1840
        %v1842 = vpop.f32.mrb[0].mxu0
        %1843 = vmatprep.mubr.bf16.mxu0 %v1141
        %1844 = vmatmul.mubr.bf16.gmra.mrb[0].mxu0 %v1140
        %v1845 = vpop.f32.mrb[0].mxu0
        %v1846 = vadd.f32 0.0, %v1845
        %v1847 = vpop.f32.mrb[0].mxu0
        %v1848 = vpop.f32.mrb[0].mxu0
        %v1849 = vadd.f32 0.0, %v1848
        %v1850 = vpop.f32.mrb[0].mxu0
        %1851 = vmatprep.mubr.bf16.mxu0 %v1144
        %1852 = vmatmul.mubr.bf16.gmra.mrb[0].mxu0 %v1143
        %v1853 = vpop.f32.mrb[0].mxu0
        %v1854 = vadd.f32 0.0, %v1853
        %v1855 = vpop.f32.mrb[0].mxu0
        %v1856 = vpop.f32.mrb[0].mxu0
        %v1857 = vadd.f32 0.0, %v1856
        %v1858 = vpop.f32.mrb[0].mxu0
        %1859 = vmatprep.mubr.bf16.mxu0 %v1147
        %1860 = vmatmul.mubr.bf16.gmra.mrb[0].mxu0 %v1146
        %v1861 = vpop.f32.mrb[0].mxu0
        %v1862 = vadd.f32 0.0, %v1861
        %v1863 = vpop.f32.mrb[0].mxu0
        %v1864 = vpop.f32.mrb[0].mxu0
        %v1865 = vadd.f32 0.0, %v1864
        %v1866 = vpop.f32.mrb[0].mxu0
        %1867 = vmatprep.mubr.bf16.mxu0 %v1150
        %1868 = vmatmul.mubr.bf16.gmra.mrb[0].mxu0 %v1149
        %v1869 = vpop.f32.mrb[0].mxu0
        %v1870 = vadd.f32 0.0, %v1869
        %v1871 = vpop.f32.mrb[0].mxu0
        %v1872 = vpop.f32.mrb[0].mxu0
        %v1873 = vadd.f32 0.0, %v1872
        %v1874 = vpop.f32.mrb[0].mxu0
        %1875 = vmatprep.mubr.bf16.mxu0 %v1153
        %1876 = vmatmul.mubr.bf16.gmra.mrb[0].mxu0 %v1152
        %v1877 = vpop.f32.mrb[0].mxu0
        %v1878 = vadd.f32 0.0, %v1877
        %v1879 = vpop.f32.mrb[0].mxu0
        %v1880 = vpop.f32.mrb[0].mxu0
        %v1881 = vadd.f32 0.0, %v1880
        %v1882 = vpop.f32.mrb[0].mxu0
        %1883 = vmatprep.mubr.bf16.mxu0 %v1156
        %1884 = vmatmul.mubr.bf16.gmra.mrb[0].mxu0 %v1155
        %v1885 = vpop.f32.mrb[0].mxu0
        %v1886 = vadd.f32 0.0, %v1885
        %v1887 = vpop.f32.mrb[0].mxu0
        %v1888 = vpop.f32.mrb[0].mxu0
        %v1889 = vadd.f32 0.0, %v1888
        %v1890 = vpop.f32.mrb[0].mxu0
        %1891 = vmatprep.mubr.bf16.mxu0 %v1159
        %1892 = vmatmul.mubr.bf16.gmra.mrb[0].mxu0 %v1158
        %v1893 = vpop.f32.mrb[0].mxu0
        %v1894 = vadd.f32 0.0, %v1893
        %v1895 = vpop.f32.mrb[0].mxu0
        %v1896 = vpop.f32.mrb[0].mxu0
        %v1897 = vadd.f32 0.0, %v1896
        %v1898 = vpop.f32.mrb[0].mxu0
        %1899 = vdwg.mxu0
        %1900 = vmatprep.subr.bf16.mxu0 0
        %1901 = vmatpush1.bf16.msra.mxu0 %v1482
        %1902 = vmatprep.subr.bf16.mxu0 0
        %1903 = vmatpush1.bf16.msra.mxu0 %v1485
        %1904 = vmatprep.subr.bf16.mxu0 0
        %1905 = vmatpush1.bf16.msra.mxu0 %v1575
        %1906 = vmatprep.subr.bf16.mxu0 0
        %1907 = vmatpush1.bf16.msra.mxu0 0
        %1908 = vmatprep.subr.bf16.mxu0 0
        %1909 = vmatpush1.bf16.msra.mxu0 0
        %1910 = vmatprep.subr.bf16.mxu0 0
        %1911 = vmatpush1.bf16.msra.mxu0 0
        %1912 = vmatprep.subr.bf16.mxu0 0
        %1913 = vmatpush1.bf16.msra.mxu0 0
        %1914 = vmatprep.subr.bf16.mxu0 0
        %1915 = vmatpush1.bf16.msra.mxu0 0
        %1916 = vmatprep.subr.bf16.mxu0 0
        %1917 = vmatpush1.bf16.msra.mxu0 0
        %1918 = vmatprep.subr.bf16.mxu0 0
        %1919 = vmatpush1.bf16.msra.mxu0 0
        %1920 = vmatprep.subr.bf16.mxu0 0
        %1921 = vmatpush1.bf16.msra.mxu0 0
        %1922 = vmatprep.subr.bf16.mxu0 0
        %1923 = vmatpush1.bf16.msra.mxu0 0
        %1924 = vmatprep.subr.bf16.mxu0 0
        %1925 = vmatpush1.bf16.msra.mxu0 0
        %1926 = vmatprep.subr.bf16.mxu0 0
        %1927 = vmatpush1.bf16.msra.mxu0 0
        %1928 = vmatprep.subr.bf16.mxu0 0
        %1929 = vmatpush1.bf16.msra.mxu0 0
        %1930 = vmatprep.subr.bf16.mxu0 0
        %1931 = vmatpush1.bf16.msra.mxu0 0
        %1932 = vmatprep.mubr.bf16.mxu0 0
        %1933 = vmatmul.mubr.bf16.gmra.mrb[0].mxu0 %v1544
        %v1934 = vpop.f32.mrb[0].mxu0
        %v1935 = vadd.f32 %v1838, %v1934
        %v1936 = vpop.f32.mrb[0].mxu0
        %v1937 = vpop.f32.mrb[0].mxu0
        %v1938 = vadd.f32 %v1841, %v1937
        %v1939 = vpop.f32.mrb[0].mxu0
        %1940 = vmatprep.mubr.bf16.mxu0 0
        %1941 = vmatmul.mubr.bf16.gmra.mrb[0].mxu0 %v1547
        %v1942 = vpop.f32.mrb[0].mxu0
        %v1943 = vadd.f32 %v1846, %v1942
        %v1944 = vpop.f32.mrb[0].mxu0
        %v1945 = vpop.f32.mrb[0].mxu0
        %v1946 = vadd.f32 %v1849, %v1945
        %v1947 = vpop.f32.mrb[0].mxu0
        %1948 = vmatprep.mubr.bf16.mxu0 0
        %1949 = vmatmul.mubr.bf16.gmra.mrb[0].mxu0 %v1550
        %v1950 = vpop.f32.mrb[0].mxu0
        %v1951 = vadd.f32 %v1854, %v1950
        %v1952 = vpop.f32.mrb[0].mxu0
        %v1953 = vpop.f32.mrb[0].mxu0
        %v1954 = vadd.f32 %v1857, %v1953
        %v1955 = vpop.f32.mrb[0].mxu0
        %1956 = vmatprep.mubr.bf16.mxu0 0
        %1957 = vmatmul.mubr.bf16.gmra.mrb[0].mxu0 %v1553
        %v1958 = vpop.f32.mrb[0].mxu0
        %v1959 = vadd.f32 %v1862, %v1958
        %v1960 = vpop.f32.mrb[0].mxu0
        %v1961 = vpop.f32.mrb[0].mxu0
        %v1962 = vadd.f32 %v1865, %v1961
        %v1963 = vpop.f32.mrb[0].mxu0
        %1964 = vmatprep.mubr.bf16.mxu0 0
        %1965 = vmatmul.mubr.bf16.gmra.mrb[0].mxu0 %v1556
        %v1966 = vpop.f32.mrb[0].mxu0
        %v1967 = vadd.f32 %v1870, %v1966
        %v1968 = vpop.f32.mrb[0].mxu0
        %v1969 = vpop.f32.mrb[0].mxu0
        %v1970 = vadd.f32 %v1873, %v1969
        %v1971 = vpop.f32.mrb[0].mxu0
        %1972 = vmatprep.mubr.bf16.mxu0 0
        %1973 = vmatmul.mubr.bf16.gmra.mrb[0].mxu0 %v1559
        %v1974 = vpop.f32.mrb[0].mxu0
        %v1975 = vadd.f32 %v1878, %v1974
        %v1976 = vpop.f32.mrb[0].mxu0
        %v1977 = vpop.f32.mrb[0].mxu0
        %v1978 = vadd.f32 %v1881, %v1977
        %v1979 = vpop.f32.mrb[0].mxu0
        %1980 = vmatprep.mubr.bf16.mxu0 0
        %1981 = vmatmul.mubr.bf16.gmra.mrb[0].mxu0 %v1562
        %v1982 = vpop.f32.mrb[0].mxu0
        %v1983 = vadd.f32 %v1886, %v1982
        %v1984 = vpop.f32.mrb[0].mxu0
        %v1985 = vpop.f32.mrb[0].mxu0
        %v1986 = vadd.f32 %v1889, %v1985
        %v1987 = vpop.f32.mrb[0].mxu0
        %1988 = vmatprep.mubr.bf16.mxu0 0
        %1989 = vmatmul.mubr.bf16.gmra.mrb[0].mxu0 %v1565
        %v1990 = vpop.f32.mrb[0].mxu0
        %v1991 = vadd.f32 %v1894, %v1990
        %v1992 = vpop.f32.mrb[0].mxu0
        %v1993 = vpop.f32.mrb[0].mxu0
        %v1994 = vadd.f32 %v1897, %v1993
        %v1995 = vpop.f32.mrb[0].mxu0
        %1996 = vdwg.mxu0
        %v1997 = vadd.f32 %v1725, %v1729
        %v1998 = vadd.f32 %v1997, %v1735
        %v1999 = vadd.f32 %v1998, %v1739
        %v2000 = vadd.f32 %v1999, %v1745
        %v2001 = vadd.f32 %v2000, %v1749
        %v2002 = vadd.f32 %v2001, %v1755
        %v2003 = vadd.f32 %v2002, %v1759
        %v2004 = vadd.f32 %v2003, %v1765
        %v2005 = vadd.f32 %v2004, %v1769
        %v2006 = vadd.f32 %v2005, %v1775
        %v2007 = vadd.f32 %v2006, %v1779
        %v2008 = vadd.f32 %v2007, %v1785
        %v2009 = vadd.f32 %v2008, %v1789
        %v2010 = vadd.f32 %v2009, %v1795
        %v2011 = vadd.f32 %v2010, %v1799
        %v2012 = vrot.slane %v2011, 4
        %v2013 = vadd.f32 %v2011, %v2012
        %v2014 = vrot.slane %v2013, 2
        %v2015 = vadd.f32 %v2013, %v2014
        %v2016 = vrot.slane %v2015, 1
        %v2017 = vadd.f32 %v2015, %v2016
        %v2018 = vadd.f32 %v1727, %v1731
        %v2019 = vadd.f32 %v2018, %v1737
        %v2020 = vadd.f32 %v2019, %v1741
        %v2021 = vadd.f32 %v2020, %v1747
        %v2022 = vadd.f32 %v2021, %v1751
        %v2023 = vadd.f32 %v2022, %v1757
        %v2024 = vadd.f32 %v2023, %v1761
        %v2025 = vadd.f32 %v2024, %v1767
        %v2026 = vadd.f32 %v2025, %v1771
        %v2027 = vadd.f32 %v2026, %v1777
        %v2028 = vadd.f32 %v2027, %v1781
        %v2029 = vadd.f32 %v2028, %v1787
        %v2030 = vadd.f32 %v2029, %v1791
        %v2031 = vadd.f32 %v2030, %v1797
        %v2032 = vadd.f32 %v2031, %v1801
        %v2033 = vrot.slane %v2032, 4
        %v2034 = vadd.f32 %v2032, %v2033
        %v2035 = vrot.slane %v2034, 2
        %v2036 = vadd.f32 %v2034, %v2035
        %v2037 = vrot.slane %v2036, 1
        %v2038 = vadd.f32 %v2036, %v2037
        %v2039 = vsel %vm622, %v1935, 0.0
        %v2040 = vsel %vm622, %v1938, 0.0
        %v2041 = vadd.f32 %v2039, %v2040
        %v2042 = vsel %vm622, %v1943, 0.0
        %v2043 = vadd.f32 %v2041, %v2042
        %v2044 = vsel %vm622, %v1946, 0.0
        %v2045 = vadd.f32 %v2043, %v2044
        %v2046 = vsel %vm622, %v1951, 0.0
        %v2047 = vadd.f32 %v2045, %v2046
        %v2048 = vsel %vm622, %v1954, 0.0
        %v2049 = vadd.f32 %v2047, %v2048
        %v2050 = vsel %vm622, %v1959, 0.0
        %v2051 = vadd.f32 %v2049, %v2050
        %v2052 = vsel %vm622, %v1962, 0.0
        %v2053 = vadd.f32 %v2051, %v2052
        %v2054 = vsel %vm622, %v1967, 0.0
        %v2055 = vadd.f32 %v2053, %v2054
        %v2056 = vsel %vm622, %v1970, 0.0
        %v2057 = vadd.f32 %v2055, %v2056
        %v2058 = vsel %vm622, %v1975, 0.0
        %v2059 = vadd.f32 %v2057, %v2058
        %v2060 = vsel %vm622, %v1978, 0.0
        %v2061 = vadd.f32 %v2059, %v2060
        %v2062 = vsel %vm622, %v1983, 0.0
        %v2063 = vadd.f32 %v2061, %v2062
        %v2064 = vsel %vm622, %v1986, 0.0
        %v2065 = vadd.f32 %v2063, %v2064
        %v2066 = vsel %vm622, %v1991, 0.0
        %v2067 = vadd.f32 %v2065, %v2066
        %v2068 = vsel %vm622, %v1994, 0.0
        %v2069 = vadd.f32 %v2067, %v2068
        %v2070 = vrot.slane %v2069, 4
        %v2071 = vadd.f32 %v2069, %v2070
        %v2072 = vrot.slane %v2071, 2
        %v2073 = vadd.f32 %v2071, %v2072
        %v2074 = vrot.slane %v2073, 1
        %v2075 = vadd.f32 %v2073, %v2074
        %v2076 = vmul.f32 %v2017, 0.0078125
        %v2077 = vmul.f32 %v2038, 0.0078125
        %v2078 = vmul.f32 %v2075, 0.0078125
        %v2079 = vmul.f32 %v1725, %v1725
        %v2080 = vmul.f32 %v1727, %v1727
        %v2081 = vmul.f32 %v1935, %v1935
        %v2082 = vmul.f32 %v1729, %v1729
        %v2083 = vmul.f32 %v1731, %v1731
        %v2084 = vmul.f32 %v1938, %v1938
        %v2085 = vmul.f32 %v1735, %v1735
        %v2086 = vmul.f32 %v1737, %v1737
        %v2087 = vmul.f32 %v1943, %v1943
        %v2088 = vmul.f32 %v1739, %v1739
        %v2089 = vmul.f32 %v1741, %v1741
        %v2090 = vmul.f32 %v1946, %v1946
        %v2091 = vmul.f32 %v1745, %v1745
        %v2092 = vmul.f32 %v1747, %v1747
        %v2093 = vmul.f32 %v1951, %v1951
        %v2094 = vmul.f32 %v1749, %v1749
        %v2095 = vmul.f32 %v1751, %v1751
        %v2096 = vmul.f32 %v1954, %v1954
        %v2097 = vmul.f32 %v1755, %v1755
        %v2098 = vmul.f32 %v1757, %v1757
        %v2099 = vmul.f32 %v1959, %v1959
        %v2100 = vmul.f32 %v1759, %v1759
        %v2101 = vmul.f32 %v1761, %v1761
        %v2102 = vmul.f32 %v1962, %v1962
        %v2103 = vmul.f32 %v1765, %v1765
        %v2104 = vmul.f32 %v1767, %v1767
        %v2105 = vmul.f32 %v1967, %v1967
        %v2106 = vmul.f32 %v1769, %v1769
        %v2107 = vmul.f32 %v1771, %v1771
        %v2108 = vmul.f32 %v1970, %v1970
        %v2109 = vmul.f32 %v1775, %v1775
        %v2110 = vmul.f32 %v1777, %v1777
        %v2111 = vmul.f32 %v1975, %v1975
        %v2112 = vmul.f32 %v1779, %v1779
        %v2113 = vmul.f32 %v1781, %v1781
        %v2114 = vmul.f32 %v1978, %v1978
        %v2115 = vmul.f32 %v1785, %v1785
        %v2116 = vmul.f32 %v1787, %v1787
        %v2117 = vmul.f32 %v1983, %v1983
        %v2118 = vmul.f32 %v1789, %v1789
        %v2119 = vmul.f32 %v1791, %v1791
        %v2120 = vmul.f32 %v1986, %v1986
        %v2121 = vmul.f32 %v1795, %v1795
        %v2122 = vmul.f32 %v1797, %v1797
        %v2123 = vmul.f32 %v1991, %v1991
        %v2124 = vmul.f32 %v1799, %v1799
        %v2125 = vmul.f32 %v1801, %v1801
        %v2126 = vmul.f32 %v1994, %v1994
        %v2127 = vadd.f32 %v2079, %v2082
        %v2128 = vadd.f32 %v2127, %v2085
        %v2129 = vadd.f32 %v2128, %v2088
        %v2130 = vadd.f32 %v2129, %v2091
        %v2131 = vadd.f32 %v2130, %v2094
        %v2132 = vadd.f32 %v2131, %v2097
        %v2133 = vadd.f32 %v2132, %v2100
        %v2134 = vadd.f32 %v2133, %v2103
        %v2135 = vadd.f32 %v2134, %v2106
        %v2136 = vadd.f32 %v2135, %v2109
        %v2137 = vadd.f32 %v2136, %v2112
        %v2138 = vadd.f32 %v2137, %v2115
        %v2139 = vadd.f32 %v2138, %v2118
        %v2140 = vadd.f32 %v2139, %v2121
        %v2141 = vadd.f32 %v2140, %v2124
        %v2142 = vrot.slane %v2141, 4
        %v2143 = vadd.f32 %v2141, %v2142
        %v2144 = vrot.slane %v2143, 2
        %v2145 = vadd.f32 %v2143, %v2144
        %v2146 = vrot.slane %v2145, 1
        %v2147 = vadd.f32 %v2145, %v2146
        %v2148 = vadd.f32 %v2080, %v2083
        %v2149 = vadd.f32 %v2148, %v2086
        %v2150 = vadd.f32 %v2149, %v2089
        %v2151 = vadd.f32 %v2150, %v2092
        %v2152 = vadd.f32 %v2151, %v2095
        %v2153 = vadd.f32 %v2152, %v2098
        %v2154 = vadd.f32 %v2153, %v2101
        %v2155 = vadd.f32 %v2154, %v2104
        %v2156 = vadd.f32 %v2155, %v2107
        %v2157 = vadd.f32 %v2156, %v2110
        %v2158 = vadd.f32 %v2157, %v2113
        %v2159 = vadd.f32 %v2158, %v2116
        %v2160 = vadd.f32 %v2159, %v2119
        %v2161 = vadd.f32 %v2160, %v2122
        %v2162 = vadd.f32 %v2161, %v2125
        %v2163 = vrot.slane %v2162, 4
        %v2164 = vadd.f32 %v2162, %v2163
        %v2165 = vrot.slane %v2164, 2
        %v2166 = vadd.f32 %v2164, %v2165
        %v2167 = vrot.slane %v2166, 1
        %v2168 = vadd.f32 %v2166, %v2167
        %v2169 = vsel %vm622, %v2081, 0.0
        %v2170 = vsel %vm622, %v2084, 0.0
        %v2171 = vadd.f32 %v2169, %v2170
        %v2172 = vsel %vm622, %v2087, 0.0
        %v2173 = vadd.f32 %v2171, %v2172
        %v2174 = vsel %vm622, %v2090, 0.0
        %v2175 = vadd.f32 %v2173, %v2174
        %v2176 = vsel %vm622, %v2093, 0.0
        %v2177 = vadd.f32 %v2175, %v2176
        %v2178 = vsel %vm622, %v2096, 0.0
        %v2179 = vadd.f32 %v2177, %v2178
        %v2180 = vsel %vm622, %v2099, 0.0
        %v2181 = vadd.f32 %v2179, %v2180
        %v2182 = vsel %vm622, %v2102, 0.0
        %v2183 = vadd.f32 %v2181, %v2182
        %v2184 = vsel %vm622, %v2105, 0.0
        %v2185 = vadd.f32 %v2183, %v2184
        %v2186 = vsel %vm622, %v2108, 0.0
        %v2187 = vadd.f32 %v2185, %v2186
        %v2188 = vsel %vm622, %v2111, 0.0
        %v2189 = vadd.f32 %v2187, %v2188
        %v2190 = vsel %vm622, %v2114, 0.0
        %v2191 = vadd.f32 %v2189, %v2190
        %v2192 = vsel %vm622, %v2117, 0.0
        %v2193 = vadd.f32 %v2191, %v2192
        %v2194 = vsel %vm622, %v2120, 0.0
        %v2195 = vadd.f32 %v2193, %v2194
        %v2196 = vsel %vm622, %v2123, 0.0
        %v2197 = vadd.f32 %v2195, %v2196
        %v2198 = vsel %vm622, %v2126, 0.0
        %v2199 = vadd.f32 %v2197, %v2198
        %v2200 = vrot.slane %v2199, 4
        %v2201 = vadd.f32 %v2199, %v2200
        %v2202 = vrot.slane %v2201, 2
        %v2203 = vadd.f32 %v2201, %v2202
        %v2204 = vrot.slane %v2203, 1
        %v2205 = vadd.f32 %v2203, %v2204
        %v2206 = vmul.f32 %v2147, 0.0078125
        %v2207 = vmul.f32 %v2168, 0.0078125
        %v2208 = vmul.f32 %v2205, 0.0078125
        %v2209 = vmul.f32 %v2076, %v2076
        %v2210 = vmul.f32 %v2077, %v2077
        %v2211 = vmul.f32 %v2078, %v2078
        %v2212 = vsub.f32 %v2206, %v2209
        %v2213 = vsub.f32 %v2207, %v2210
        %v2214 = vsub.f32 %v2208, %v2211
        %v2215 = vadd.f32 %v2212, 1e-05
        %v2216 = vadd.f32 %v2213, 1e-05
        %v2217 = vadd.f32 %v2214, 1e-05
        %v2218 = vrsqrt.pop %v2215
        %v2219 = vrsqrt.pop %v2216
        %v2220 = vrsqrt.pop %v2217
        %v2224 = vcombine.low %v2218, %v2219
        %v2226 = vunpack.c.l.s4 1966171168
        %v2227 = vunpack.c.0.s8 %v2226
        %v2228 = vlaneseq
        %v2229 = vshrl.u32 %v2228, 7
        %v2230 = vsub.s32 %v2227, %v2229
        %v2231 = vrot.slane %v2224, %v2230
        %v2233 = vunpack.c.l.s4 1966171168
        %v2234 = vunpack.c.0.s8 %v2233
        %v2235 = vlaneseq
        %v2236 = vshrl.u32 %v2235, 7
        %v2237 = vsub.s32 %v2234, %v2236
        %v2238 = vrot.slane %v2220, %v2237
        %v2239 = vcombine.low %v2231, %v2238
        %v2241 = vunpack.c.l.s4 1966171168
        %v2242 = vunpack.c.0.s8 %v2241
        %v2243 = vlaneseq
        %v2244 = vshrl.u32 %v2243, 7
        %v2245 = vsub.s32 %v2242, %v2244
        %v2246 = vrot.slane %v2239, %v2245
        %v2248 = vmul.f32 %v1238, %v2246
        %v2250 = vlaneseq
        %v2251 = vshrl.u32 %v2250, 7
        %v2252 = vsub.s32 0, %v2251
        %v2253 = vrot.slane %v2248, %v2252
        %v2254 = vlaneseq
        %v2255 = vshrl.u32 %v2254, 7
        %v2256 = vsub.s32 1, %v2255
        %v2257 = vrot.slane %v2248, %v2256
        %v2258 = vlaneseq
        %v2259 = vshrl.u32 %v2258, 7
        %v2260 = vsub.s32 2, %v2259
        %v2261 = vrot.slane %v2248, %v2260
        %v2265 = vmul.f32 %v2076, %v2253
        %v2266 = vmul.f32 %v2077, %v2257
        %v2267 = vmul.f32 %v2078, %v2261
        %v2271 = vcombine.low %v2265, %v2266
        %v2273 = vunpack.c.l.s4 1966171168
        %v2274 = vunpack.c.0.s8 %v2273
        %v2275 = vlaneseq
        %v2276 = vshrl.u32 %v2275, 7
        %v2277 = vsub.s32 %v2274, %v2276
        %v2278 = vrot.slane %v2271, %v2277
        %v2280 = vunpack.c.l.s4 1966171168
        %v2281 = vunpack.c.0.s8 %v2280
        %v2282 = vlaneseq
        %v2283 = vshrl.u32 %v2282, 7
        %v2284 = vsub.s32 %v2281, %v2283
        %v2285 = vrot.slane %v2267, %v2284
        %v2286 = vcombine.low %v2278, %v2285
        %v2288 = vunpack.c.l.s4 1966171168
        %v2289 = vunpack.c.0.s8 %v2288
        %v2290 = vlaneseq
        %v2291 = vshrl.u32 %v2290, 7
        %v2292 = vsub.s32 %v2289, %v2291
        %v2293 = vrot.slane %v2286, %v2292
        %v2295 = vsub.f32 %v1240, %v2293
        %v2296 = vmul.f32 %v1725, %v2253
        %v2297 = vmul.f32 %v1727, %v2257
        %v2298 = vmul.f32 %v1935, %v2261
        %v2299 = vmul.f32 %v1729, %v2253
        %v2300 = vmul.f32 %v1731, %v2257
        %v2301 = vmul.f32 %v1938, %v2261
        %v2302 = vmul.f32 %v1735, %v2253
        %v2303 = vmul.f32 %v1737, %v2257
        %v2304 = vmul.f32 %v1943, %v2261
        %v2305 = vmul.f32 %v1739, %v2253
        %v2306 = vmul.f32 %v1741, %v2257
        %v2307 = vmul.f32 %v1946, %v2261
        %v2308 = vmul.f32 %v1745, %v2253
        %v2309 = vmul.f32 %v1747, %v2257
        %v2310 = vmul.f32 %v1951, %v2261
        %v2311 = vmul.f32 %v1749, %v2253
        %v2312 = vmul.f32 %v1751, %v2257
        %v2313 = vmul.f32 %v1954, %v2261
        %v2314 = vmul.f32 %v1755, %v2253
        %v2315 = vmul.f32 %v1757, %v2257
        %v2316 = vmul.f32 %v1959, %v2261
        %v2317 = vmul.f32 %v1759, %v2253
        %v2318 = vmul.f32 %v1761, %v2257
        %v2319 = vmul.f32 %v1962, %v2261
        %v2320 = vmul.f32 %v1765, %v2253
        %v2321 = vmul.f32 %v1767, %v2257
        %v2322 = vmul.f32 %v1967, %v2261
        %v2323 = vmul.f32 %v1769, %v2253
        %v2324 = vmul.f32 %v1771, %v2257
        %v2325 = vmul.f32 %v1970, %v2261
        %v2326 = vmul.f32 %v1775, %v2253
        %v2327 = vmul.f32 %v1777, %v2257
        %v2328 = vmul.f32 %v1975, %v2261
        %v2329 = vmul.f32 %v1779, %v2253
        %v2330 = vmul.f32 %v1781, %v2257
        %v2331 = vmul.f32 %v1978, %v2261
        %v2332 = vmul.f32 %v1785, %v2253
        %v2333 = vmul.f32 %v1787, %v2257
        %v2334 = vmul.f32 %v1983, %v2261
        %v2335 = vmul.f32 %v1789, %v2253
        %v2336 = vmul.f32 %v1791, %v2257
        %v2337 = vmul.f32 %v1986, %v2261
        %v2338 = vmul.f32 %v1795, %v2253
        %v2339 = vmul.f32 %v1797, %v2257
        %v2340 = vmul.f32 %v1991, %v2261
        %v2341 = vmul.f32 %v1799, %v2253
        %v2342 = vmul.f32 %v1801, %v2257
        %v2343 = vmul.f32 %v1994, %v2261
        %v2345 = vlaneseq
        %v2346 = vshrl.u32 %v2345, 7
        %v2347 = vsub.s32 0, %v2346
        %v2348 = vrot.slane %v2295, %v2347
        %v2349 = vlaneseq
        %v2350 = vshrl.u32 %v2349, 7
        %v2351 = vsub.s32 1, %v2350
        %v2352 = vrot.slane %v2295, %v2351
        %v2353 = vlaneseq
        %v2354 = vshrl.u32 %v2353, 7
        %v2355 = vsub.s32 2, %v2354
        %v2356 = vrot.slane %v2295, %v2355
        %v2360 = vadd.f32 %v2296, %v2348
        %v2361 = vadd.f32 %v2297, %v2352
        %v2362 = vadd.f32 %v2298, %v2356
        %v2363 = vadd.f32 %v2299, %v2348
        %v2364 = vadd.f32 %v2300, %v2352
        %v2365 = vadd.f32 %v2301, %v2356
        %v2366 = vadd.f32 %v2302, %v2348
        %v2367 = vadd.f32 %v2303, %v2352
        %v2368 = vadd.f32 %v2304, %v2356
        %v2369 = vadd.f32 %v2305, %v2348
        %v2370 = vadd.f32 %v2306, %v2352
        %v2371 = vadd.f32 %v2307, %v2356
        %v2372 = vadd.f32 %v2308, %v2348
        %v2373 = vadd.f32 %v2309, %v2352
        %v2374 = vadd.f32 %v2310, %v2356
        %v2375 = vadd.f32 %v2311, %v2348
        %v2376 = vadd.f32 %v2312, %v2352
        %v2377 = vadd.f32 %v2313, %v2356
        %v2378 = vadd.f32 %v2314, %v2348
        %v2379 = vadd.f32 %v2315, %v2352
        %v2380 = vadd.f32 %v2316, %v2356
        %v2381 = vadd.f32 %v2317, %v2348
        %v2382 = vadd.f32 %v2318, %v2352
        %v2383 = vadd.f32 %v2319, %v2356
        %v2384 = vadd.f32 %v2320, %v2348
        %v2385 = vadd.f32 %v2321, %v2352
        %v2386 = vadd.f32 %v2322, %v2356
        %v2387 = vadd.f32 %v2323, %v2348
        %v2388 = vadd.f32 %v2324, %v2352
        %v2389 = vadd.f32 %v2325, %v2356
        %v2390 = vadd.f32 %v2326, %v2348
        %v2391 = vadd.f32 %v2327, %v2352
        %v2392 = vadd.f32 %v2328, %v2356
        %v2393 = vadd.f32 %v2329, %v2348
        %v2394 = vadd.f32 %v2330, %v2352
        %v2395 = vadd.f32 %v2331, %v2356
        %v2396 = vadd.f32 %v2332, %v2348
        %v2397 = vadd.f32 %v2333, %v2352
        %v2398 = vadd.f32 %v2334, %v2356
        %v2399 = vadd.f32 %v2335, %v2348
        %v2400 = vadd.f32 %v2336, %v2352
        %v2401 = vadd.f32 %v2337, %v2356
        %v2402 = vadd.f32 %v2338, %v2348
        %v2403 = vadd.f32 %v2339, %v2352
        %v2404 = vadd.f32 %v2340, %v2356
        %v2405 = vadd.f32 %v2341, %v2348
        %v2406 = vadd.f32 %v2342, %v2352
        %v2407 = vadd.f32 %v2343, %v2356
        %vm2408 = vcmp.gt.f32.partialorder %v2360, 0.0
        %vm2409 = vcmp.gt.f32.partialorder %v2361, 0.0
        %vm2410 = vcmp.gt.f32.partialorder %v2362, 0.0
        %vm2411 = vcmp.gt.f32.partialorder %v2363, 0.0
        %vm2412 = vcmp.gt.f32.partialorder %v2364, 0.0
        %vm2413 = vcmp.gt.f32.partialorder %v2365, 0.0
        %vm2414 = vcmp.gt.f32.partialorder %v2366, 0.0
        %vm2415 = vcmp.gt.f32.partialorder %v2367, 0.0
        %vm2416 = vcmp.gt.f32.partialorder %v2368, 0.0
        %vm2417 = vcmp.gt.f32.partialorder %v2369, 0.0
        %vm2418 = vcmp.gt.f32.partialorder %v2370, 0.0
        %vm2419 = vcmp.gt.f32.partialorder %v2371, 0.0
        %vm2420 = vcmp.gt.f32.partialorder %v2372, 0.0
        %vm2421 = vcmp.gt.f32.partialorder %v2373, 0.0
        %vm2422 = vcmp.gt.f32.partialorder %v2374, 0.0
        %vm2423 = vcmp.gt.f32.partialorder %v2375, 0.0
        %vm2424 = vcmp.gt.f32.partialorder %v2376, 0.0
        %vm2425 = vcmp.gt.f32.partialorder %v2377, 0.0
        %vm2426 = vcmp.gt.f32.partialorder %v2378, 0.0
        %vm2427 = vcmp.gt.f32.partialorder %v2379, 0.0
        %vm2428 = vcmp.gt.f32.partialorder %v2380, 0.0
        %vm2429 = vcmp.gt.f32.partialorder %v2381, 0.0
        %vm2430 = vcmp.gt.f32.partialorder %v2382, 0.0
        %vm2431 = vcmp.gt.f32.partialorder %v2383, 0.0
        %vm2432 = vcmp.gt.f32.partialorder %v2384, 0.0
        %vm2433 = vcmp.gt.f32.partialorder %v2385, 0.0
        %vm2434 = vcmp.gt.f32.partialorder %v2386, 0.0
        %vm2435 = vcmp.gt.f32.partialorder %v2387, 0.0
        %vm2436 = vcmp.gt.f32.partialorder %v2388, 0.0
        %vm2437 = vcmp.gt.f32.partialorder %v2389, 0.0
        %vm2438 = vcmp.gt.f32.partialorder %v2390, 0.0
        %vm2439 = vcmp.gt.f32.partialorder %v2391, 0.0
        %vm2440 = vcmp.gt.f32.partialorder %v2392, 0.0
        %vm2441 = vcmp.gt.f32.partialorder %v2393, 0.0
        %vm2442 = vcmp.gt.f32.partialorder %v2394, 0.0
        %vm2443 = vcmp.gt.f32.partialorder %v2395, 0.0
        %vm2444 = vcmp.gt.f32.partialorder %v2396, 0.0
        %vm2445 = vcmp.gt.f32.partialorder %v2397, 0.0
        %vm2446 = vcmp.gt.f32.partialorder %v2398, 0.0
        %vm2447 = vcmp.gt.f32.partialorder %v2399, 0.0
        %vm2448 = vcmp.gt.f32.partialorder %v2400, 0.0
        %vm2449 = vcmp.gt.f32.partialorder %v2401, 0.0
        %vm2450 = vcmp.gt.f32.partialorder %v2402, 0.0
        %vm2451 = vcmp.gt.f32.partialorder %v2403, 0.0
        %vm2452 = vcmp.gt.f32.partialorder %v2404, 0.0
        %vm2453 = vcmp.gt.f32.partialorder %v2405, 0.0
        %vm2454 = vcmp.gt.f32.partialorder %v2406, 0.0
        %vm2455 = vcmp.gt.f32.partialorder %v2407, 0.0
        %v2456 = vstv %s1241
        %v2457 = vmul.f32 %v2456, %v2360
        %v2458 = vmul.f32 %v2456, %v2361
        %v2459 = vmul.f32 %v2456, %v2362
        %v2460 = vmul.f32 %v2456, %v2363
        %v2461 = vmul.f32 %v2456, %v2364
        %v2462 = vmul.f32 %v2456, %v2365
        %v2463 = vmul.f32 %v2456, %v2366
        %v2464 = vmul.f32 %v2456, %v2367
        %v2465 = vmul.f32 %v2456, %v2368
        %v2466 = vmul.f32 %v2456, %v2369
        %v2467 = vmul.f32 %v2456, %v2370
        %v2468 = vmul.f32 %v2456, %v2371
        %v2469 = vmul.f32 %v2456, %v2372
        %v2470 = vmul.f32 %v2456, %v2373
        %v2471 = vmul.f32 %v2456, %v2374
        %v2472 = vmul.f32 %v2456, %v2375
        %v2473 = vmul.f32 %v2456, %v2376
        %v2474 = vmul.f32 %v2456, %v2377
        %v2475 = vmul.f32 %v2456, %v2378
        %v2476 = vmul.f32 %v2456, %v2379
        %v2477 = vmul.f32 %v2456, %v2380
        %v2478 = vmul.f32 %v2456, %v2381
        %v2479 = vmul.f32 %v2456, %v2382
        %v2480 = vmul.f32 %v2456, %v2383
        %v2481 = vmul.f32 %v2456, %v2384
        %v2482 = vmul.f32 %v2456, %v2385
        %v2483 = vmul.f32 %v2456, %v2386
        %v2484 = vmul.f32 %v2456, %v2387
        %v2485 = vmul.f32 %v2456, %v2388
        %v2486 = vmul.f32 %v2456, %v2389
        %v2487 = vmul.f32 %v2456, %v2390
        %v2488 = vmul.f32 %v2456, %v2391
        %v2489 = vmul.f32 %v2456, %v2392
        %v2490 = vmul.f32 %v2456, %v2393
        %v2491 = vmul.f32 %v2456, %v2394
        %v2492 = vmul.f32 %v2456, %v2395
        %v2493 = vmul.f32 %v2456, %v2396
        %v2494 = vmul.f32 %v2456, %v2397
        %v2495 = vmul.f32 %v2456, %v2398
        %v2496 = vmul.f32 %v2456, %v2399
        %v2497 = vmul.f32 %v2456, %v2400
        %v2498 = vmul.f32 %v2456, %v2401
        %v2499 = vmul.f32 %v2456, %v2402
        %v2500 = vmul.f32 %v2456, %v2403
        %v2501 = vmul.f32 %v2456, %v2404
        %v2502 = vmul.f32 %v2456, %v2405
        %v2503 = vmul.f32 %v2456, %v2406
        %v2504 = vmul.f32 %v2456, %v2407
        %v2505 = vsel %vm2408, %v2360, %v2457
        %v2506 = vsel %vm2409, %v2361, %v2458
        %v2507 = vsel %vm2410, %v2362, %v2459
        %v2508 = vsel %vm2411, %v2363, %v2460
        %v2509 = vsel %vm2412, %v2364, %v2461
        %v2510 = vsel %vm2413, %v2365, %v2462
        %v2511 = vsel %vm2414, %v2366, %v2463
        %v2512 = vsel %vm2415, %v2367, %v2464
        %v2513 = vsel %vm2416, %v2368, %v2465
        %v2514 = vsel %vm2417, %v2369, %v2466
        %v2515 = vsel %vm2418, %v2370, %v2467
        %v2516 = vsel %vm2419, %v2371, %v2468
        %v2517 = vsel %vm2420, %v2372, %v2469
        %v2518 = vsel %vm2421, %v2373, %v2470
        %v2519 = vsel %vm2422, %v2374, %v2471
        %v2520 = vsel %vm2423, %v2375, %v2472
        %v2521 = vsel %vm2424, %v2376, %v2473
        %v2522 = vsel %vm2425, %v2377, %v2474
        %v2523 = vsel %vm2426, %v2378, %v2475
        %v2524 = vsel %vm2427, %v2379, %v2476
        %v2525 = vsel %vm2428, %v2380, %v2477
        %v2526 = vsel %vm2429, %v2381, %v2478
        %v2527 = vsel %vm2430, %v2382, %v2479
        %v2528 = vsel %vm2431, %v2383, %v2480
        %v2529 = vsel %vm2432, %v2384, %v2481
        %v2530 = vsel %vm2433, %v2385, %v2482
        %v2531 = vsel %vm2434, %v2386, %v2483
        %v2532 = vsel %vm2435, %v2387, %v2484
        %v2533 = vsel %vm2436, %v2388, %v2485
        %v2534 = vsel %vm2437, %v2389, %v2486
        %v2535 = vsel %vm2438, %v2390, %v2487
        %v2536 = vsel %vm2439, %v2391, %v2488
        %v2537 = vsel %vm2440, %v2392, %v2489
        %v2538 = vsel %vm2441, %v2393, %v2490
        %v2539 = vsel %vm2442, %v2394, %v2491
        %v2540 = vsel %vm2443, %v2395, %v2492
        %v2541 = vsel %vm2444, %v2396, %v2493
        %v2542 = vsel %vm2445, %v2397, %v2494
        %v2543 = vsel %vm2446, %v2398, %v2495
        %v2544 = vsel %vm2447, %v2399, %v2496
        %v2545 = vsel %vm2448, %v2400, %v2497
        %v2546 = vsel %vm2449, %v2401, %v2498
        %v2547 = vsel %vm2450, %v2402, %v2499
        %v2548 = vsel %vm2451, %v2403, %v2500
        %v2549 = vsel %vm2452, %v2404, %v2501
        %v2550 = vsel %vm2453, %v2405, %v2502
        %v2551 = vsel %vm2454, %v2406, %v2503
        %v2552 = vsel %vm2455, %v2407, %v2504
        %v2553 = vpack.c.bf16 %v2508, %v2505
        %v2554 = vpack.c.bf16 %v2509, %v2506
        %v2555 = vpack.c.bf16 %v2510, %v2507
        %v2556 = vpack.c.bf16 %v2514, %v2511
        %v2557 = vpack.c.bf16 %v2515, %v2512
        %v2558 = vpack.c.bf16 %v2516, %v2513
        %v2559 = vpack.c.bf16 %v2520, %v2517
        %v2560 = vpack.c.bf16 %v2521, %v2518
        %v2561 = vpack.c.bf16 %v2522, %v2519
        %v2562 = vpack.c.bf16 %v2526, %v2523
        %v2563 = vpack.c.bf16 %v2527, %v2524
        %v2564 = vpack.c.bf16 %v2528, %v2525
        %v2565 = vpack.c.bf16 %v2532, %v2529
        %v2566 = vpack.c.bf16 %v2533, %v2530
        %v2567 = vpack.c.bf16 %v2534, %v2531
        %v2568 = vpack.c.bf16 %v2538, %v2535
        %v2569 = vpack.c.bf16 %v2539, %v2536
        %v2570 = vpack.c.bf16 %v2540, %v2537
        %v2571 = vpack.c.bf16 %v2544, %v2541
        %v2572 = vpack.c.bf16 %v2545, %v2542
        %v2573 = vpack.c.bf16 %v2546, %v2543
        %v2574 = vpack.c.bf16 %v2550, %v2547
        %v2575 = vpack.c.bf16 %v2551, %v2548
        %v2576 = vpack.c.bf16 %v2552, %v2549
        %s2577 = scalar_lea.vmem %s3, 456
        %v2578 = vld [vmem:[%s2577] sm:$0xff]
        %v2579 = vld [vmem:[%s2577 + $0x8] sm:$0xf]
        %v2580 = vld [vmem:[%s2577 + $0xc] sm:$0xff]
        %v2581 = vld [vmem:[%s2577 + $0x14] sm:$0xf]
        %v2582 = vld [vmem:[%s2577 + $0x18] sm:$0xff]
        %v2583 = vld [vmem:[%s2577 + $0x20] sm:$0xf]
        %v2584 = vld [vmem:[%s2577 + $0x24] sm:$0xff]
        %v2585 = vld [vmem:[%s2577 + $0x2c] sm:$0xf]
        %v2586 = vld [vmem:[%s2577 + $0x30] sm:$0xff]
        %v2587 = vld [vmem:[%s2577 + $0x38] sm:$0xf]
        %v2588 = vld [vmem:[%s2577 + $0x3c] sm:$0xff]
        %v2589 = vld [vmem:[%s2577 + $0x44] sm:$0xf]
        %v2590 = vld [vmem:[%s2577 + $0x48] sm:$0xff]
        %v2591 = vld [vmem:[%s2577 + $0x50] sm:$0xf]
        %v2592 = vld [vmem:[%s2577 + $0x54] sm:$0xff]
        %v2593 = vld [vmem:[%s2577 + $0x5c] sm:$0xf]
        %v2594 = vld [vmem:[%s2577 + $0x60] sm:$0xff]
        %v2595 = vld [vmem:[%s2577 + $0x68] sm:$0xf]
        %v2596 = vld [vmem:[%s2577 + $0x6c] sm:$0xff]
        %v2597 = vld [vmem:[%s2577 + $0x74] sm:$0xf]
        %v2598 = vld [vmem:[%s2577 + $0x78] sm:$0xff]
        %v2599 = vld [vmem:[%s2577 + $0x80] sm:$0xf]
        %v2600 = vld [vmem:[%s2577 + $0x84] sm:$0xff]
        %v2601 = vld [vmem:[%s2577 + $0x8c] sm:$0xf]
        %v2602 = vld [vmem:[%s2577 + $0x90] sm:$0xff]
        %v2603 = vld [vmem:[%s2577 + $0x98] sm:$0xf]
        %v2604 = vld [vmem:[%s2577 + $0x9c] sm:$0xff]
        %v2605 = vld [vmem:[%s2577 + $0xa4] sm:$0xf]
        %v2606 = vld [vmem:[%s2577 + $0xa8] sm:$0xff]
        %v2607 = vld [vmem:[%s2577 + $0xb0] sm:$0xf]
        %v2608 = vld [vmem:[%s2577 + $0xb4] sm:$0xff]
        %v2609 = vld [vmem:[%s2577 + $0xbc] sm:$0xf]
        %v2610 = vld [vmem:[%s2577 + $0xc0] sm:$0xff]
        %v2611 = vld [vmem:[%s2577 + $0xc8] sm:$0xf]
        %v2612 = vld [vmem:[%s2577 + $0xcc] sm:$0xff]
        %v2613 = vld [vmem:[%s2577 + $0xd4] sm:$0xf]
        %v2614 = vld [vmem:[%s2577 + $0xd8] sm:$0xff]
        %v2615 = vld [vmem:[%s2577 + $0xe0] sm:$0xf]
        %v2616 = vld [vmem:[%s2577 + $0xe4] sm:$0xff]
        %v2617 = vld [vmem:[%s2577 + $0xec] sm:$0xf]
        %v2618 = vld [vmem:[%s2577 + $0xf0] sm:$0xff]
        %v2619 = vld [vmem:[%s2577 + $0xf8] sm:$0xf]
        %v2620 = vld [vmem:[%s2577 + $0xfc] sm:$0xff]
        %v2621 = vld [vmem:[%s2577 + $0x104] sm:$0xf]
        %v2622 = vld [vmem:[%s2577 + $0x108] sm:$0xff]
        %v2623 = vld [vmem:[%s2577 + $0x110] sm:$0xf]
        %v2624 = vld [vmem:[%s2577 + $0x114] sm:$0xff]
        %v2625 = vld [vmem:[%s2577 + $0x11c] sm:$0xf]
        %v2626 = vld [vmem:[%s2577 + $0x120] sm:$0xff]
        %v2627 = vld [vmem:[%s2577 + $0x128] sm:$0xf]
        %v2628 = vld [vmem:[%s2577 + $0x12c] sm:$0xff]
        %v2629 = vld [vmem:[%s2577 + $0x134] sm:$0xf]
        %v2630 = vld [vmem:[%s2577 + $0x138] sm:$0xff]
        %v2631 = vld [vmem:[%s2577 + $0x140] sm:$0xf]
        %v2632 = vld [vmem:[%s2577 + $0x144] sm:$0xff]
        %v2633 = vld [vmem:[%s2577 + $0x14c] sm:$0xf]
        %v2634 = vld [vmem:[%s2577 + $0x150] sm:$0xff]
        %v2635 = vld [vmem:[%s2577 + $0x158] sm:$0xf]
        %v2636 = vld [vmem:[%s2577 + $0x15c] sm:$0xff]
        %v2637 = vld [vmem:[%s2577 + $0x164] sm:$0xf]
        %v2638 = vld [vmem:[%s2577 + $0x168] sm:$0xff]
        %v2639 = vld [vmem:[%s2577 + $0x170] sm:$0xf]
        %v2640 = vld [vmem:[%s2577 + $0x174] sm:$0xff]
        %v2641 = vld [vmem:[%s2577 + $0x17c] sm:$0xf]
        %v2642 = vld [vmem:[%s2577 + $0x180] sm:$0xff]
        %v2643 = vld [vmem:[%s2577 + $0x188] sm:$0xf]
        %v2644 = vld [vmem:[%s2577 + $0x18c] sm:$0xff]
        %v2645 = vld [vmem:[%s2577 + $0x194] sm:$0xf]
        %v2646 = vld [vmem:[%s2577 + $0x198] sm:$0xff]
        %v2647 = vld [vmem:[%s2577 + $0x1a0] sm:$0xf]
        %v2648 = vld [vmem:[%s2577 + $0x1a4] sm:$0xff]
        %v2649 = vld [vmem:[%s2577 + $0x1ac] sm:$0xf]
        %v2650 = vld [vmem:[%s2577 + $0x1b0] sm:$0xff]
        %v2651 = vld [vmem:[%s2577 + $0x1b8] sm:$0xf]
        %v2652 = vld [vmem:[%s2577 + $0x1bc] sm:$0x33]
        %v2653 = vld [vmem:[%s2577 + $0x1c4] sm:$0x3]
        %s2654 = scalar_lea.vmem %s5, 4
        %v2655 = vld [vmem:[%s2654] ss:$8 sm:$0x7]
        %s2656 = scalar_lea.vmem %s5, 5
        %v2657 = vld [vmem:[%s2656] ss:$8 sm:$0x7]
        %s2658 = sld [smem:[#allocation2 + $0x2]]
        %v2735 = vunpack.c.l.b16 %v2578
        %v2736 = vunpack.c.h.b16 %v2578
        %v2737 = vunpack.c.l.b16 %v2579
        %v2738 = vunpack.c.l.b16 %v2580
        %v2739 = vunpack.c.h.b16 %v2580
        %v2740 = vunpack.c.l.b16 %v2581
        %v2741 = vunpack.c.l.b16 %v2582
        %v2742 = vunpack.c.h.b16 %v2582
        %v2743 = vunpack.c.l.b16 %v2583
        %v2744 = vunpack.c.l.b16 %v2584
        %v2745 = vunpack.c.h.b16 %v2584
        %v2746 = vunpack.c.l.b16 %v2585
        %v2747 = vunpack.c.l.b16 %v2586
        %v2748 = vunpack.c.h.b16 %v2586
        %v2749 = vunpack.c.l.b16 %v2587
        %v2750 = vunpack.c.l.b16 %v2588
        %v2751 = vunpack.c.h.b16 %v2588
        %v2752 = vunpack.c.l.b16 %v2589
        %v2753 = vunpack.c.l.b16 %v2590
        %v2754 = vunpack.c.h.b16 %v2590
        %v2755 = vunpack.c.l.b16 %v2591
        %v2756 = vunpack.c.l.b16 %v2592
        %v2757 = vunpack.c.h.b16 %v2592
        %v2758 = vunpack.c.l.b16 %v2593
        %v2759 = vunpack.c.l.b16 %v2594
        %v2760 = vunpack.c.h.b16 %v2594
        %v2761 = vunpack.c.l.b16 %v2595
        %v2762 = vunpack.c.l.b16 %v2596
        %v2763 = vunpack.c.h.b16 %v2596
        %v2764 = vunpack.c.l.b16 %v2597
        %v2765 = vunpack.c.l.b16 %v2598
        %v2766 = vunpack.c.h.b16 %v2598
        %v2767 = vunpack.c.l.b16 %v2599
        %v2768 = vunpack.c.l.b16 %v2600
        %v2769 = vunpack.c.h.b16 %v2600
        %v2770 = vunpack.c.l.b16 %v2601
        %v2771 = vunpack.c.l.b16 %v2602
        %v2772 = vunpack.c.h.b16 %v2602
        %v2773 = vunpack.c.l.b16 %v2603
        %v2774 = vunpack.c.l.b16 %v2604
        %v2775 = vunpack.c.h.b16 %v2604
        %v2776 = vunpack.c.l.b16 %v2605
        %v2777 = vunpack.c.l.b16 %v2606
        %v2778 = vunpack.c.h.b16 %v2606
        %v2779 = vunpack.c.l.b16 %v2607
        %v2780 = vunpack.c.l.b16 %v2608
        %v2781 = vunpack.c.h.b16 %v2608
        %v2782 = vunpack.c.l.b16 %v2609
        %v2783 = vunpack.c.l.b16 %v2610
        %v2784 = vunpack.c.h.b16 %v2610
        %v2785 = vunpack.c.l.b16 %v2611
        %v2786 = vunpack.c.l.b16 %v2612
        %v2787 = vunpack.c.h.b16 %v2612
        %v2788 = vunpack.c.l.b16 %v2613
        %v2789 = vunpack.c.l.b16 %v2614
        %v2790 = vunpack.c.h.b16 %v2614
        %v2791 = vunpack.c.l.b16 %v2615
        %v2792 = vunpack.c.l.b16 %v2616
        %v2793 = vunpack.c.h.b16 %v2616
        %v2794 = vunpack.c.l.b16 %v2617
        %v2795 = vunpack.c.l.b16 %v2618
        %v2796 = vunpack.c.h.b16 %v2618
        %v2797 = vunpack.c.l.b16 %v2619
        %v2798 = vunpack.c.l.b16 %v2620
        %v2799 = vunpack.c.h.b16 %v2620
        %v2800 = vunpack.c.l.b16 %v2621
        %v2801 = vunpack.c.l.b16 %v2622
        %v2802 = vunpack.c.h.b16 %v2622
        %v2803 = vunpack.c.l.b16 %v2623
        %v2804 = vunpack.c.l.b16 %v2624
        %v2805 = vunpack.c.h.b16 %v2624
        %v2806 = vunpack.c.l.b16 %v2625
        %v2807 = vunpack.c.l.b16 %v2626
        %v2808 = vunpack.c.h.b16 %v2626
        %v2809 = vunpack.c.l.b16 %v2627
        %v2810 = vunpack.c.l.b16 %v2628
        %v2811 = vunpack.c.h.b16 %v2628
        %v2812 = vunpack.c.l.b16 %v2629
        %v2813 = vunpack.c.l.b16 %v2630
        %v2814 = vunpack.c.h.b16 %v2630
        %v2815 = vunpack.c.l.b16 %v2631
        %v2816 = vunpack.c.l.b16 %v2632
        %v2817 = vunpack.c.h.b16 %v2632
        %v2818 = vunpack.c.l.b16 %v2633
        %v2819 = vunpack.c.l.b16 %v2634
        %v2820 = vunpack.c.h.b16 %v2634
        %v2821 = vunpack.c.l.b16 %v2635
        %v2822 = vunpack.c.l.b16 %v2636
        %v2823 = vunpack.c.h.b16 %v2636
        %v2824 = vunpack.c.l.b16 %v2637
        %v2825 = vunpack.c.l.b16 %v2638
        %v2826 = vunpack.c.h.b16 %v2638
        %v2827 = vunpack.c.l.b16 %v2639
        %v2828 = vunpack.c.l.b16 %v2640
        %v2829 = vunpack.c.h.b16 %v2640
        %v2830 = vunpack.c.l.b16 %v2641
        %v2831 = vunpack.c.l.b16 %v2642
        %v2832 = vunpack.c.h.b16 %v2642
        %v2833 = vunpack.c.l.b16 %v2643
        %v2834 = vunpack.c.l.b16 %v2644
        %v2835 = vunpack.c.h.b16 %v2644
        %v2836 = vunpack.c.l.b16 %v2645
        %v2837 = vunpack.c.l.b16 %v2646
        %v2838 = vunpack.c.h.b16 %v2646
        %v2839 = vunpack.c.l.b16 %v2647
        %v2840 = vunpack.c.l.b16 %v2648
        %v2841 = vunpack.c.h.b16 %v2648
        %v2842 = vunpack.c.l.b16 %v2649
        %v2843 = vunpack.c.l.b16 %v2650
        %v2844 = vunpack.c.h.b16 %v2650
        %v2845 = vunpack.c.l.b16 %v2651
        %v2846 = vunpack.c.l.b16 %v2652
        %v2847 = vunpack.c.h.b16 %v2652
        %v2848 = vunpack.c.l.b16 %v2653
        %v2849 = vpack.c.b16 %v2738, %v2735
        %v2850 = vpack.c.b16 %v2739, %v2736
        %v2851 = vpack.c.b16 %v2740, %v2737
        %v2852 = vpack.c.b16 %v2744, %v2741
        %v2853 = vpack.c.b16 %v2745, %v2742
        %v2854 = vpack.c.b16 %v2746, %v2743
        %v2855 = vpack.c.b16 %v2750, %v2747
        %v2856 = vpack.c.b16 %v2751, %v2748
        %v2857 = vpack.c.b16 %v2752, %v2749
        %v2858 = vpack.c.b16 %v2756, %v2753
        %v2859 = vpack.c.b16 %v2757, %v2754
        %v2860 = vpack.c.b16 %v2758, %v2755
        %v2861 = vpack.c.b16 %v2762, %v2759
        %v2862 = vpack.c.b16 %v2763, %v2760
        %v2863 = vpack.c.b16 %v2764, %v2761
        %v2864 = vpack.c.b16 %v2768, %v2765
        %v2865 = vpack.c.b16 %v2769, %v2766
        %v2866 = vpack.c.b16 %v2770, %v2767
        %v2867 = vpack.c.b16 %v2774, %v2771
        %v2868 = vpack.c.b16 %v2775, %v2772
        %v2869 = vpack.c.b16 %v2776, %v2773
        %v2870 = vpack.c.b16 %v2780, %v2777
        %v2871 = vpack.c.b16 %v2781, %v2778
        %v2872 = vpack.c.b16 %v2782, %v2779
        %v2873 = vpack.c.b16 %v2786, %v2783
        %v2874 = vpack.c.b16 %v2787, %v2784
        %v2875 = vpack.c.b16 %v2788, %v2785
        %v2876 = vpack.c.b16 %v2792, %v2789
        %v2877 = vpack.c.b16 %v2793, %v2790
        %v2878 = vpack.c.b16 %v2794, %v2791
        %v2879 = vpack.c.b16 %v2798, %v2795
        %v2880 = vpack.c.b16 %v2799, %v2796
        %v2881 = vpack.c.b16 %v2800, %v2797
        %v2882 = vpack.c.b16 %v2804, %v2801
        %v2883 = vpack.c.b16 %v2805, %v2802
        %v2884 = vpack.c.b16 %v2806, %v2803
        %v2885 = vpack.c.b16 %v2810, %v2807
        %v2886 = vpack.c.b16 %v2811, %v2808
        %v2887 = vpack.c.b16 %v2812, %v2809
        %v2888 = vpack.c.b16 %v2816, %v2813
        %v2889 = vpack.c.b16 %v2817, %v2814
        %v2890 = vpack.c.b16 %v2818, %v2815
        %v2891 = vpack.c.b16 %v2822, %v2819
        %v2892 = vpack.c.b16 %v2823, %v2820
        %v2893 = vpack.c.b16 %v2824, %v2821
        %v2894 = vpack.c.b16 %v2828, %v2825
        %v2895 = vpack.c.b16 %v2829, %v2826
        %v2896 = vpack.c.b16 %v2830, %v2827
        %v2897 = vpack.c.b16 %v2834, %v2831
        %v2898 = vpack.c.b16 %v2835, %v2832
        %v2899 = vpack.c.b16 %v2836, %v2833
        %v2900 = vpack.c.b16 %v2840, %v2837
        %v2901 = vpack.c.b16 %v2841, %v2838
        %v2902 = vpack.c.b16 %v2842, %v2839
        %v2903 = vpack.c.b16 %v2846, %v2843
        %v2904 = vpack.c.b16 %v2847, %v2844
        %v2905 = vpack.c.b16 %v2848, %v2845
        %v2961 = vsel %vm622, %v2555, 0
        %v2964 = vsel %vm622, %v2558, 0
        %v2967 = vsel %vm622, %v2561, 0
        %v2970 = vsel %vm622, %v2564, 0
        %v2973 = vsel %vm622, %v2567, 0
        %v2976 = vsel %vm622, %v2570, 0
        %v2979 = vsel %vm622, %v2573, 0
        %v2982 = vsel %vm622, %v2576, 0
        %v2985 = vsel %vm1567, %v2903, 0
        %v2988 = vsel %vm1567, %v2904, 0
        %v2991 = vsel %vm1567, %v2905, 0
        %2993 = vmatprep.subr.bf16.mxu0 %v2850
        %2994 = vmatpush1.bf16.msra.mxu0 %v2849
        %2995 = vmatprep.subr.bf16.mxu0 %v2853
        %2996 = vmatpush1.bf16.msra.mxu0 %v2852
        %2997 = vmatprep.subr.bf16.mxu0 %v2856
        %2998 = vmatpush1.bf16.msra.mxu0 %v2855
        %2999 = vmatprep.subr.bf16.mxu0 %v2859
        %3000 = vmatpush1.bf16.msra.mxu0 %v2858
        %3001 = vmatprep.subr.bf16.mxu0 %v2862
        %3002 = vmatpush1.bf16.msra.mxu0 %v2861
        %3003 = vmatprep.subr.bf16.mxu0 %v2865
        %3004 = vmatpush1.bf16.msra.mxu0 %v2864
        %3005 = vmatprep.subr.bf16.mxu0 %v2868
        %3006 = vmatpush1.bf16.msra.mxu0 %v2867
        %3007 = vmatprep.subr.bf16.mxu0 %v2871
        %3008 = vmatpush1.bf16.msra.mxu0 %v2870
        %3009 = vmatprep.subr.bf16.mxu0 %v2874
        %3010 = vmatpush1.bf16.msra.mxu0 %v2873
        %3011 = vmatprep.subr.bf16.mxu0 %v2877
        %3012 = vmatpush1.bf16.msra.mxu0 %v2876
        %3013 = vmatprep.subr.bf16.mxu0 %v2880
        %3014 = vmatpush1.bf16.msra.mxu0 %v2879
        %3015 = vmatprep.subr.bf16.mxu0 %v2883
        %3016 = vmatpush1.bf16.msra.mxu0 %v2882
        %3017 = vmatprep.subr.bf16.mxu0 %v2886
        %3018 = vmatpush1.bf16.msra.mxu0 %v2885
        %3019 = vmatprep.subr.bf16.mxu0 %v2889
        %3020 = vmatpush1.bf16.msra.mxu0 %v2888
        %3021 = vmatprep.subr.bf16.mxu0 %v2892
        %3022 = vmatpush1.bf16.msra.mxu0 %v2891
        %3023 = vmatprep.subr.bf16.mxu0 %v2895
        %3024 = vmatpush1.bf16.msra.mxu0 %v2894
        %3025 = vmatprep.mubr.bf16.mxu0 %v2554
        %3026 = vmatmul.mubr.bf16.gmra.mrb[0].mxu0 %v2553
        %v3027 = vpop.f32.mrb[0].mxu0
        %v3028 = vadd.f32 0.0, %v3027
        %v3029 = vpop.f32.mrb[0].mxu0
        %v3030 = vadd.f32 0.0, %v3029
        %v3031 = vpop.f32.mrb[0].mxu0
        %v3032 = vadd.f32 0.0, %v3031
        %v3033 = vpop.f32.mrb[0].mxu0
        %v3034 = vadd.f32 0.0, %v3033
        %3035 = vmatprep.mubr.bf16.mxu0 %v2557
        %3036 = vmatmul.mubr.bf16.gmra.mrb[0].mxu0 %v2556
        %v3037 = vpop.f32.mrb[0].mxu0
        %v3038 = vadd.f32 0.0, %v3037
        %v3039 = vpop.f32.mrb[0].mxu0
        %v3040 = vadd.f32 0.0, %v3039
        %v3041 = vpop.f32.mrb[0].mxu0
        %v3042 = vadd.f32 0.0, %v3041
        %v3043 = vpop.f32.mrb[0].mxu0
        %v3044 = vadd.f32 0.0, %v3043
        %3045 = vmatprep.mubr.bf16.mxu0 %v2560
        %3046 = vmatmul.mubr.bf16.gmra.mrb[0].mxu0 %v2559
        %v3047 = vpop.f32.mrb[0].mxu0
        %v3048 = vadd.f32 0.0, %v3047
        %v3049 = vpop.f32.mrb[0].mxu0
        %v3050 = vadd.f32 0.0, %v3049
        %v3051 = vpop.f32.mrb[0].mxu0
        %v3052 = vadd.f32 0.0, %v3051
        %v3053 = vpop.f32.mrb[0].mxu0
        %v3054 = vadd.f32 0.0, %v3053
        %3055 = vmatprep.mubr.bf16.mxu0 %v2563
        %3056 = vmatmul.mubr.bf16.gmra.mrb[0].mxu0 %v2562
        %v3057 = vpop.f32.mrb[0].mxu0
        %v3058 = vadd.f32 0.0, %v3057
        %v3059 = vpop.f32.mrb[0].mxu0
        %v3060 = vadd.f32 0.0, %v3059
        %v3061 = vpop.f32.mrb[0].mxu0
        %v3062 = vadd.f32 0.0, %v3061
        %v3063 = vpop.f32.mrb[0].mxu0
        %v3064 = vadd.f32 0.0, %v3063
        %3065 = vmatprep.mubr.bf16.mxu0 %v2566
        %3066 = vmatmul.mubr.bf16.gmra.mrb[0].mxu0 %v2565
        %v3067 = vpop.f32.mrb[0].mxu0
        %v3068 = vadd.f32 0.0, %v3067
        %v3069 = vpop.f32.mrb[0].mxu0
        %v3070 = vadd.f32 0.0, %v3069
        %v3071 = vpop.f32.mrb[0].mxu0
        %v3072 = vadd.f32 0.0, %v3071
        %v3073 = vpop.f32.mrb[0].mxu0
        %v3074 = vadd.f32 0.0, %v3073
        %3075 = vmatprep.mubr.bf16.mxu0 %v2569
        %3076 = vmatmul.mubr.bf16.gmra.mrb[0].mxu0 %v2568
        %v3077 = vpop.f32.mrb[0].mxu0
        %v3078 = vadd.f32 0.0, %v3077
        %v3079 = vpop.f32.mrb[0].mxu0
        %v3080 = vadd.f32 0.0, %v3079
        %v3081 = vpop.f32.mrb[0].mxu0
        %v3082 = vadd.f32 0.0, %v3081
        %v3083 = vpop.f32.mrb[0].mxu0
        %v3084 = vadd.f32 0.0, %v3083
        %3085 = vmatprep.mubr.bf16.mxu0 %v2572
        %3086 = vmatmul.mubr.bf16.gmra.mrb[0].mxu0 %v2571
        %v3087 = vpop.f32.mrb[0].mxu0
        %v3088 = vadd.f32 0.0, %v3087
        %v3089 = vpop.f32.mrb[0].mxu0
        %v3090 = vadd.f32 0.0, %v3089
        %v3091 = vpop.f32.mrb[0].mxu0
        %v3092 = vadd.f32 0.0, %v3091
        %v3093 = vpop.f32.mrb[0].mxu0
        %v3094 = vadd.f32 0.0, %v3093
        %3095 = vmatprep.mubr.bf16.mxu0 %v2575
        %3096 = vmatmul.mubr.bf16.gmra.mrb[0].mxu0 %v2574
        %v3097 = vpop.f32.mrb[0].mxu0
        %v3098 = vadd.f32 0.0, %v3097
        %v3099 = vpop.f32.mrb[0].mxu0
        %v3100 = vadd.f32 0.0, %v3099
        %v3101 = vpop.f32.mrb[0].mxu0
        %v3102 = vadd.f32 0.0, %v3101
        %v3103 = vpop.f32.mrb[0].mxu0
        %v3104 = vadd.f32 0.0, %v3103
        %3105 = vdwg.mxu0
        %3106 = vmatprep.subr.bf16.mxu0 %v2898
        %3107 = vmatpush1.bf16.msra.mxu0 %v2897
        %3108 = vmatprep.subr.bf16.mxu0 %v2901
        %3109 = vmatpush1.bf16.msra.mxu0 %v2900
        %3110 = vmatprep.subr.bf16.mxu0 %v2988
        %3111 = vmatpush1.bf16.msra.mxu0 %v2985
        %3112 = vmatprep.subr.bf16.mxu0 0
        %3113 = vmatpush1.bf16.msra.mxu0 0
        %3114 = vmatprep.subr.bf16.mxu0 0
        %3115 = vmatpush1.bf16.msra.mxu0 0
        %3116 = vmatprep.subr.bf16.mxu0 0
        %3117 = vmatpush1.bf16.msra.mxu0 0
        %3118 = vmatprep.subr.bf16.mxu0 0
        %3119 = vmatpush1.bf16.msra.mxu0 0
        %3120 = vmatprep.subr.bf16.mxu0 0
        %3121 = vmatpush1.bf16.msra.mxu0 0
        %3122 = vmatprep.subr.bf16.mxu0 0
        %3123 = vmatpush1.bf16.msra.mxu0 0
        %3124 = vmatprep.subr.bf16.mxu0 0
        %3125 = vmatpush1.bf16.msra.mxu0 0
        %3126 = vmatprep.subr.bf16.mxu0 0
        %3127 = vmatpush1.bf16.msra.mxu0 0
        %3128 = vmatprep.subr.bf16.mxu0 0
        %3129 = vmatpush1.bf16.msra.mxu0 0
        %3130 = vmatprep.subr.bf16.mxu0 0
        %3131 = vmatpush1.bf16.msra.mxu0 0
        %3132 = vmatprep.subr.bf16.mxu0 0
        %3133 = vmatpush1.bf16.msra.mxu0 0
        %3134 = vmatprep.subr.bf16.mxu0 0
        %3135 = vmatpush1.bf16.msra.mxu0 0
        %3136 = vmatprep.subr.bf16.mxu0 0
        %3137 = vmatpush1.bf16.msra.mxu0 0
        %3138 = vmatprep.mubr.bf16.mxu0 0
        %3139 = vmatmul.mubr.bf16.gmra.mrb[0].mxu0 %v2961
        %v3140 = vpop.f32.mrb[0].mxu0
        %v3141 = vadd.f32 %v3028, %v3140
        %v3142 = vpop.f32.mrb[0].mxu0
        %v3143 = vadd.f32 %v3030, %v3142
        %v3144 = vpop.f32.mrb[0].mxu0
        %v3145 = vadd.f32 %v3032, %v3144
        %v3146 = vpop.f32.mrb[0].mxu0
        %v3147 = vadd.f32 %v3034, %v3146
        %3148 = vmatprep.mubr.bf16.mxu0 0
        %3149 = vmatmul.mubr.bf16.gmra.mrb[0].mxu0 %v2964
        %v3150 = vpop.f32.mrb[0].mxu0
        %v3151 = vadd.f32 %v3038, %v3150
        %v3152 = vpop.f32.mrb[0].mxu0
        %v3153 = vadd.f32 %v3040, %v3152
        %v3154 = vpop.f32.mrb[0].mxu0
        %v3155 = vadd.f32 %v3042, %v3154
        %v3156 = vpop.f32.mrb[0].mxu0
        %v3157 = vadd.f32 %v3044, %v3156
        %3158 = vmatprep.mubr.bf16.mxu0 0
        %3159 = vmatmul.mubr.bf16.gmra.mrb[0].mxu0 %v2967
        %v3160 = vpop.f32.mrb[0].mxu0
        %v3161 = vadd.f32 %v3048, %v3160
        %v3162 = vpop.f32.mrb[0].mxu0
        %v3163 = vadd.f32 %v3050, %v3162
        %v3164 = vpop.f32.mrb[0].mxu0
        %v3165 = vadd.f32 %v3052, %v3164
        %v3166 = vpop.f32.mrb[0].mxu0
        %v3167 = vadd.f32 %v3054, %v3166
        %3168 = vmatprep.mubr.bf16.mxu0 0
        %3169 = vmatmul.mubr.bf16.gmra.mrb[0].mxu0 %v2970
        %v3170 = vpop.f32.mrb[0].mxu0
        %v3171 = vadd.f32 %v3058, %v3170
        %v3172 = vpop.f32.mrb[0].mxu0
        %v3173 = vadd.f32 %v3060, %v3172
        %v3174 = vpop.f32.mrb[0].mxu0
        %v3175 = vadd.f32 %v3062, %v3174
        %v3176 = vpop.f32.mrb[0].mxu0
        %v3177 = vadd.f32 %v3064, %v3176
        %3178 = vmatprep.mubr.bf16.mxu0 0
        %3179 = vmatmul.mubr.bf16.gmra.mrb[0].mxu0 %v2973
        %v3180 = vpop.f32.mrb[0].mxu0
        %v3181 = vadd.f32 %v3068, %v3180
        %v3182 = vpop.f32.mrb[0].mxu0
        %v3183 = vadd.f32 %v3070, %v3182
        %v3184 = vpop.f32.mrb[0].mxu0
        %v3185 = vadd.f32 %v3072, %v3184
        %v3186 = vpop.f32.mrb[0].mxu0
        %v3187 = vadd.f32 %v3074, %v3186
        %3188 = vmatprep.mubr.bf16.mxu0 0
        %3189 = vmatmul.mubr.bf16.gmra.mrb[0].mxu0 %v2976
        %v3190 = vpop.f32.mrb[0].mxu0
        %v3191 = vadd.f32 %v3078, %v3190
        %v3192 = vpop.f32.mrb[0].mxu0
        %v3193 = vadd.f32 %v3080, %v3192
        %v3194 = vpop.f32.mrb[0].mxu0
        %v3195 = vadd.f32 %v3082, %v3194
        %v3196 = vpop.f32.mrb[0].mxu0
        %v3197 = vadd.f32 %v3084, %v3196
        %3198 = vmatprep.mubr.bf16.mxu0 0
        %3199 = vmatmul.mubr.bf16.gmra.mrb[0].mxu0 %v2979
        %v3200 = vpop.f32.mrb[0].mxu0
        %v3201 = vadd.f32 %v3088, %v3200
        %v3202 = vpop.f32.mrb[0].mxu0
        %v3203 = vadd.f32 %v3090, %v3202
        %v3204 = vpop.f32.mrb[0].mxu0
        %v3205 = vadd.f32 %v3092, %v3204
        %v3206 = vpop.f32.mrb[0].mxu0
        %v3207 = vadd.f32 %v3094, %v3206
        %3208 = vmatprep.mubr.bf16.mxu0 0
        %3209 = vmatmul.mubr.bf16.gmra.mrb[0].mxu0 %v2982
        %v3210 = vpop.f32.mrb[0].mxu0
        %v3211 = vadd.f32 %v3098, %v3210
        %v3212 = vpop.f32.mrb[0].mxu0
        %v3213 = vadd.f32 %v3100, %v3212
        %v3214 = vpop.f32.mrb[0].mxu0
        %v3215 = vadd.f32 %v3102, %v3214
        %v3216 = vpop.f32.mrb[0].mxu0
        %v3217 = vadd.f32 %v3104, %v3216
        %3218 = vdwg.mxu0
        %3219 = vmatprep.subr.bf16.mxu0 0
        %3220 = vmatpush1.bf16.msra.mxu0 %v2851
        %3221 = vmatprep.subr.bf16.mxu0 0
        %3222 = vmatpush1.bf16.msra.mxu0 %v2854
        %3223 = vmatprep.subr.bf16.mxu0 0
        %3224 = vmatpush1.bf16.msra.mxu0 %v2857
        %3225 = vmatprep.subr.bf16.mxu0 0
        %3226 = vmatpush1.bf16.msra.mxu0 %v2860
        %3227 = vmatprep.subr.bf16.mxu0 0
        %3228 = vmatpush1.bf16.msra.mxu0 %v2863
        %3229 = vmatprep.subr.bf16.mxu0 0
        %3230 = vmatpush1.bf16.msra.mxu0 %v2866
        %3231 = vmatprep.subr.bf16.mxu0 0
        %3232 = vmatpush1.bf16.msra.mxu0 %v2869
        %3233 = vmatprep.subr.bf16.mxu0 0
        %3234 = vmatpush1.bf16.msra.mxu0 %v2872
        %3235 = vmatprep.subr.bf16.mxu0 0
        %3236 = vmatpush1.bf16.msra.mxu0 %v2875
        %3237 = vmatprep.subr.bf16.mxu0 0
        %3238 = vmatpush1.bf16.msra.mxu0 %v2878
        %3239 = vmatprep.subr.bf16.mxu0 0
        %3240 = vmatpush1.bf16.msra.mxu0 %v2881
        %3241 = vmatprep.subr.bf16.mxu0 0
        %3242 = vmatpush1.bf16.msra.mxu0 %v2884
        %3243 = vmatprep.subr.bf16.mxu0 0
        %3244 = vmatpush1.bf16.msra.mxu0 %v2887
        %3245 = vmatprep.subr.bf16.mxu0 0
        %3246 = vmatpush1.bf16.msra.mxu0 %v2890
        %3247 = vmatprep.subr.bf16.mxu0 0
        %3248 = vmatpush1.bf16.msra.mxu0 %v2893
        %3249 = vmatprep.subr.bf16.mxu0 0
        %3250 = vmatpush1.bf16.msra.mxu0 %v2896
        %3251 = vmatprep.mubr.bf16.mxu0 %v2554
        %3252 = vmatmul.mubr.bf16.gmra.mrb[0].mxu0 %v2553
        %v3253 = vpop.f32.mrb[0].mxu0
        %v3254 = vadd.f32 0.0, %v3253
        %v3255 = vpop.f32.mrb[0].mxu0
        %v3256 = vpop.f32.mrb[0].mxu0
        %v3257 = vadd.f32 0.0, %v3256
        %v3258 = vpop.f32.mrb[0].mxu0
        %3259 = vmatprep.mubr.bf16.mxu0 %v2557
        %3260 = vmatmul.mubr.bf16.gmra.mrb[0].mxu0 %v2556
        %v3261 = vpop.f32.mrb[0].mxu0
        %v3262 = vadd.f32 0.0, %v3261
        %v3263 = vpop.f32.mrb[0].mxu0
        %v3264 = vpop.f32.mrb[0].mxu0
        %v3265 = vadd.f32 0.0, %v3264
        %v3266 = vpop.f32.mrb[0].mxu0
        %3267 = vmatprep.mubr.bf16.mxu0 %v2560
        %3268 = vmatmul.mubr.bf16.gmra.mrb[0].mxu0 %v2559
        %v3269 = vpop.f32.mrb[0].mxu0
        %v3270 = vadd.f32 0.0, %v3269
        %v3271 = vpop.f32.mrb[0].mxu0
        %v3272 = vpop.f32.mrb[0].mxu0
        %v3273 = vadd.f32 0.0, %v3272
        %v3274 = vpop.f32.mrb[0].mxu0
        %3275 = vmatprep.mubr.bf16.mxu0 %v2563
        %3276 = vmatmul.mubr.bf16.gmra.mrb[0].mxu0 %v2562
        %v3277 = vpop.f32.mrb[0].mxu0
        %v3278 = vadd.f32 0.0, %v3277
        %v3279 = vpop.f32.mrb[0].mxu0
        %v3280 = vpop.f32.mrb[0].mxu0
        %v3281 = vadd.f32 0.0, %v3280
        %v3282 = vpop.f32.mrb[0].mxu0
        %3283 = vmatprep.mubr.bf16.mxu0 %v2566
        %3284 = vmatmul.mubr.bf16.gmra.mrb[0].mxu0 %v2565
        %v3285 = vpop.f32.mrb[0].mxu0
        %v3286 = vadd.f32 0.0, %v3285
        %v3287 = vpop.f32.mrb[0].mxu0
        %v3288 = vpop.f32.mrb[0].mxu0
        %v3289 = vadd.f32 0.0, %v3288
        %v3290 = vpop.f32.mrb[0].mxu0
        %3291 = vmatprep.mubr.bf16.mxu0 %v2569
        %3292 = vmatmul.mubr.bf16.gmra.mrb[0].mxu0 %v2568
        %v3293 = vpop.f32.mrb[0].mxu0
        %v3294 = vadd.f32 0.0, %v3293
        %v3295 = vpop.f32.mrb[0].mxu0
        %v3296 = vpop.f32.mrb[0].mxu0
        %v3297 = vadd.f32 0.0, %v3296
        %v3298 = vpop.f32.mrb[0].mxu0
        %3299 = vmatprep.mubr.bf16.mxu0 %v2572
        %3300 = vmatmul.mubr.bf16.gmra.mrb[0].mxu0 %v2571
        %v3301 = vpop.f32.mrb[0].mxu0
        %v3302 = vadd.f32 0.0, %v3301
        %v3303 = vpop.f32.mrb[0].mxu0
        %v3304 = vpop.f32.mrb[0].mxu0
        %v3305 = vadd.f32 0.0, %v3304
        %v3306 = vpop.f32.mrb[0].mxu0
        %3307 = vmatprep.mubr.bf16.mxu0 %v2575
        %3308 = vmatmul.mubr.bf16.gmra.mrb[0].mxu0 %v2574
        %v3309 = vpop.f32.mrb[0].mxu0
        %v3310 = vadd.f32 0.0, %v3309
        %v3311 = vpop.f32.mrb[0].mxu0
        %v3312 = vpop.f32.mrb[0].mxu0
        %v3313 = vadd.f32 0.0, %v3312
        %v3314 = vpop.f32.mrb[0].mxu0
        %3315 = vdwg.mxu0
        %3316 = vmatprep.subr.bf16.mxu0 0
        %3317 = vmatpush1.bf16.msra.mxu0 %v2899
        %3318 = vmatprep.subr.bf16.mxu0 0
        %3319 = vmatpush1.bf16.msra.mxu0 %v2902
        %3320 = vmatprep.subr.bf16.mxu0 0
        %3321 = vmatpush1.bf16.msra.mxu0 %v2991
        %3322 = vmatprep.subr.bf16.mxu0 0
        %3323 = vmatpush1.bf16.msra.mxu0 0
        %3324 = vmatprep.subr.bf16.mxu0 0
        %3325 = vmatpush1.bf16.msra.mxu0 0
        %3326 = vmatprep.subr.bf16.mxu0 0
        %3327 = vmatpush1.bf16.msra.mxu0 0
        %3328 = vmatprep.subr.bf16.mxu0 0
        %3329 = vmatpush1.bf16.msra.mxu0 0
        %3330 = vmatprep.subr.bf16.mxu0 0
        %3331 = vmatpush1.bf16.msra.mxu0 0
        %3332 = vmatprep.subr.bf16.mxu0 0
        %3333 = vmatpush1.bf16.msra.mxu0 0
        %3334 = vmatprep.subr.bf16.mxu0 0
        %3335 = vmatpush1.bf16.msra.mxu0 0
        %3336 = vmatprep.subr.bf16.mxu0 0
        %3337 = vmatpush1.bf16.msra.mxu0 0
        %3338 = vmatprep.subr.bf16.mxu0 0
        %3339 = vmatpush1.bf16.msra.mxu0 0
        %3340 = vmatprep.subr.bf16.mxu0 0
        %3341 = vmatpush1.bf16.msra.mxu0 0
        %3342 = vmatprep.subr.bf16.mxu0 0
        %3343 = vmatpush1.bf16.msra.mxu0 0
        %3344 = vmatprep.subr.bf16.mxu0 0
        %3345 = vmatpush1.bf16.msra.mxu0 0
        %3346 = vmatprep.subr.bf16.mxu0 0
        %3347 = vmatpush1.bf16.msra.mxu0 0
        %3348 = vmatprep.mubr.bf16.mxu0 0
        %3349 = vmatmul.mubr.bf16.gmra.mrb[0].mxu0 %v2961
        %v3350 = vpop.f32.mrb[0].mxu0
        %v3351 = vadd.f32 %v3254, %v3350
        %v3352 = vpop.f32.mrb[0].mxu0
        %v3353 = vpop.f32.mrb[0].mxu0
        %v3354 = vadd.f32 %v3257, %v3353
        %v3355 = vpop.f32.mrb[0].mxu0
        %3356 = vmatprep.mubr.bf16.mxu0 0
        %3357 = vmatmul.mubr.bf16.gmra.mrb[0].mxu0 %v2964
        %v3358 = vpop.f32.mrb[0].mxu0
        %v3359 = vadd.f32 %v3262, %v3358
        %v3360 = vpop.f32.mrb[0].mxu0
        %v3361 = vpop.f32.mrb[0].mxu0
        %v3362 = vadd.f32 %v3265, %v3361
        %v3363 = vpop.f32.mrb[0].mxu0
        %3364 = vmatprep.mubr.bf16.mxu0 0
        %3365 = vmatmul.mubr.bf16.gmra.mrb[0].mxu0 %v2967
        %v3366 = vpop.f32.mrb[0].mxu0
        %v3367 = vadd.f32 %v3270, %v3366
        %v3368 = vpop.f32.mrb[0].mxu0
        %v3369 = vpop.f32.mrb[0].mxu0
        %v3370 = vadd.f32 %v3273, %v3369
        %v3371 = vpop.f32.mrb[0].mxu0
        %3372 = vmatprep.mubr.bf16.mxu0 0
        %3373 = vmatmul.mubr.bf16.gmra.mrb[0].mxu0 %v2970
        %v3374 = vpop.f32.mrb[0].mxu0
        %v3375 = vadd.f32 %v3278, %v3374
        %v3376 = vpop.f32.mrb[0].mxu0
        %v3377 = vpop.f32.mrb[0].mxu0
        %v3378 = vadd.f32 %v3281, %v3377
        %v3379 = vpop.f32.mrb[0].mxu0
        %3380 = vmatprep.mubr.bf16.mxu0 0
        %3381 = vmatmul.mubr.bf16.gmra.mrb[0].mxu0 %v2973
        %v3382 = vpop.f32.mrb[0].mxu0
        %v3383 = vadd.f32 %v3286, %v3382
        %v3384 = vpop.f32.mrb[0].mxu0
        %v3385 = vpop.f32.mrb[0].mxu0
        %v3386 = vadd.f32 %v3289, %v3385
        %v3387 = vpop.f32.mrb[0].mxu0
        %3388 = vmatprep.mubr.bf16.mxu0 0
        %3389 = vmatmul.mubr.bf16.gmra.mrb[0].mxu0 %v2976
        %v3390 = vpop.f32.mrb[0].mxu0
        %v3391 = vadd.f32 %v3294, %v3390
        %v3392 = vpop.f32.mrb[0].mxu0
        %v3393 = vpop.f32.mrb[0].mxu0
        %v3394 = vadd.f32 %v3297, %v3393
        %v3395 = vpop.f32.mrb[0].mxu0
        %3396 = vmatprep.mubr.bf16.mxu0 0
        %3397 = vmatmul.mubr.bf16.gmra.mrb[0].mxu0 %v2979
        %v3398 = vpop.f32.mrb[0].mxu0
        %v3399 = vadd.f32 %v3302, %v3398
        %v3400 = vpop.f32.mrb[0].mxu0
        %v3401 = vpop.f32.mrb[0].mxu0
        %v3402 = vadd.f32 %v3305, %v3401
        %v3403 = vpop.f32.mrb[0].mxu0
        %3404 = vmatprep.mubr.bf16.mxu0 0
        %3405 = vmatmul.mubr.bf16.gmra.mrb[0].mxu0 %v2982
        %v3406 = vpop.f32.mrb[0].mxu0
        %v3407 = vadd.f32 %v3310, %v3406
        %v3408 = vpop.f32.mrb[0].mxu0
        %v3409 = vpop.f32.mrb[0].mxu0
        %v3410 = vadd.f32 %v3313, %v3409
        %v3411 = vpop.f32.mrb[0].mxu0
        %3412 = vdwg.mxu0
        %v3413 = vadd.f32 %v3141, %v3145
        %v3414 = vadd.f32 %v3413, %v3151
        %v3415 = vadd.f32 %v3414, %v3155
        %v3416 = vadd.f32 %v3415, %v3161
        %v3417 = vadd.f32 %v3416, %v3165
        %v3418 = vadd.f32 %v3417, %v3171
        %v3419 = vadd.f32 %v3418, %v3175
        %v3420 = vadd.f32 %v3419, %v3181
        %v3421 = vadd.f32 %v3420, %v3185
        %v3422 = vadd.f32 %v3421, %v3191
        %v3423 = vadd.f32 %v3422, %v3195
        %v3424 = vadd.f32 %v3423, %v3201
        %v3425 = vadd.f32 %v3424, %v3205
        %v3426 = vadd.f32 %v3425, %v3211
        %v3427 = vadd.f32 %v3426, %v3215
        %v3428 = vrot.slane %v3427, 4
        %v3429 = vadd.f32 %v3427, %v3428
        %v3430 = vrot.slane %v3429, 2
        %v3431 = vadd.f32 %v3429, %v3430
        %v3432 = vrot.slane %v3431, 1
        %v3433 = vadd.f32 %v3431, %v3432
        %v3434 = vadd.f32 %v3143, %v3147
        %v3435 = vadd.f32 %v3434, %v3153
        %v3436 = vadd.f32 %v3435, %v3157
        %v3437 = vadd.f32 %v3436, %v3163
        %v3438 = vadd.f32 %v3437, %v3167
        %v3439 = vadd.f32 %v3438, %v3173
        %v3440 = vadd.f32 %v3439, %v3177
        %v3441 = vadd.f32 %v3440, %v3183
        %v3442 = vadd.f32 %v3441, %v3187
        %v3443 = vadd.f32 %v3442, %v3193
        %v3444 = vadd.f32 %v3443, %v3197
        %v3445 = vadd.f32 %v3444, %v3203
        %v3446 = vadd.f32 %v3445, %v3207
        %v3447 = vadd.f32 %v3446, %v3213
        %v3448 = vadd.f32 %v3447, %v3217
        %v3449 = vrot.slane %v3448, 4
        %v3450 = vadd.f32 %v3448, %v3449
        %v3451 = vrot.slane %v3450, 2
        %v3452 = vadd.f32 %v3450, %v3451
        %v3453 = vrot.slane %v3452, 1
        %v3454 = vadd.f32 %v3452, %v3453
        %v3455 = vsel %vm622, %v3351, 0.0
        %v3456 = vsel %vm622, %v3354, 0.0
        %v3457 = vadd.f32 %v3455, %v3456
        %v3458 = vsel %vm622, %v3359, 0.0
        %v3459 = vadd.f32 %v3457, %v3458
        %v3460 = vsel %vm622, %v3362, 0.0
        %v3461 = vadd.f32 %v3459, %v3460
        %v3462 = vsel %vm622, %v3367, 0.0
        %v3463 = vadd.f32 %v3461, %v3462
        %v3464 = vsel %vm622, %v3370, 0.0
        %v3465 = vadd.f32 %v3463, %v3464
        %v3466 = vsel %vm622, %v3375, 0.0
        %v3467 = vadd.f32 %v3465, %v3466
        %v3468 = vsel %vm622, %v3378, 0.0
        %v3469 = vadd.f32 %v3467, %v3468
        %v3470 = vsel %vm622, %v3383, 0.0
        %v3471 = vadd.f32 %v3469, %v3470
        %v3472 = vsel %vm622, %v3386, 0.0
        %v3473 = vadd.f32 %v3471, %v3472
        %v3474 = vsel %vm622, %v3391, 0.0
        %v3475 = vadd.f32 %v3473, %v3474
        %v3476 = vsel %vm622, %v3394, 0.0
        %v3477 = vadd.f32 %v3475, %v3476
        %v3478 = vsel %vm622, %v3399, 0.0
        %v3479 = vadd.f32 %v3477, %v3478
        %v3480 = vsel %vm622, %v3402, 0.0
        %v3481 = vadd.f32 %v3479, %v3480
        %v3482 = vsel %vm622, %v3407, 0.0
        %v3483 = vadd.f32 %v3481, %v3482
        %v3484 = vsel %vm622, %v3410, 0.0
        %v3485 = vadd.f32 %v3483, %v3484
        %v3486 = vrot.slane %v3485, 4
        %v3487 = vadd.f32 %v3485, %v3486
        %v3488 = vrot.slane %v3487, 2
        %v3489 = vadd.f32 %v3487, %v3488
        %v3490 = vrot.slane %v3489, 1
        %v3491 = vadd.f32 %v3489, %v3490
        %v3492 = vmul.f32 %v3433, 0.0078125
        %v3493 = vmul.f32 %v3454, 0.0078125
        %v3494 = vmul.f32 %v3491, 0.0078125
        %v3495 = vmul.f32 %v3141, %v3141
        %v3496 = vmul.f32 %v3143, %v3143
        %v3497 = vmul.f32 %v3351, %v3351
        %v3498 = vmul.f32 %v3145, %v3145
        %v3499 = vmul.f32 %v3147, %v3147
        %v3500 = vmul.f32 %v3354, %v3354
        %v3501 = vmul.f32 %v3151, %v3151
        %v3502 = vmul.f32 %v3153, %v3153
        %v3503 = vmul.f32 %v3359, %v3359
        %v3504 = vmul.f32 %v3155, %v3155
        %v3505 = vmul.f32 %v3157, %v3157
        %v3506 = vmul.f32 %v3362, %v3362
        %v3507 = vmul.f32 %v3161, %v3161
        %v3508 = vmul.f32 %v3163, %v3163
        %v3509 = vmul.f32 %v3367, %v3367
        %v3510 = vmul.f32 %v3165, %v3165
        %v3511 = vmul.f32 %v3167, %v3167
        %v3512 = vmul.f32 %v3370, %v3370
        %v3513 = vmul.f32 %v3171, %v3171
        %v3514 = vmul.f32 %v3173, %v3173
        %v3515 = vmul.f32 %v3375, %v3375
        %v3516 = vmul.f32 %v3175, %v3175
        %v3517 = vmul.f32 %v3177, %v3177
        %v3518 = vmul.f32 %v3378, %v3378
        %v3519 = vmul.f32 %v3181, %v3181
        %v3520 = vmul.f32 %v3183, %v3183
        %v3521 = vmul.f32 %v3383, %v3383
        %v3522 = vmul.f32 %v3185, %v3185
        %v3523 = vmul.f32 %v3187, %v3187
        %v3524 = vmul.f32 %v3386, %v3386
        %v3525 = vmul.f32 %v3191, %v3191
        %v3526 = vmul.f32 %v3193, %v3193
        %v3527 = vmul.f32 %v3391, %v3391
        %v3528 = vmul.f32 %v3195, %v3195
        %v3529 = vmul.f32 %v3197, %v3197
        %v3530 = vmul.f32 %v3394, %v3394
        %v3531 = vmul.f32 %v3201, %v3201
        %v3532 = vmul.f32 %v3203, %v3203
        %v3533 = vmul.f32 %v3399, %v3399
        %v3534 = vmul.f32 %v3205, %v3205
        %v3535 = vmul.f32 %v3207, %v3207
        %v3536 = vmul.f32 %v3402, %v3402
        %v3537 = vmul.f32 %v3211, %v3211
        %v3538 = vmul.f32 %v3213, %v3213
        %v3539 = vmul.f32 %v3407, %v3407
        %v3540 = vmul.f32 %v3215, %v3215
        %v3541 = vmul.f32 %v3217, %v3217
        %v3542 = vmul.f32 %v3410, %v3410
        %v3543 = vadd.f32 %v3495, %v3498
        %v3544 = vadd.f32 %v3543, %v3501
        %v3545 = vadd.f32 %v3544, %v3504
        %v3546 = vadd.f32 %v3545, %v3507
        %v3547 = vadd.f32 %v3546, %v3510
        %v3548 = vadd.f32 %v3547, %v3513
        %v3549 = vadd.f32 %v3548, %v3516
        %v3550 = vadd.f32 %v3549, %v3519
        %v3551 = vadd.f32 %v3550, %v3522
        %v3552 = vadd.f32 %v3551, %v3525
        %v3553 = vadd.f32 %v3552, %v3528
        %v3554 = vadd.f32 %v3553, %v3531
        %v3555 = vadd.f32 %v3554, %v3534
        %v3556 = vadd.f32 %v3555, %v3537
        %v3557 = vadd.f32 %v3556, %v3540
        %v3558 = vrot.slane %v3557, 4
        %v3559 = vadd.f32 %v3557, %v3558
        %v3560 = vrot.slane %v3559, 2
        %v3561 = vadd.f32 %v3559, %v3560
        %v3562 = vrot.slane %v3561, 1
        %v3563 = vadd.f32 %v3561, %v3562
        %v3564 = vadd.f32 %v3496, %v3499
        %v3565 = vadd.f32 %v3564, %v3502
        %v3566 = vadd.f32 %v3565, %v3505
        %v3567 = vadd.f32 %v3566, %v3508
        %v3568 = vadd.f32 %v3567, %v3511
        %v3569 = vadd.f32 %v3568, %v3514
        %v3570 = vadd.f32 %v3569, %v3517
        %v3571 = vadd.f32 %v3570, %v3520
        %v3572 = vadd.f32 %v3571, %v3523
        %v3573 = vadd.f32 %v3572, %v3526
        %v3574 = vadd.f32 %v3573, %v3529
        %v3575 = vadd.f32 %v3574, %v3532
        %v3576 = vadd.f32 %v3575, %v3535
        %v3577 = vadd.f32 %v3576, %v3538
        %v3578 = vadd.f32 %v3577, %v3541
        %v3579 = vrot.slane %v3578, 4
        %v3580 = vadd.f32 %v3578, %v3579
        %v3581 = vrot.slane %v3580, 2
        %v3582 = vadd.f32 %v3580, %v3581
        %v3583 = vrot.slane %v3582, 1
        %v3584 = vadd.f32 %v3582, %v3583
        %v3585 = vsel %vm622, %v3497, 0.0
        %v3586 = vsel %vm622, %v3500, 0.0
        %v3587 = vadd.f32 %v3585, %v3586
        %v3588 = vsel %vm622, %v3503, 0.0
        %v3589 = vadd.f32 %v3587, %v3588
        %v3590 = vsel %vm622, %v3506, 0.0
        %v3591 = vadd.f32 %v3589, %v3590
        %v3592 = vsel %vm622, %v3509, 0.0
        %v3593 = vadd.f32 %v3591, %v3592
        %v3594 = vsel %vm622, %v3512, 0.0
        %v3595 = vadd.f32 %v3593, %v3594
        %v3596 = vsel %vm622, %v3515, 0.0
        %v3597 = vadd.f32 %v3595, %v3596
        %v3598 = vsel %vm622, %v3518, 0.0
        %v3599 = vadd.f32 %v3597, %v3598
        %v3600 = vsel %vm622, %v3521, 0.0
        %v3601 = vadd.f32 %v3599, %v3600
        %v3602 = vsel %vm622, %v3524, 0.0
        %v3603 = vadd.f32 %v3601, %v3602
        %v3604 = vsel %vm622, %v3527, 0.0
        %v3605 = vadd.f32 %v3603, %v3604
        %v3606 = vsel %vm622, %v3530, 0.0
        %v3607 = vadd.f32 %v3605, %v3606
        %v3608 = vsel %vm622, %v3533, 0.0
        %v3609 = vadd.f32 %v3607, %v3608
        %v3610 = vsel %vm622, %v3536, 0.0
        %v3611 = vadd.f32 %v3609, %v3610
        %v3612 = vsel %vm622, %v3539, 0.0
        %v3613 = vadd.f32 %v3611, %v3612
        %v3614 = vsel %vm622, %v3542, 0.0
        %v3615 = vadd.f32 %v3613, %v3614
        %v3616 = vrot.slane %v3615, 4
        %v3617 = vadd.f32 %v3615, %v3616
        %v3618 = vrot.slane %v3617, 2
        %v3619 = vadd.f32 %v3617, %v3618
        %v3620 = vrot.slane %v3619, 1
        %v3621 = vadd.f32 %v3619, %v3620
        %v3622 = vmul.f32 %v3563, 0.0078125
        %v3623 = vmul.f32 %v3584, 0.0078125
        %v3624 = vmul.f32 %v3621, 0.0078125
        %v3625 = vmul.f32 %v3492, %v3492
        %v3626 = vmul.f32 %v3493, %v3493
        %v3627 = vmul.f32 %v3494, %v3494
        %v3628 = vsub.f32 %v3622, %v3625
        %v3629 = vsub.f32 %v3623, %v3626
        %v3630 = vsub.f32 %v3624, %v3627
        %v3631 = vadd.f32 %v3628, 1e-05
        %v3632 = vadd.f32 %v3629, 1e-05
        %v3633 = vadd.f32 %v3630, 1e-05
        %v3634 = vrsqrt.pop %v3631
        %v3635 = vrsqrt.pop %v3632
        %v3636 = vrsqrt.pop %v3633
        %v3640 = vcombine.low %v3634, %v3635
        %v3642 = vunpack.c.l.s4 1966171168
        %v3643 = vunpack.c.0.s8 %v3642
        %v3644 = vlaneseq
        %v3645 = vshrl.u32 %v3644, 7
        %v3646 = vsub.s32 %v3643, %v3645
        %v3647 = vrot.slane %v3640, %v3646
        %v3649 = vunpack.c.l.s4 1966171168
        %v3650 = vunpack.c.0.s8 %v3649
        %v3651 = vlaneseq
        %v3652 = vshrl.u32 %v3651, 7
        %v3653 = vsub.s32 %v3650, %v3652
        %v3654 = vrot.slane %v3636, %v3653
        %v3655 = vcombine.low %v3647, %v3654
        %v3657 = vunpack.c.l.s4 1966171168
        %v3658 = vunpack.c.0.s8 %v3657
        %v3659 = vlaneseq
        %v3660 = vshrl.u32 %v3659, 7
        %v3661 = vsub.s32 %v3658, %v3660
        %v3662 = vrot.slane %v3655, %v3661
        %v3664 = vmul.f32 %v2655, %v3662
        %v3666 = vlaneseq
        %v3667 = vshrl.u32 %v3666, 7
        %v3668 = vsub.s32 0, %v3667
        %v3669 = vrot.slane %v3664, %v3668
        %v3670 = vlaneseq
        %v3671 = vshrl.u32 %v3670, 7
        %v3672 = vsub.s32 1, %v3671
        %v3673 = vrot.slane %v3664, %v3672
        %v3674 = vlaneseq
        %v3675 = vshrl.u32 %v3674, 7
        %v3676 = vsub.s32 2, %v3675
        %v3677 = vrot.slane %v3664, %v3676
        %v3681 = vmul.f32 %v3492, %v3669
        %v3682 = vmul.f32 %v3493, %v3673
        %v3683 = vmul.f32 %v3494, %v3677
        %v3687 = vcombine.low %v3681, %v3682
        %v3689 = vunpack.c.l.s4 1966171168
        %v3690 = vunpack.c.0.s8 %v3689
        %v3691 = vlaneseq
        %v3692 = vshrl.u32 %v3691, 7
        %v3693 = vsub.s32 %v3690, %v3692
        %v3694 = vrot.slane %v3687, %v3693
        %v3696 = vunpack.c.l.s4 1966171168
        %v3697 = vunpack.c.0.s8 %v3696
        %v3698 = vlaneseq
        %v3699 = vshrl.u32 %v3698, 7
        %v3700 = vsub.s32 %v3697, %v3699
        %v3701 = vrot.slane %v3683, %v3700
        %v3702 = vcombine.low %v3694, %v3701
        %v3704 = vunpack.c.l.s4 1966171168
        %v3705 = vunpack.c.0.s8 %v3704
        %v3706 = vlaneseq
        %v3707 = vshrl.u32 %v3706, 7
        %v3708 = vsub.s32 %v3705, %v3707
        %v3709 = vrot.slane %v3702, %v3708
        %v3711 = vsub.f32 %v2657, %v3709
        %v3712 = vmul.f32 %v3141, %v3669
        %v3713 = vmul.f32 %v3143, %v3673
        %v3714 = vmul.f32 %v3351, %v3677
        %v3715 = vmul.f32 %v3145, %v3669
        %v3716 = vmul.f32 %v3147, %v3673
        %v3717 = vmul.f32 %v3354, %v3677
        %v3718 = vmul.f32 %v3151, %v3669
        %v3719 = vmul.f32 %v3153, %v3673
        %v3720 = vmul.f32 %v3359, %v3677
        %v3721 = vmul.f32 %v3155, %v3669
        %v3722 = vmul.f32 %v3157, %v3673
        %v3723 = vmul.f32 %v3362, %v3677
        %v3724 = vmul.f32 %v3161, %v3669
        %v3725 = vmul.f32 %v3163, %v3673
        %v3726 = vmul.f32 %v3367, %v3677
        %v3727 = vmul.f32 %v3165, %v3669
        %v3728 = vmul.f32 %v3167, %v3673
        %v3729 = vmul.f32 %v3370, %v3677
        %v3730 = vmul.f32 %v3171, %v3669
        %v3731 = vmul.f32 %v3173, %v3673
        %v3732 = vmul.f32 %v3375, %v3677
        %v3733 = vmul.f32 %v3175, %v3669
        %v3734 = vmul.f32 %v3177, %v3673
        %v3735 = vmul.f32 %v3378, %v3677
        %v3736 = vmul.f32 %v3181, %v3669
        %v3737 = vmul.f32 %v3183, %v3673
        %v3738 = vmul.f32 %v3383, %v3677
        %v3739 = vmul.f32 %v3185, %v3669
        %v3740 = vmul.f32 %v3187, %v3673
        %v3741 = vmul.f32 %v3386, %v3677
        %v3742 = vmul.f32 %v3191, %v3669
        %v3743 = vmul.f32 %v3193, %v3673
        %v3744 = vmul.f32 %v3391, %v3677
        %v3745 = vmul.f32 %v3195, %v3669
        %v3746 = vmul.f32 %v3197, %v3673
        %v3747 = vmul.f32 %v3394, %v3677
        %v3748 = vmul.f32 %v3201, %v3669
        %v3749 = vmul.f32 %v3203, %v3673
        %v3750 = vmul.f32 %v3399, %v3677
        %v3751 = vmul.f32 %v3205, %v3669
        %v3752 = vmul.f32 %v3207, %v3673
        %v3753 = vmul.f32 %v3402, %v3677
        %v3754 = vmul.f32 %v3211, %v3669
        %v3755 = vmul.f32 %v3213, %v3673
        %v3756 = vmul.f32 %v3407, %v3677
        %v3757 = vmul.f32 %v3215, %v3669
        %v3758 = vmul.f32 %v3217, %v3673
        %v3759 = vmul.f32 %v3410, %v3677
        %v3761 = vlaneseq
        %v3762 = vshrl.u32 %v3761, 7
        %v3763 = vsub.s32 0, %v3762
        %v3764 = vrot.slane %v3711, %v3763
        %v3765 = vlaneseq
        %v3766 = vshrl.u32 %v3765, 7
        %v3767 = vsub.s32 1, %v3766
        %v3768 = vrot.slane %v3711, %v3767
        %v3769 = vlaneseq
        %v3770 = vshrl.u32 %v3769, 7
        %v3771 = vsub.s32 2, %v3770
        %v3772 = vrot.slane %v3711, %v3771
        %v3776 = vadd.f32 %v3712, %v3764
        %v3777 = vadd.f32 %v3713, %v3768
        %v3778 = vadd.f32 %v3714, %v3772
        %v3779 = vadd.f32 %v3715, %v3764
        %v3780 = vadd.f32 %v3716, %v3768
        %v3781 = vadd.f32 %v3717, %v3772
        %v3782 = vadd.f32 %v3718, %v3764
        %v3783 = vadd.f32 %v3719, %v3768
        %v3784 = vadd.f32 %v3720, %v3772
        %v3785 = vadd.f32 %v3721, %v3764
        %v3786 = vadd.f32 %v3722, %v3768
        %v3787 = vadd.f32 %v3723, %v3772
        %v3788 = vadd.f32 %v3724, %v3764
        %v3789 = vadd.f32 %v3725, %v3768
        %v3790 = vadd.f32 %v3726, %v3772
        %v3791 = vadd.f32 %v3727, %v3764
        %v3792 = vadd.f32 %v3728, %v3768
        %v3793 = vadd.f32 %v3729, %v3772
        %v3794 = vadd.f32 %v3730, %v3764
        %v3795 = vadd.f32 %v3731, %v3768
        %v3796 = vadd.f32 %v3732, %v3772
        %v3797 = vadd.f32 %v3733, %v3764
        %v3798 = vadd.f32 %v3734, %v3768
        %v3799 = vadd.f32 %v3735, %v3772
        %v3800 = vadd.f32 %v3736, %v3764
        %v3801 = vadd.f32 %v3737, %v3768
        %v3802 = vadd.f32 %v3738, %v3772
        %v3803 = vadd.f32 %v3739, %v3764
        %v3804 = vadd.f32 %v3740, %v3768
        %v3805 = vadd.f32 %v3741, %v3772
        %v3806 = vadd.f32 %v3742, %v3764
        %v3807 = vadd.f32 %v3743, %v3768
        %v3808 = vadd.f32 %v3744, %v3772
        %v3809 = vadd.f32 %v3745, %v3764
        %v3810 = vadd.f32 %v3746, %v3768
        %v3811 = vadd.f32 %v3747, %v3772
        %v3812 = vadd.f32 %v3748, %v3764
        %v3813 = vadd.f32 %v3749, %v3768
        %v3814 = vadd.f32 %v3750, %v3772
        %v3815 = vadd.f32 %v3751, %v3764
        %v3816 = vadd.f32 %v3752, %v3768
        %v3817 = vadd.f32 %v3753, %v3772
        %v3818 = vadd.f32 %v3754, %v3764
        %v3819 = vadd.f32 %v3755, %v3768
        %v3820 = vadd.f32 %v3756, %v3772
        %v3821 = vadd.f32 %v3757, %v3764
        %v3822 = vadd.f32 %v3758, %v3768
        %v3823 = vadd.f32 %v3759, %v3772
        %vm3824 = vcmp.gt.f32.partialorder %v3776, 0.0
        %vm3825 = vcmp.gt.f32.partialorder %v3777, 0.0
        %vm3826 = vcmp.gt.f32.partialorder %v3778, 0.0
        %vm3827 = vcmp.gt.f32.partialorder %v3779, 0.0
        %vm3828 = vcmp.gt.f32.partialorder %v3780, 0.0
        %vm3829 = vcmp.gt.f32.partialorder %v3781, 0.0
        %vm3830 = vcmp.gt.f32.partialorder %v3782, 0.0
        %vm3831 = vcmp.gt.f32.partialorder %v3783, 0.0
        %vm3832 = vcmp.gt.f32.partialorder %v3784, 0.0
        %vm3833 = vcmp.gt.f32.partialorder %v3785, 0.0
        %vm3834 = vcmp.gt.f32.partialorder %v3786, 0.0
        %vm3835 = vcmp.gt.f32.partialorder %v3787, 0.0
        %vm3836 = vcmp.gt.f32.partialorder %v3788, 0.0
        %vm3837 = vcmp.gt.f32.partialorder %v3789, 0.0
        %vm3838 = vcmp.gt.f32.partialorder %v3790, 0.0
        %vm3839 = vcmp.gt.f32.partialorder %v3791, 0.0
        %vm3840 = vcmp.gt.f32.partialorder %v3792, 0.0
        %vm3841 = vcmp.gt.f32.partialorder %v3793, 0.0
        %vm3842 = vcmp.gt.f32.partialorder %v3794, 0.0
        %vm3843 = vcmp.gt.f32.partialorder %v3795, 0.0
        %vm3844 = vcmp.gt.f32.partialorder %v3796, 0.0
        %vm3845 = vcmp.gt.f32.partialorder %v3797, 0.0
        %vm3846 = vcmp.gt.f32.partialorder %v3798, 0.0
        %vm3847 = vcmp.gt.f32.partialorder %v3799, 0.0
        %vm3848 = vcmp.gt.f32.partialorder %v3800, 0.0
        %vm3849 = vcmp.gt.f32.partialorder %v3801, 0.0
        %vm3850 = vcmp.gt.f32.partialorder %v3802, 0.0
        %vm3851 = vcmp.gt.f32.partialorder %v3803, 0.0
        %vm3852 = vcmp.gt.f32.partialorder %v3804, 0.0
        %vm3853 = vcmp.gt.f32.partialorder %v3805, 0.0
        %vm3854 = vcmp.gt.f32.partialorder %v3806, 0.0
        %vm3855 = vcmp.gt.f32.partialorder %v3807, 0.0
        %vm3856 = vcmp.gt.f32.partialorder %v3808, 0.0
        %vm3857 = vcmp.gt.f32.partialorder %v3809, 0.0
        %vm3858 = vcmp.gt.f32.partialorder %v3810, 0.0
        %vm3859 = vcmp.gt.f32.partialorder %v3811, 0.0
        %vm3860 = vcmp.gt.f32.partialorder %v3812, 0.0
        %vm3861 = vcmp.gt.f32.partialorder %v3813, 0.0
        %vm3862 = vcmp.gt.f32.partialorder %v3814, 0.0
        %vm3863 = vcmp.gt.f32.partialorder %v3815, 0.0
        %vm3864 = vcmp.gt.f32.partialorder %v3816, 0.0
        %vm3865 = vcmp.gt.f32.partialorder %v3817, 0.0
        %vm3866 = vcmp.gt.f32.partialorder %v3818, 0.0
        %vm3867 = vcmp.gt.f32.partialorder %v3819, 0.0
        %vm3868 = vcmp.gt.f32.partialorder %v3820, 0.0
        %vm3869 = vcmp.gt.f32.partialorder %v3821, 0.0
        %vm3870 = vcmp.gt.f32.partialorder %v3822, 0.0
        %vm3871 = vcmp.gt.f32.partialorder %v3823, 0.0
        %v3872 = vstv %s2658
        %v3873 = vmul.f32 %v3872, %v3776
        %v3874 = vmul.f32 %v3872, %v3777
        %v3875 = vmul.f32 %v3872, %v3778
        %v3876 = vmul.f32 %v3872, %v3779
        %v3877 = vmul.f32 %v3872, %v3780
        %v3878 = vmul.f32 %v3872, %v3781
        %v3879 = vmul.f32 %v3872, %v3782
        %v3880 = vmul.f32 %v3872, %v3783
        %v3881 = vmul.f32 %v3872, %v3784
        %v3882 = vmul.f32 %v3872, %v3785
        %v3883 = vmul.f32 %v3872, %v3786
        %v3884 = vmul.f32 %v3872, %v3787
        %v3885 = vmul.f32 %v3872, %v3788
        %v3886 = vmul.f32 %v3872, %v3789
        %v3887 = vmul.f32 %v3872, %v3790
        %v3888 = vmul.f32 %v3872, %v3791
        %v3889 = vmul.f32 %v3872, %v3792
        %v3890 = vmul.f32 %v3872, %v3793
        %v3891 = vmul.f32 %v3872, %v3794
        %v3892 = vmul.f32 %v3872, %v3795
        %v3893 = vmul.f32 %v3872, %v3796
        %v3894 = vmul.f32 %v3872, %v3797
        %v3895 = vmul.f32 %v3872, %v3798
        %v3896 = vmul.f32 %v3872, %v3799
        %v3897 = vmul.f32 %v3872, %v3800
        %v3898 = vmul.f32 %v3872, %v3801
        %v3899 = vmul.f32 %v3872, %v3802
        %v3900 = vmul.f32 %v3872, %v3803
        %v3901 = vmul.f32 %v3872, %v3804
        %v3902 = vmul.f32 %v3872, %v3805
        %v3903 = vmul.f32 %v3872, %v3806
        %v3904 = vmul.f32 %v3872, %v3807
        %v3905 = vmul.f32 %v3872, %v3808
        %v3906 = vmul.f32 %v3872, %v3809
        %v3907 = vmul.f32 %v3872, %v3810
        %v3908 = vmul.f32 %v3872, %v3811
        %v3909 = vmul.f32 %v3872, %v3812
        %v3910 = vmul.f32 %v3872, %v3813
        %v3911 = vmul.f32 %v3872, %v3814
        %v3912 = vmul.f32 %v3872, %v3815
        %v3913 = vmul.f32 %v3872, %v3816
        %v3914 = vmul.f32 %v3872, %v3817
        %v3915 = vmul.f32 %v3872, %v3818
        %v3916 = vmul.f32 %v3872, %v3819
        %v3917 = vmul.f32 %v3872, %v3820
        %v3918 = vmul.f32 %v3872, %v3821
        %v3919 = vmul.f32 %v3872, %v3822
        %v3920 = vmul.f32 %v3872, %v3823
        %v3921 = vsel %vm3824, %v3776, %v3873
        %v3922 = vsel %vm3825, %v3777, %v3874
        %v3923 = vsel %vm3826, %v3778, %v3875
        %v3924 = vsel %vm3827, %v3779, %v3876
        %v3925 = vsel %vm3828, %v3780, %v3877
        %v3926 = vsel %vm3829, %v3781, %v3878
        %v3927 = vsel %vm3830, %v3782, %v3879
        %v3928 = vsel %vm3831, %v3783, %v3880
        %v3929 = vsel %vm3832, %v3784, %v3881
        %v3930 = vsel %vm3833, %v3785, %v3882
        %v3931 = vsel %vm3834, %v3786, %v3883
        %v3932 = vsel %vm3835, %v3787, %v3884
        %v3933 = vsel %vm3836, %v3788, %v3885
        %v3934 = vsel %vm3837, %v3789, %v3886
        %v3935 = vsel %vm3838, %v3790, %v3887
        %v3936 = vsel %vm3839, %v3791, %v3888
        %v3937 = vsel %vm3840, %v3792, %v3889
        %v3938 = vsel %vm3841, %v3793, %v3890
        %v3939 = vsel %vm3842, %v3794, %v3891
        %v3940 = vsel %vm3843, %v3795, %v3892
        %v3941 = vsel %vm3844, %v3796, %v3893
        %v3942 = vsel %vm3845, %v3797, %v3894
        %v3943 = vsel %vm3846, %v3798, %v3895
        %v3944 = vsel %vm3847, %v3799, %v3896
        %v3945 = vsel %vm3848, %v3800, %v3897
        %v3946 = vsel %vm3849, %v3801, %v3898
        %v3947 = vsel %vm3850, %v3802, %v3899
        %v3948 = vsel %vm3851, %v3803, %v3900
        %v3949 = vsel %vm3852, %v3804, %v3901
        %v3950 = vsel %vm3853, %v3805, %v3902
        %v3951 = vsel %vm3854, %v3806, %v3903
        %v3952 = vsel %vm3855, %v3807, %v3904
        %v3953 = vsel %vm3856, %v3808, %v3905
        %v3954 = vsel %vm3857, %v3809, %v3906
        %v3955 = vsel %vm3858, %v3810, %v3907
        %v3956 = vsel %vm3859, %v3811, %v3908
        %v3957 = vsel %vm3860, %v3812, %v3909
        %v3958 = vsel %vm3861, %v3813, %v3910
        %v3959 = vsel %vm3862, %v3814, %v3911
        %v3960 = vsel %vm3863, %v3815, %v3912
        %v3961 = vsel %vm3864, %v3816, %v3913
        %v3962 = vsel %vm3865, %v3817, %v3914
        %v3963 = vsel %vm3866, %v3818, %v3915
        %v3964 = vsel %vm3867, %v3819, %v3916
        %v3965 = vsel %vm3868, %v3820, %v3917
        %v3966 = vsel %vm3869, %v3821, %v3918
        %v3967 = vsel %vm3870, %v3822, %v3919
        %v3968 = vsel %vm3871, %v3823, %v3920
        %v3969 = vpack.c.bf16 %v3924, %v3921
        %v3970 = vpack.c.bf16 %v3925, %v3922
        %v3971 = vpack.c.bf16 %v3926, %v3923
        %v3972 = vpack.c.bf16 %v3930, %v3927
        %v3973 = vpack.c.bf16 %v3931, %v3928
        %v3974 = vpack.c.bf16 %v3932, %v3929
        %v3975 = vpack.c.bf16 %v3936, %v3933
        %v3976 = vpack.c.bf16 %v3937, %v3934
        %v3977 = vpack.c.bf16 %v3938, %v3935
        %v3978 = vpack.c.bf16 %v3942, %v3939
        %v3979 = vpack.c.bf16 %v3943, %v3940
        %v3980 = vpack.c.bf16 %v3944, %v3941
        %v3981 = vpack.c.bf16 %v3948, %v3945
        %v3982 = vpack.c.bf16 %v3949, %v3946
        %v3983 = vpack.c.bf16 %v3950, %v3947
        %v3984 = vpack.c.bf16 %v3954, %v3951
        %v3985 = vpack.c.bf16 %v3955, %v3952
        %v3986 = vpack.c.bf16 %v3956, %v3953
        %v3987 = vpack.c.bf16 %v3960, %v3957
        %v3988 = vpack.c.bf16 %v3961, %v3958
        %v3989 = vpack.c.bf16 %v3962, %v3959
        %v3990 = vpack.c.bf16 %v3966, %v3963
        %v3991 = vpack.c.bf16 %v3967, %v3964
        %v3992 = vpack.c.bf16 %v3968, %v3965
        %v3993 = vld [vmem:[%s4] sm:$0xf]
        %v3994 = vld [vmem:[%s4 + $0x4] sm:$0xf]
        %v3995 = vld [vmem:[%s4 + $0x8] sm:$0xf]
        %v3996 = vld [vmem:[%s4 + $0xc] sm:$0xf]
        %v3997 = vld [vmem:[%s4 + $0x10] sm:$0xf]
        %v3998 = vld [vmem:[%s4 + $0x14] sm:$0xf]
        %v3999 = vld [vmem:[%s4 + $0x18] sm:$0xf]
        %v4000 = vld [vmem:[%s4 + $0x1c] sm:$0xf]
        %v4001 = vld [vmem:[%s4 + $0x20] sm:$0xf]
        %v4002 = vld [vmem:[%s4 + $0x24] sm:$0xf]
        %v4003 = vld [vmem:[%s4 + $0x28] sm:$0xf]
        %v4004 = vld [vmem:[%s4 + $0x2c] sm:$0xf]
        %v4005 = vld [vmem:[%s4 + $0x30] sm:$0xf]
        %v4006 = vld [vmem:[%s4 + $0x34] sm:$0xf]
        %v4007 = vld [vmem:[%s4 + $0x38] sm:$0xf]
        %v4008 = vld [vmem:[%s4 + $0x3c] sm:$0xf]
        %v4009 = vld [vmem:[%s4 + $0x40] sm:$0xf]
        %v4010 = vld [vmem:[%s4 + $0x44] sm:$0xf]
        %v4011 = vld [vmem:[%s4 + $0x48] sm:$0xf]
        %v4012 = vld [vmem:[%s4 + $0x4c] sm:$0xf]
        %v4013 = vld [vmem:[%s4 + $0x50] sm:$0xf]
        %v4014 = vld [vmem:[%s4 + $0x54] sm:$0xf]
        %v4015 = vld [vmem:[%s4 + $0x58] sm:$0xf]
        %v4016 = vld [vmem:[%s4 + $0x5c] sm:$0xf]
        %v4017 = vld [vmem:[%s4 + $0x60] sm:$0xf]
        %v4018 = vld [vmem:[%s4 + $0x64] sm:$0xf]
        %v4019 = vld [vmem:[%s4 + $0x68] sm:$0xf]
        %v4020 = vld [vmem:[%s4 + $0x6c] sm:$0xf]
        %v4021 = vld [vmem:[%s4 + $0x70] sm:$0xf]
        %v4022 = vld [vmem:[%s4 + $0x74] sm:$0xf]
        %v4023 = vld [vmem:[%s4 + $0x78] sm:$0xf]
        %v4024 = vld [vmem:[%s4 + $0x7c] sm:$0xf]
        %v4025 = vld [vmem:[%s4 + $0x80] sm:$0xf]
        %v4026 = vld [vmem:[%s4 + $0x84] sm:$0xf]
        %v4027 = vld [vmem:[%s4 + $0x88] sm:$0xf]
        %v4028 = vld [vmem:[%s4 + $0x8c] sm:$0xf]
        %v4029 = vld [vmem:[%s4 + $0x90] sm:$0xf]
        %v4030 = vld [vmem:[%s4 + $0x94] sm:$0x3]
        %v4031 = vld [vmem:[%s6] sm:$0x1]
        %v4032 = vld [vmem:[%s6 + $0x1] sm:$0x1]
        %s4033 = sld [smem:[#allocation2 + $0x3]]
        %v4072 = vunpack.c.l.b16 %v3993
        %v4073 = vunpack.c.l.b16 %v3994
        %v4074 = vunpack.c.l.b16 %v3995
        %v4075 = vunpack.c.l.b16 %v3996
        %v4076 = vunpack.c.l.b16 %v3997
        %v4077 = vunpack.c.l.b16 %v3998
        %v4078 = vunpack.c.l.b16 %v3999
        %v4079 = vunpack.c.l.b16 %v4000
        %v4080 = vunpack.c.l.b16 %v4001
        %v4081 = vunpack.c.l.b16 %v4002
        %v4082 = vunpack.c.l.b16 %v4003
        %v4083 = vunpack.c.l.b16 %v4004
        %v4084 = vunpack.c.l.b16 %v4005
        %v4085 = vunpack.c.l.b16 %v4006
        %v4086 = vunpack.c.l.b16 %v4007
        %v4087 = vunpack.c.l.b16 %v4008
        %v4088 = vunpack.c.l.b16 %v4009
        %v4089 = vunpack.c.l.b16 %v4010
        %v4090 = vunpack.c.l.b16 %v4011
        %v4091 = vunpack.c.l.b16 %v4012
        %v4092 = vunpack.c.l.b16 %v4013
        %v4093 = vunpack.c.l.b16 %v4014
        %v4094 = vunpack.c.l.b16 %v4015
        %v4095 = vunpack.c.l.b16 %v4016
        %v4096 = vunpack.c.l.b16 %v4017
        %v4097 = vunpack.c.l.b16 %v4018
        %v4098 = vunpack.c.l.b16 %v4019
        %v4099 = vunpack.c.l.b16 %v4020
        %v4100 = vunpack.c.l.b16 %v4021
        %v4101 = vunpack.c.l.b16 %v4022
        %v4102 = vunpack.c.l.b16 %v4023
        %v4103 = vunpack.c.l.b16 %v4024
        %v4104 = vunpack.c.l.b16 %v4025
        %v4105 = vunpack.c.l.b16 %v4026
        %v4106 = vunpack.c.l.b16 %v4027
        %v4107 = vunpack.c.l.b16 %v4028
        %v4108 = vunpack.c.l.b16 %v4029
        %v4109 = vunpack.c.l.b16 %v4030
        %v4110 = vpack.c.b16 %v4073, %v4072
        %v4111 = vpack.c.b16 %v4075, %v4074
        %v4112 = vpack.c.b16 %v4077, %v4076
        %v4113 = vpack.c.b16 %v4079, %v4078
        %v4114 = vpack.c.b16 %v4081, %v4080
        %v4115 = vpack.c.b16 %v4083, %v4082
        %v4116 = vpack.c.b16 %v4085, %v4084
        %v4117 = vpack.c.b16 %v4087, %v4086
        %v4118 = vpack.c.b16 %v4089, %v4088
        %v4119 = vpack.c.b16 %v4091, %v4090
        %v4120 = vpack.c.b16 %v4093, %v4092
        %v4121 = vpack.c.b16 %v4095, %v4094
        %v4122 = vpack.c.b16 %v4097, %v4096
        %v4123 = vpack.c.b16 %v4099, %v4098
        %v4124 = vpack.c.b16 %v4101, %v4100
        %v4125 = vpack.c.b16 %v4103, %v4102
        %v4126 = vpack.c.b16 %v4105, %v4104
        %v4127 = vpack.c.b16 %v4107, %v4106
        %v4128 = vpack.c.b16 %v4109, %v4108
        %v4148 = vsel %vm622, %v3971, 0
        %v4151 = vsel %vm622, %v3974, 0
        %v4154 = vsel %vm622, %v3977, 0
        %v4157 = vsel %vm622, %v3980, 0
        %v4160 = vsel %vm622, %v3983, 0
        %v4163 = vsel %vm622, %v3986, 0
        %v4166 = vsel %vm622, %v3989, 0
        %v4169 = vsel %vm622, %v3992, 0
        %v4172 = vsel %vm1567, %v4128, 0
        %4174 = vmatprep.subr.bf16.mxu0 0
        %4175 = vmatpush1.bf16.msra.mxu0 %v4110
        %4176 = vmatprep.subr.bf16.mxu0 0
        %4177 = vmatpush1.bf16.msra.mxu0 %v4111
        %4178 = vmatprep.subr.bf16.mxu0 0
        %4179 = vmatpush1.bf16.msra.mxu0 %v4112
        %4180 = vmatprep.subr.bf16.mxu0 0
        %4181 = vmatpush1.bf16.msra.mxu0 %v4113
        %4182 = vmatprep.subr.bf16.mxu0 0
        %4183 = vmatpush1.bf16.msra.mxu0 %v4114
        %4184 = vmatprep.subr.bf16.mxu0 0
        %4185 = vmatpush1.bf16.msra.mxu0 %v4115
        %4186 = vmatprep.subr.bf16.mxu0 0
        %4187 = vmatpush1.bf16.msra.mxu0 %v4116
        %4188 = vmatprep.subr.bf16.mxu0 0
        %4189 = vmatpush1.bf16.msra.mxu0 %v4117
        %4190 = vmatprep.subr.bf16.mxu0 0
        %4191 = vmatpush1.bf16.msra.mxu0 %v4118
        %4192 = vmatprep.subr.bf16.mxu0 0
        %4193 = vmatpush1.bf16.msra.mxu0 %v4119
        %4194 = vmatprep.subr.bf16.mxu0 0
        %4195 = vmatpush1.bf16.msra.mxu0 %v4120
        %4196 = vmatprep.subr.bf16.mxu0 0
        %4197 = vmatpush1.bf16.msra.mxu0 %v4121
        %4198 = vmatprep.subr.bf16.mxu0 0
        %4199 = vmatpush1.bf16.msra.mxu0 %v4122
        %4200 = vmatprep.subr.bf16.mxu0 0
        %4201 = vmatpush1.bf16.msra.mxu0 %v4123
        %4202 = vmatprep.subr.bf16.mxu0 0
        %4203 = vmatpush1.bf16.msra.mxu0 %v4124
        %4204 = vmatprep.subr.bf16.mxu0 0
        %4205 = vmatpush1.bf16.msra.mxu0 %v4125
        %4206 = vmatprep.mubr.bf16.mxu0 %v3970
        %4207 = vmatmul.mubr.bf16.gmra.mrb[0].mxu0 %v3969
        %v4208 = vpop.f32.mrb[0].mxu0
        %v4209 = vadd.f32 0.0, %v4208
        %v4210 = vpop.f32.mrb[0].mxu0
        %v4211 = vpop.f32.mrb[0].mxu0
        %v4212 = vadd.f32 0.0, %v4211
        %v4213 = vpop.f32.mrb[0].mxu0
        %4214 = vmatprep.mubr.bf16.mxu0 %v3973
        %4215 = vmatmul.mubr.bf16.gmra.mrb[0].mxu0 %v3972
        %v4216 = vpop.f32.mrb[0].mxu0
        %v4217 = vadd.f32 0.0, %v4216
        %v4218 = vpop.f32.mrb[0].mxu0
        %v4219 = vpop.f32.mrb[0].mxu0
        %v4220 = vadd.f32 0.0, %v4219
        %v4221 = vpop.f32.mrb[0].mxu0
        %4222 = vmatprep.mubr.bf16.mxu0 %v3976
        %4223 = vmatmul.mubr.bf16.gmra.mrb[0].mxu0 %v3975
        %v4224 = vpop.f32.mrb[0].mxu0
        %v4225 = vadd.f32 0.0, %v4224
        %v4226 = vpop.f32.mrb[0].mxu0
        %v4227 = vpop.f32.mrb[0].mxu0
        %v4228 = vadd.f32 0.0, %v4227
        %v4229 = vpop.f32.mrb[0].mxu0
        %4230 = vmatprep.mubr.bf16.mxu0 %v3979
        %4231 = vmatmul.mubr.bf16.gmra.mrb[0].mxu0 %v3978
        %v4232 = vpop.f32.mrb[0].mxu0
        %v4233 = vadd.f32 0.0, %v4232
        %v4234 = vpop.f32.mrb[0].mxu0
        %v4235 = vpop.f32.mrb[0].mxu0
        %v4236 = vadd.f32 0.0, %v4235
        %v4237 = vpop.f32.mrb[0].mxu0
        %4238 = vmatprep.mubr.bf16.mxu0 %v3982
        %4239 = vmatmul.mubr.bf16.gmra.mrb[0].mxu0 %v3981
        %v4240 = vpop.f32.mrb[0].mxu0
        %v4241 = vadd.f32 0.0, %v4240
        %v4242 = vpop.f32.mrb[0].mxu0
        %v4243 = vpop.f32.mrb[0].mxu0
        %v4244 = vadd.f32 0.0, %v4243
        %v4245 = vpop.f32.mrb[0].mxu0
        %4246 = vmatprep.mubr.bf16.mxu0 %v3985
        %4247 = vmatmul.mubr.bf16.gmra.mrb[0].mxu0 %v3984
        %v4248 = vpop.f32.mrb[0].mxu0
        %v4249 = vadd.f32 0.0, %v4248
        %v4250 = vpop.f32.mrb[0].mxu0
        %v4251 = vpop.f32.mrb[0].mxu0
        %v4252 = vadd.f32 0.0, %v4251
        %v4253 = vpop.f32.mrb[0].mxu0
        %4254 = vmatprep.mubr.bf16.mxu0 %v3988
        %4255 = vmatmul.mubr.bf16.gmra.mrb[0].mxu0 %v3987
        %v4256 = vpop.f32.mrb[0].mxu0
        %v4257 = vadd.f32 0.0, %v4256
        %v4258 = vpop.f32.mrb[0].mxu0
        %v4259 = vpop.f32.mrb[0].mxu0
        %v4260 = vadd.f32 0.0, %v4259
        %v4261 = vpop.f32.mrb[0].mxu0
        %4262 = vmatprep.mubr.bf16.mxu0 %v3991
        %4263 = vmatmul.mubr.bf16.gmra.mrb[0].mxu0 %v3990
        %v4264 = vpop.f32.mrb[0].mxu0
        %v4265 = vadd.f32 0.0, %v4264
        %v4266 = vpop.f32.mrb[0].mxu0
        %v4267 = vpop.f32.mrb[0].mxu0
        %v4268 = vadd.f32 0.0, %v4267
        %v4269 = vpop.f32.mrb[0].mxu0
        %4270 = vdwg.mxu0
        %4271 = vmatprep.subr.bf16.mxu0 0
        %4272 = vmatpush1.bf16.msra.mxu0 %v4126
        %4273 = vmatprep.subr.bf16.mxu0 0
        %4274 = vmatpush1.bf16.msra.mxu0 %v4127
        %4275 = vmatprep.subr.bf16.mxu0 0
        %4276 = vmatpush1.bf16.msra.mxu0 %v4172
        %4277 = vmatprep.subr.bf16.mxu0 0
        %4278 = vmatpush1.bf16.msra.mxu0 0
        %4279 = vmatprep.subr.bf16.mxu0 0
        %4280 = vmatpush1.bf16.msra.mxu0 0
        %4281 = vmatprep.subr.bf16.mxu0 0
        %4282 = vmatpush1.bf16.msra.mxu0 0
        %4283 = vmatprep.subr.bf16.mxu0 0
        %4284 = vmatpush1.bf16.msra.mxu0 0
        %4285 = vmatprep.subr.bf16.mxu0 0
        %4286 = vmatpush1.bf16.msra.mxu0 0
        %4287 = vmatprep.subr.bf16.mxu0 0
        %4288 = vmatpush1.bf16.msra.mxu0 0
        %4289 = vmatprep.subr.bf16.mxu0 0
        %4290 = vmatpush1.bf16.msra.mxu0 0
        %4291 = vmatprep.subr.bf16.mxu0 0
        %4292 = vmatpush1.bf16.msra.mxu0 0
        %4293 = vmatprep.subr.bf16.mxu0 0
        %4294 = vmatpush1.bf16.msra.mxu0 0
        %4295 = vmatprep.subr.bf16.mxu0 0
        %4296 = vmatpush1.bf16.msra.mxu0 0
        %4297 = vmatprep.subr.bf16.mxu0 0
        %4298 = vmatpush1.bf16.msra.mxu0 0
        %4299 = vmatprep.subr.bf16.mxu0 0
        %4300 = vmatpush1.bf16.msra.mxu0 0
        %4301 = vmatprep.subr.bf16.mxu0 0
        %4302 = vmatpush1.bf16.msra.mxu0 0
        %4303 = vmatprep.mubr.bf16.mxu0 0
        %4304 = vmatmul.mubr.bf16.gmra.mrb[0].mxu0 %v4148
        %v4305 = vpop.f32.mrb[0].mxu0
        %v4306 = vadd.f32 %v4209, %v4305
        %v4307 = vpop.f32.mrb[0].mxu0
        %v4308 = vpop.f32.mrb[0].mxu0
        %v4309 = vadd.f32 %v4212, %v4308
        %v4310 = vpop.f32.mrb[0].mxu0
        %4311 = vmatprep.mubr.bf16.mxu0 0
        %4312 = vmatmul.mubr.bf16.gmra.mrb[0].mxu0 %v4151
        %v4313 = vpop.f32.mrb[0].mxu0
        %v4314 = vadd.f32 %v4217, %v4313
        %v4315 = vpop.f32.mrb[0].mxu0
        %v4316 = vpop.f32.mrb[0].mxu0
        %v4317 = vadd.f32 %v4220, %v4316
        %v4318 = vpop.f32.mrb[0].mxu0
        %4319 = vmatprep.mubr.bf16.mxu0 0
        %4320 = vmatmul.mubr.bf16.gmra.mrb[0].mxu0 %v4154
        %v4321 = vpop.f32.mrb[0].mxu0
        %v4322 = vadd.f32 %v4225, %v4321
        %v4323 = vpop.f32.mrb[0].mxu0
        %v4324 = vpop.f32.mrb[0].mxu0
        %v4325 = vadd.f32 %v4228, %v4324
        %v4326 = vpop.f32.mrb[0].mxu0
        %4327 = vmatprep.mubr.bf16.mxu0 0
        %4328 = vmatmul.mubr.bf16.gmra.mrb[0].mxu0 %v4157
        %v4329 = vpop.f32.mrb[0].mxu0
        %v4330 = vadd.f32 %v4233, %v4329
        %v4331 = vpop.f32.mrb[0].mxu0
        %v4332 = vpop.f32.mrb[0].mxu0
        %v4333 = vadd.f32 %v4236, %v4332
        %v4334 = vpop.f32.mrb[0].mxu0
        %4335 = vmatprep.mubr.bf16.mxu0 0
        %4336 = vmatmul.mubr.bf16.gmra.mrb[0].mxu0 %v4160
        %v4337 = vpop.f32.mrb[0].mxu0
        %v4338 = vadd.f32 %v4241, %v4337
        %v4339 = vpop.f32.mrb[0].mxu0
        %v4340 = vpop.f32.mrb[0].mxu0
        %v4341 = vadd.f32 %v4244, %v4340
        %v4342 = vpop.f32.mrb[0].mxu0
        %4343 = vmatprep.mubr.bf16.mxu0 0
        %4344 = vmatmul.mubr.bf16.gmra.mrb[0].mxu0 %v4163
        %v4345 = vpop.f32.mrb[0].mxu0
        %v4346 = vadd.f32 %v4249, %v4345
        %v4347 = vpop.f32.mrb[0].mxu0
        %v4348 = vpop.f32.mrb[0].mxu0
        %v4349 = vadd.f32 %v4252, %v4348
        %v4350 = vpop.f32.mrb[0].mxu0
        %4351 = vmatprep.mubr.bf16.mxu0 0
        %4352 = vmatmul.mubr.bf16.gmra.mrb[0].mxu0 %v4166
        %v4353 = vpop.f32.mrb[0].mxu0
        %v4354 = vadd.f32 %v4257, %v4353
        %v4355 = vpop.f32.mrb[0].mxu0
        %v4356 = vpop.f32.mrb[0].mxu0
        %v4357 = vadd.f32 %v4260, %v4356
        %v4358 = vpop.f32.mrb[0].mxu0
        %4359 = vmatprep.mubr.bf16.mxu0 0
        %4360 = vmatmul.mubr.bf16.gmra.mrb[0].mxu0 %v4169
        %v4361 = vpop.f32.mrb[0].mxu0
        %v4362 = vadd.f32 %v4265, %v4361
        %v4363 = vpop.f32.mrb[0].mxu0
        %v4364 = vpop.f32.mrb[0].mxu0
        %v4365 = vadd.f32 %v4268, %v4364
        %v4366 = vpop.f32.mrb[0].mxu0
        %4367 = vdwg.mxu0
        %vm4368 = vcmask 31744
        %v4369 = vsel %vm4368, %v4306, 0.0
        %v4370 = vsel %vm4368, %v4309, 0.0
        %v4371 = vadd.f32 %v4369, %v4370
        %v4372 = vsel %vm4368, %v4314, 0.0
        %v4373 = vadd.f32 %v4371, %v4372
        %v4374 = vsel %vm4368, %v4317, 0.0
        %v4375 = vadd.f32 %v4373, %v4374
        %v4376 = vsel %vm4368, %v4322, 0.0
        %v4377 = vadd.f32 %v4375, %v4376
        %v4378 = vsel %vm4368, %v4325, 0.0
        %v4379 = vadd.f32 %v4377, %v4378
        %v4380 = vsel %vm4368, %v4330, 0.0
        %v4381 = vadd.f32 %v4379, %v4380
        %v4382 = vsel %vm4368, %v4333, 0.0
        %v4383 = vadd.f32 %v4381, %v4382
        %v4384 = vsel %vm4368, %v4338, 0.0
        %v4385 = vadd.f32 %v4383, %v4384
        %v4386 = vsel %vm4368, %v4341, 0.0
        %v4387 = vadd.f32 %v4385, %v4386
        %v4388 = vsel %vm4368, %v4346, 0.0
        %v4389 = vadd.f32 %v4387, %v4388
        %v4390 = vsel %vm4368, %v4349, 0.0
        %v4391 = vadd.f32 %v4389, %v4390
        %v4392 = vsel %vm4368, %v4354, 0.0
        %v4393 = vadd.f32 %v4391, %v4392
        %v4394 = vsel %vm4368, %v4357, 0.0
        %v4395 = vadd.f32 %v4393, %v4394
        %v4396 = vsel %vm4368, %v4362, 0.0
        %v4397 = vadd.f32 %v4395, %v4396
        %v4398 = vsel %vm4368, %v4365, 0.0
        %v4399 = vadd.f32 %v4397, %v4398
        %v4400 = vrot.slane %v4399, 4
        %v4401 = vadd.f32 %v4399, %v4400
        %v4402 = vrot.slane %v4401, 2
        %v4403 = vadd.f32 %v4401, %v4402
        %v4404 = vrot.slane %v4403, 1
        %v4405 = vadd.f32 %v4403, %v4404
        %v4406 = vmul.f32 %v4405, 0.0078125
        %v4407 = vmul.f32 %v4306, %v4306
        %v4408 = vmul.f32 %v4309, %v4309
        %v4409 = vmul.f32 %v4314, %v4314
        %v4410 = vmul.f32 %v4317, %v4317
        %v4411 = vmul.f32 %v4322, %v4322
        %v4412 = vmul.f32 %v4325, %v4325
        %v4413 = vmul.f32 %v4330, %v4330
        %v4414 = vmul.f32 %v4333, %v4333
        %v4415 = vmul.f32 %v4338, %v4338
        %v4416 = vmul.f32 %v4341, %v4341
        %v4417 = vmul.f32 %v4346, %v4346
        %v4418 = vmul.f32 %v4349, %v4349
        %v4419 = vmul.f32 %v4354, %v4354
        %v4420 = vmul.f32 %v4357, %v4357
        %v4421 = vmul.f32 %v4362, %v4362
        %v4422 = vmul.f32 %v4365, %v4365
        %v4423 = vsel %vm4368, %v4407, 0.0
        %v4424 = vsel %vm4368, %v4408, 0.0
        %v4425 = vadd.f32 %v4423, %v4424
        %v4426 = vsel %vm4368, %v4409, 0.0
        %v4427 = vadd.f32 %v4425, %v4426
        %v4428 = vsel %vm4368, %v4410, 0.0
        %v4429 = vadd.f32 %v4427, %v4428
        %v4430 = vsel %vm4368, %v4411, 0.0
        %v4431 = vadd.f32 %v4429, %v4430
        %v4432 = vsel %vm4368, %v4412, 0.0
        %v4433 = vadd.f32 %v4431, %v4432
        %v4434 = vsel %vm4368, %v4413, 0.0
        %v4435 = vadd.f32 %v4433, %v4434
        %v4436 = vsel %vm4368, %v4414, 0.0
        %v4437 = vadd.f32 %v4435, %v4436
        %v4438 = vsel %vm4368, %v4415, 0.0
        %v4439 = vadd.f32 %v4437, %v4438
        %v4440 = vsel %vm4368, %v4416, 0.0
        %v4441 = vadd.f32 %v4439, %v4440
        %v4442 = vsel %vm4368, %v4417, 0.0
        %v4443 = vadd.f32 %v4441, %v4442
        %v4444 = vsel %vm4368, %v4418, 0.0
        %v4445 = vadd.f32 %v4443, %v4444
        %v4446 = vsel %vm4368, %v4419, 0.0
        %v4447 = vadd.f32 %v4445, %v4446
        %v4448 = vsel %vm4368, %v4420, 0.0
        %v4449 = vadd.f32 %v4447, %v4448
        %v4450 = vsel %vm4368, %v4421, 0.0
        %v4451 = vadd.f32 %v4449, %v4450
        %v4452 = vsel %vm4368, %v4422, 0.0
        %v4453 = vadd.f32 %v4451, %v4452
        %v4454 = vrot.slane %v4453, 4
        %v4455 = vadd.f32 %v4453, %v4454
        %v4456 = vrot.slane %v4455, 2
        %v4457 = vadd.f32 %v4455, %v4456
        %v4458 = vrot.slane %v4457, 1
        %v4459 = vadd.f32 %v4457, %v4458
        %v4460 = vmul.f32 %v4459, 0.0078125
        %v4461 = vmul.f32 %v4406, %v4406
        %v4462 = vsub.f32 %v4460, %v4461
        %v4463 = vadd.f32 %v4462, 1e-05
        %v4464 = vrsqrt.pop %v4463
        %v4465 = vmul.f32 %v4031, %v4464
        %v4466 = vmul.f32 %v4406, %v4465
        %v4467 = vsub.f32 %v4032, %v4466
        %v4468 = vlaneseq
        %v4469 = vshrl.u32 %v4468, 7
        %v4470 = vsub.s32 0, %v4469
        %v4471 = vrot.slane %v4465, %v4470
        %v4472 = vmul.f32 %v4306, %v4471
        %v4473 = vmul.f32 %v4309, %v4471
        %v4474 = vmul.f32 %v4314, %v4471
        %v4475 = vmul.f32 %v4317, %v4471
        %v4476 = vmul.f32 %v4322, %v4471
        %v4477 = vmul.f32 %v4325, %v4471
        %v4478 = vmul.f32 %v4330, %v4471
        %v4479 = vmul.f32 %v4333, %v4471
        %v4480 = vmul.f32 %v4338, %v4471
        %v4481 = vmul.f32 %v4341, %v4471
        %v4482 = vmul.f32 %v4346, %v4471
        %v4483 = vmul.f32 %v4349, %v4471
        %v4484 = vmul.f32 %v4354, %v4471
        %v4485 = vmul.f32 %v4357, %v4471
        %v4486 = vmul.f32 %v4362, %v4471
        %v4487 = vmul.f32 %v4365, %v4471
        %v4488 = vlaneseq
        %v4489 = vshrl.u32 %v4488, 7
        %v4490 = vsub.s32 0, %v4489
        %v4491 = vrot.slane %v4467, %v4490
        %v4492 = vadd.f32 %v4472, %v4491
        %v4493 = vadd.f32 %v4473, %v4491
        %v4494 = vadd.f32 %v4474, %v4491
        %v4495 = vadd.f32 %v4475, %v4491
        %v4496 = vadd.f32 %v4476, %v4491
        %v4497 = vadd.f32 %v4477, %v4491
        %v4498 = vadd.f32 %v4478, %v4491
        %v4499 = vadd.f32 %v4479, %v4491
        %v4500 = vadd.f32 %v4480, %v4491
        %v4501 = vadd.f32 %v4481, %v4491
        %v4502 = vadd.f32 %v4482, %v4491
        %v4503 = vadd.f32 %v4483, %v4491
        %v4504 = vadd.f32 %v4484, %v4491
        %v4505 = vadd.f32 %v4485, %v4491
        %v4506 = vadd.f32 %v4486, %v4491
        %v4507 = vadd.f32 %v4487, %v4491
        %vm4508 = vcmp.gt.f32.partialorder %v4492, 0.0
        %vm4509 = vcmp.gt.f32.partialorder %v4493, 0.0
        %vm4510 = vcmp.gt.f32.partialorder %v4494, 0.0
        %vm4511 = vcmp.gt.f32.partialorder %v4495, 0.0
        %vm4512 = vcmp.gt.f32.partialorder %v4496, 0.0
        %vm4513 = vcmp.gt.f32.partialorder %v4497, 0.0
        %vm4514 = vcmp.gt.f32.partialorder %v4498, 0.0
        %vm4515 = vcmp.gt.f32.partialorder %v4499, 0.0
        %vm4516 = vcmp.gt.f32.partialorder %v4500, 0.0
        %vm4517 = vcmp.gt.f32.partialorder %v4501, 0.0
        %vm4518 = vcmp.gt.f32.partialorder %v4502, 0.0
        %vm4519 = vcmp.gt.f32.partialorder %v4503, 0.0
        %vm4520 = vcmp.gt.f32.partialorder %v4504, 0.0
        %vm4521 = vcmp.gt.f32.partialorder %v4505, 0.0
        %vm4522 = vcmp.gt.f32.partialorder %v4506, 0.0
        %vm4523 = vcmp.gt.f32.partialorder %v4507, 0.0
        %v4524 = vstv %s4033
        %v4525 = vmul.f32 %v4524, %v4492
        %v4526 = vmul.f32 %v4524, %v4493
        %v4527 = vmul.f32 %v4524, %v4494
        %v4528 = vmul.f32 %v4524, %v4495
        %v4529 = vmul.f32 %v4524, %v4496
        %v4530 = vmul.f32 %v4524, %v4497
        %v4531 = vmul.f32 %v4524, %v4498
        %v4532 = vmul.f32 %v4524, %v4499
        %v4533 = vmul.f32 %v4524, %v4500
        %v4534 = vmul.f32 %v4524, %v4501
        %v4535 = vmul.f32 %v4524, %v4502
        %v4536 = vmul.f32 %v4524, %v4503
        %v4537 = vmul.f32 %v4524, %v4504
        %v4538 = vmul.f32 %v4524, %v4505
        %v4539 = vmul.f32 %v4524, %v4506
        %v4540 = vmul.f32 %v4524, %v4507
        %v4541 = vsel %vm4508, %v4492, %v4525
        %v4542 = vsel %vm4509, %v4493, %v4526
        %v4543 = vsel %vm4510, %v4494, %v4527
        %v4544 = vsel %vm4511, %v4495, %v4528
        %v4545 = vsel %vm4512, %v4496, %v4529
        %v4546 = vsel %vm4513, %v4497, %v4530
        %v4547 = vsel %vm4514, %v4498, %v4531
        %v4548 = vsel %vm4515, %v4499, %v4532
        %v4549 = vsel %vm4516, %v4500, %v4533
        %v4550 = vsel %vm4517, %v4501, %v4534
        %v4551 = vsel %vm4518, %v4502, %v4535
        %v4552 = vsel %vm4519, %v4503, %v4536
        %v4553 = vsel %vm4520, %v4504, %v4537
        %v4554 = vsel %vm4521, %v4505, %v4538
        %v4555 = vsel %vm4522, %v4506, %v4539
        %v4556 = vsel %vm4523, %v4507, %v4540
        %4557 = vst.msk [vmem:[%s294] sm:$0xff] %vm4368, %v4541
        %4558 = vst.msk [vmem:[%s294 + $0x8] sm:$0xff] %vm4368, %v4542
        %4559 = vst.msk [vmem:[%s294 + $0x10] sm:$0xff] %vm4368, %v4543
        %4560 = vst.msk [vmem:[%s294 + $0x18] sm:$0xff] %vm4368, %v4544
        %4561 = vst.msk [vmem:[%s294 + $0x20] sm:$0xff] %vm4368, %v4545
        %4562 = vst.msk [vmem:[%s294 + $0x28] sm:$0xff] %vm4368, %v4546
        %4563 = vst.msk [vmem:[%s294 + $0x30] sm:$0xff] %vm4368, %v4547
        %4564 = vst.msk [vmem:[%s294 + $0x38] sm:$0xff] %vm4368, %v4548
        %4565 = vst.msk [vmem:[%s294 + $0x40] sm:$0xff] %vm4368, %v4549
        %4566 = vst.msk [vmem:[%s294 + $0x48] sm:$0xff] %vm4368, %v4550
        %4567 = vst.msk [vmem:[%s294 + $0x50] sm:$0xff] %vm4368, %v4551
        %4568 = vst.msk [vmem:[%s294 + $0x58] sm:$0xff] %vm4368, %v4552
        %4569 = vst.msk [vmem:[%s294 + $0x60] sm:$0xff] %vm4368, %v4553
        %4570 = vst.msk [vmem:[%s294 + $0x68] sm:$0xff] %vm4368, %v4554
        %4571 = vst.msk [vmem:[%s294 + $0x70] sm:$0xff] %vm4368, %v4555
        %4572 = vst.msk [vmem:[%s294 + $0x78] sm:$0xff] %vm4368, %v4556
        %s4573 = smul.u32 16, %s19
        %p4574 = scmp.lt.s32.totalorder %s4573, 31
        %s4575 = scalar_select %p4574, %s4573, 31
        %s4576 = smul.addr %s4575, 8
        %s4577 = scalar_lea.vmem %s7, %s4576
        // Predicated region
        $region53: #{tpu_custom_call.1} parent=47 // pred_check
          %p4578 = pneg %p189
        $region54: #{tpu_custom_call.1} parent=47 // pred_check_branch
          %4580 = sbr.rel (%p4578) target = $region56
        $region55: #{tpu_custom_call.1} parent=47 // pred_region
          %s4581 = smul.u32 16, %s19
        $region56: #{tpu_custom_call.1} parent=47 // pred_fallthru
          _
      $region48: #{tpu_custom_call.1} parent=5 // pred_fallthru
        _
      %p4582 = scmp.le.s32.totalorder 2, %s14
      // Predicated region
      $region57: #{tpu_custom_call.1} parent=5 // pred_check
        %p4583 = pneg %p4582
      $region58: #{tpu_custom_call.1} parent=5 // pred_check_branch
        %4585 = sbr.rel (%p4583) target = $region60
      $region59: #{tpu_custom_call.1} parent=5 // pred_region
        %s4586 = ssub.s32 %s14, 2
        // Predicated region
        $region61: #{tpu_custom_call.1} parent=59 // pred_check
          %p4587 = pneg %p195
        $region62: #{tpu_custom_call.1} parent=59 // pred_check_branch
          %4589 = sbr.rel (%p4587) target = $region64
        $region63: #{tpu_custom_call.1} parent=59 // pred_region
          %s4590 = smul.u32 16, %s20
          %p4591 = scmp.lt.s32.totalorder %s4590, 31
          %s4592 = scalar_select %p4591, %s4590, 31
          %s4593 = smul.addr %s4592, 8
          %s4594 = scalar_lea.vmem %s7, %s4593
        $region64: #{tpu_custom_call.1} parent=59 // pred_fallthru
          _
      $region60: #{tpu_custom_call.1} parent=5 // pred_fallthru
        _
    $region6: #{tpu_custom_call.1} parent=1 // loop_footer
      %s18 = sadd.s32 1, %s14
    $region7: #{tpu_custom_call.1} parent=1 // loop_footer_branch
      %13 = sbr.rel target = $region3
    $region8: #{tpu_custom_call.1} parent=1 // loop_exit
      _
    %4595 = vsyncpa [#allocation3], 1
    %s4596 = scalar_lea.sflag [#allocation3], 1
    %4597 = vsyncpa %s4596, 1

</llo_original>
